<compile_context>
chip_gen: v5e
topology: v5e:2x2
jax: 0.10.0
libtpu: 0.0.40
codegen_flags: <defaults>
</compile_context>

<pallas_src>
import functools

import jax
import jax.numpy as jnp
from jax.experimental import pallas as pl
from jax.experimental.pallas import tpu as pltpu


def _round_up(x, m):
    return (x + m - 1) // m * m


def _cdiv(a, b):
    return -(-a // b)


def _gelu(x):
    # tanh-approx GELU: transcendental goes to the EUP slot (hidden under MXU).
    return jax.nn.gelu(x, approximate=True)


# --------------------------------------------------------------------------- #
# Kernel
# --------------------------------------------------------------------------- #
def _mlp_kernel(z_ref,
                w1_ref, b1_ref,
                w2_ref, b2_ref,
                w3_ref, b3_ref,
                w4_ref, b4_ref,
                out_ref):
    f32 = jnp.float32
    cd = w2_ref.dtype  # streaming dtype for MXU operands (bf16)

    # Layer 1 (single merged dot over the padded [P0|h_i|h_j] input).
    h1 = jnp.dot(z_ref[...], w1_ref[...], preferred_element_type=f32)
    h1 = _gelu(h1 + b1_ref[...])

    # Layer 2 + ReLU.
    h2 = jnp.dot(h1.astype(cd), w2_ref[...], preferred_element_type=f32)
    h2 = jnp.maximum(h2 + b2_ref[...], 0.0)

    # Layer 3 + GELU.
    h3 = jnp.dot(h2.astype(cd), w3_ref[...], preferred_element_type=f32)
    h3 = _gelu(h3 + b3_ref[...])

    # Layer 4 (narrow output, stored unpadded; masked stores hide under MXU).
    h4 = jnp.dot(h3.astype(cd), w4_ref[...], preferred_element_type=f32)
    out_ref[...] = (h4 + b4_ref[...]).astype(out_ref.dtype)


# --------------------------------------------------------------------------- #
# Parameter preparation (run ONCE, outside the per-call path)
# --------------------------------------------------------------------------- #
def prepare_params(params, *, compute_dtype=jnp.bfloat16):
    """Pre-cast weights to the MXU streaming dtype and pad w1's input dim to a
    multiple of 128 so the kernel's layer-1 dot consumes a lane-dense block."""
    (w1, b1), (w2, b2), (w3, b3), (w4, b4) = params
    d_in = w1.shape[0]
    d_in_p = _round_up(d_in, 128)

    w1p = jnp.pad(w1, ((0, d_in_p - d_in), (0, 0))).astype(compute_dtype)
    w2p = w2.astype(compute_dtype)
    w3p = w3.astype(compute_dtype)
    w4p = w4.astype(compute_dtype)
    # Biases stay f32: added to the f32 accumulators inside the kernel.
    f32 = jnp.float32
    return (w1p, b1.astype(f32), w2p, b2.astype(f32),
            w3p, b3.astype(f32), w4p, b4.astype(f32))


def _choose_tiles(batch, max_tile):
    """Adaptive batch tiling: big tiles (amortize per-step overhead & weight
    reloads), >=2 tiles when the batch is large enough (feeds v7x's 2 TCs),
    batch padded to a multiple of 16 (bf16 sublane pack)."""
    bp16 = _round_up(max(batch, 16), 16)
    if bp16 <= max_tile:
        num_tiles = 2 if bp16 >= 256 else 1
    else:
        num_tiles = max(_cdiv(bp16, max_tile), 2)
    tb = _round_up(_cdiv(bp16, num_tiles), 16)
    return tb, num_tiles, num_tiles * tb


# --------------------------------------------------------------------------- #
# Forward
# --------------------------------------------------------------------------- #
def grid_model_forward(P0, h_i, h_j, prepared, data_dimension, *, max_tile=1024):
    """Pallas implementation of GridModel.forward.

    `prepared` is the output of prepare_params().  Returns
    (out[:, :data_dimension], out[:, data_dimension:]) like the PyTorch module.
    """
    w1, b1, w2, b2, w3, b3, w4, b4 = prepared
    cd = w1.dtype

    B, d_data = P0.shape
    d_h = h_i.shape[1]
    d_in = d_data + 2 * d_h
    d_in_p = w1.shape[0]
    d_out = w4.shape[1]

    tb, num_tiles, Bp = _choose_tiles(B, max_tile)

    # Single fused pass over the batch inputs: concat + cast + batch/feature pad.
    z = jnp.concatenate([P0, h_i, h_j], axis=-1).astype(cd)
    z = jnp.pad(z, ((0, Bp - B), (0, d_in_p - d_in)))

    # Weights/biases: constant block index -> DMA'd once, VMEM-resident.
    resident = lambda a: pl.BlockSpec(a.shape, lambda b: (0, 0))

    out = pl.pallas_call(
        _mlp_kernel,
        out_shape=jax.ShapeDtypeStruct((Bp, d_out), jnp.float32),
        grid=(num_tiles,),
        in_specs=[
            pl.BlockSpec((tb, d_in_p), lambda b: (b, 0)),
            resident(w1), resident(b1),
            resident(w2), resident(b2),
            resident(w3), resident(b3),
            resident(w4), resident(b4),
        ],
        out_specs=pl.BlockSpec((tb, d_out), lambda b: (b, 0)),
        compiler_params=pltpu.CompilerParams(
            dimension_semantics=("parallel",),   # shards tiles across v7x's 2 TCs
            vmem_limit_bytes=32 * 1024 * 1024,   # legal on v5e/v6e/v7x
        ),
    )(z, w1, b1, w2, b2, w3, b3, w4, b4)

    out = out[:B]
    return out[:, :data_dimension], out[:, data_dimension:]


# --------------------------------------------------------------------------- #
# Init + pure-JAX reference
# --------------------------------------------------------------------------- #
def init_params(key, data_dimension, h_size):
    """Deterministic parameter init matching nn.Linear shapes.
    Weights stored as (in_features, out_features) for x @ W + b."""
    d_in = data_dimension + 2 * h_size
    sizes = [(d_in, 1024), (1024, 512), (512, 1024),
             (1024, data_dimension + h_size)]
    params = []
    for fan_in, fan_out in sizes:
        key, kw, kb = jax.random.split(key, 3)
        bound = 1.0 / jnp.sqrt(jnp.float32(fan_in))
        w = jax.random.uniform(kw, (fan_in, fan_out), jnp.float32, -bound, bound)
        b = jax.random.uniform(kb, (1, fan_out), jnp.float32, -bound, bound)
        params.append((w, b))
    return params


def _reference(P0, h_i, h_j, params, data_dimension,
               cast_dtype=None, approximate_gelu=False):
    """Pure-JAX reference.  cast_dtype=bf16 + approximate_gelu=True mirrors the
    kernel's streaming/activation choices; defaults are the exact PyTorch math."""
    (w1, b1), (w2, b2), (w3, b3), (w4, b4) = params
    z = jnp.concatenate([P0, h_i, h_j], axis=-1)

    def lin(x, w, b):
        if cast_dtype is not None:
            x = x.astype(cast_dtype)
            w = w.astype(cast_dtype)
        return jnp.dot(x, w, preferred_element_type=jnp.float32) + b

    gelu = functools.partial(jax.nn.gelu, approximate=approximate_gelu)
    h = gelu(lin(z, w1, b1))
    h = jnp.maximum(lin(h, w2, b2), 0.0)
    h = gelu(lin(h, w3, b3))
    h = lin(h, w4, b4)
    return h[:, :data_dimension], h[:, data_dimension:]


# --------------------------------------------------------------------------- #
if __name__ == "__main__":
    data_dimension = 8
    h_size = 16

    key = jax.random.PRNGKey(0)
    kp, kP0, khi, khj = jax.random.split(key, 4)
    params = init_params(kp, data_dimension, h_size)
    prepared = prepare_params(params)          # one-time cast/pad (hoisted)

    fwd = jax.jit(functools.partial(grid_model_forward,
                                    data_dimension=data_dimension))

    # --- small batch (single tile) ------------------------------------------
    batch = 8
    P0 = jax.random.normal(kP0, (batch, data_dimension), jnp.float32)
    h_i = jax.random.normal(khi, (batch, h_size), jnp.float32)
    h_j = jax.random.normal(khj, (batch, h_size), jnp.float32)

    P_out, h_out = fwd(P0, h_i, h_j, prepared)
    jax.block_until_ready((P_out, h_out))

    assert P_out.shape == (batch, data_dimension)
    assert h_out.shape == (batch, h_size)

    # Tight check against a reference mirroring the kernel (bf16 + tanh GELU).
    rP_bf, rh_bf = _reference(P0, h_i, h_j, params, data_dimension,
                              cast_dtype=jnp.bfloat16, approximate_gelu=True)
    assert jnp.allclose(P_out, rP_bf, atol=2e-3, rtol=1e-2)
    assert jnp.allclose(h_out, rh_bf, atol=2e-3, rtol=1e-2)

    # Loose sanity check against the exact f32 erf-GELU PyTorch math.
    rP_f32, rh_f32 = _reference(P0, h_i, h_j, params, data_dimension)
    assert jnp.allclose(P_out, rP_f32, atol=1e-1, rtol=1e-1)
    assert jnp.allclose(h_out, rh_f32, atol=1e-1, rtol=1e-1)

    # --- larger batch (exercises multi-tile grid + batch padding) ------------
    batch2 = 500  # non-multiple of 16 on purpose -> padded, 2 tiles
    k2a, k2b, k2c = jax.random.split(jax.random.PRNGKey(1), 3)
    P0b = jax.random.normal(k2a, (batch2, data_dimension), jnp.float32)
    hib = jax.random.normal(k2b, (batch2, h_size), jnp.float32)
    hjb = jax.random.normal(k2c, (batch2, h_size), jnp.float32)

    P_out2, h_out2 = fwd(P0b, hib, hjb, prepared)
    jax.block_until_ready((P_out2, h_out2))

    rP2, rh2 = _reference(P0b, hib, hjb, params, data_dimension,
                          cast_dtype=jnp.bfloat16, approximate_gelu=True)
    assert P_out2.shape == (batch2, data_dimension)
    assert h_out2.shape == (batch2, h_size)
    assert jnp.allclose(P_out2, rP2, atol=2e-3, rtol=1e-2)
    assert jnp.allclose(h_out2, rh2, atol=2e-3, rtol=1e-2)

    print("KERNEL_OK")
</pallas_src>

<mosaic_0001>
module attributes {stable_mosaic.version = 11 : i64} {
  func.func @_mlp_kernel(%arg0: i32, %arg1: memref<16x128xbf16, #tpu.memory_space<vmem>>, %arg2: memref<128x1024xbf16, #tpu.memory_space<vmem>>, %arg3: memref<1x1024xf32, #tpu.memory_space<vmem>>, %arg4: memref<1024x512xbf16, #tpu.memory_space<vmem>>, %arg5: memref<1x512xf32, #tpu.memory_space<vmem>>, %arg6: memref<512x1024xbf16, #tpu.memory_space<vmem>>, %arg7: memref<1x1024xf32, #tpu.memory_space<vmem>>, %arg8: memref<1024x24xbf16, #tpu.memory_space<vmem>>, %arg9: memref<1x24xf32, #tpu.memory_space<vmem>>, %arg10: memref<16x24xf32, #tpu.memory_space<vmem>>) attributes {dimension_semantics = [#tpu.dimension_semantics<parallel>], iteration_bounds = array<i64: 1>, scalar_prefetch = 0 : i64, scratch_operands = 0 : i64, tpu.core_type = #tpu.core_type<tc>, window_params = [{transform_indices = @transform_0, window_bounds = array<i64: 16, 128>}, {pipeline_mode = #tpu.pipeline_mode<synchronous>, transform_indices = @transform_1, window_bounds = array<i64: 128, 1024>}, {pipeline_mode = #tpu.pipeline_mode<synchronous>, transform_indices = @transform_2, window_bounds = array<i64: 1, 1024>}, {pipeline_mode = #tpu.pipeline_mode<synchronous>, transform_indices = @transform_3, window_bounds = array<i64: 1024, 512>}, {pipeline_mode = #tpu.pipeline_mode<synchronous>, transform_indices = @transform_4, window_bounds = array<i64: 1, 512>}, {pipeline_mode = #tpu.pipeline_mode<synchronous>, transform_indices = @transform_5, window_bounds = array<i64: 512, 1024>}, {pipeline_mode = #tpu.pipeline_mode<synchronous>, transform_indices = @transform_6, window_bounds = array<i64: 1, 1024>}, {pipeline_mode = #tpu.pipeline_mode<synchronous>, transform_indices = @transform_7, window_bounds = array<i64: 1024, 24>}, {pipeline_mode = #tpu.pipeline_mode<synchronous>, transform_indices = @transform_8, window_bounds = array<i64: 1, 24>}, {transform_indices = @transform_9, window_bounds = array<i64: 16, 24>}]} {
    %c0 = arith.constant 0 : index
    %c0_0 = arith.constant 0 : index
    %0 = vector.load %arg1[%c0, %c0_0] : memref<16x128xbf16, #tpu.memory_space<vmem>>, vector<16x128xbf16>
    %c0_1 = arith.constant 0 : index
    %c0_2 = arith.constant 0 : index
    %1 = vector.load %arg2[%c0_1, %c0_2] : memref<128x1024xbf16, #tpu.memory_space<vmem>>, vector<128x1024xbf16>
    %cst = arith.constant dense<0.000000e+00> : vector<16x1024xf32>
    %2 = tpu.matmul %0, %1, %cst {dimension_numbers = #tpu.dot_dimension_numbers<[1], [0], [0], [1], [0, 0, 1, 1], [], []>} : vector<16x128xbf16>, vector<128x1024xbf16>, vector<16x1024xf32> -> vector<16x1024xf32>
    %c0_3 = arith.constant 0 : index
    %c0_4 = arith.constant 0 : index
    %3 = vector.load %arg3[%c0_3, %c0_4] : memref<1x1024xf32, #tpu.memory_space<vmem>>, vector<1x1024xf32>
    %4 = vector.broadcast %3 : vector<1x1024xf32> to vector<16x1024xf32>
    %5 = arith.addf %2, %4 : vector<16x1024xf32>
    %6 = arith.mulf %5, %5 : vector<16x1024xf32>
    %7 = arith.mulf %5, %6 : vector<16x1024xf32>
    %cst_5 = arith.constant 4.471500e-02 : f32
    %8 = vector.broadcast %cst_5 : f32 to vector<16x1024xf32>
    %9 = arith.mulf %8, %7 : vector<16x1024xf32>
    %10 = arith.addf %5, %9 : vector<16x1024xf32>
    %cst_6 = arith.constant 0.797884583 : f32
    %11 = vector.broadcast %cst_6 : f32 to vector<16x1024xf32>
    %12 = arith.mulf %11, %10 : vector<16x1024xf32>
    %13 = math.tanh %12 : vector<16x1024xf32>
    %cst_7 = arith.constant 1.000000e+00 : f32
    %14 = vector.broadcast %cst_7 : f32 to vector<16x1024xf32>
    %15 = arith.addf %14, %13 : vector<16x1024xf32>
    %cst_8 = arith.constant 5.000000e-01 : f32
    %16 = vector.broadcast %cst_8 : f32 to vector<16x1024xf32>
    %17 = arith.mulf %16, %15 : vector<16x1024xf32>
    %18 = arith.mulf %5, %17 : vector<16x1024xf32>
    %19 = arith.truncf %18 : vector<16x1024xf32> to vector<16x1024xbf16>
    %c0_9 = arith.constant 0 : index
    %c0_10 = arith.constant 0 : index
    %20 = vector.load %arg4[%c0_9, %c0_10] : memref<1024x512xbf16, #tpu.memory_space<vmem>>, vector<1024x512xbf16>
    %cst_11 = arith.constant dense<0.000000e+00> : vector<16x512xf32>
    %21 = tpu.matmul %19, %20, %cst_11 {dimension_numbers = #tpu.dot_dimension_numbers<[1], [0], [0], [1], [0, 0, 1, 1], [], []>} : vector<16x1024xbf16>, vector<1024x512xbf16>, vector<16x512xf32> -> vector<16x512xf32>
    %c0_12 = arith.constant 0 : index
    %c0_13 = arith.constant 0 : index
    %22 = vector.load %arg5[%c0_12, %c0_13] : memref<1x512xf32, #tpu.memory_space<vmem>>, vector<1x512xf32>
    %23 = vector.broadcast %22 : vector<1x512xf32> to vector<16x512xf32>
    %24 = arith.addf %21, %23 : vector<16x512xf32>
    %cst_14 = arith.constant 0.000000e+00 : f32
    %25 = vector.broadcast %cst_14 : f32 to vector<16x512xf32>
    %26 = arith.maximumf %24, %25 : vector<16x512xf32>
    %27 = arith.truncf %26 : vector<16x512xf32> to vector<16x512xbf16>
    %c0_15 = arith.constant 0 : index
    %c0_16 = arith.constant 0 : index
    %28 = vector.load %arg6[%c0_15, %c0_16] : memref<512x1024xbf16, #tpu.memory_space<vmem>>, vector<512x1024xbf16>
    %cst_17 = arith.constant dense<0.000000e+00> : vector<16x1024xf32>
    %29 = tpu.matmul %27, %28, %cst_17 {dimension_numbers = #tpu.dot_dimension_numbers<[1], [0], [0], [1], [0, 0, 1, 1], [], []>} : vector<16x512xbf16>, vector<512x1024xbf16>, vector<16x1024xf32> -> vector<16x1024xf32>
    %c0_18 = arith.constant 0 : index
    %c0_19 = arith.constant 0 : index
    %30 = vector.load %arg7[%c0_18, %c0_19] : memref<1x1024xf32, #tpu.memory_space<vmem>>, vector<1x1024xf32>
    %31 = vector.broadcast %30 : vector<1x1024xf32> to vector<16x1024xf32>
    %32 = arith.addf %29, %31 : vector<16x1024xf32>
    %33 = arith.mulf %32, %32 : vector<16x1024xf32>
    %34 = arith.mulf %32, %33 : vector<16x1024xf32>
    %cst_20 = arith.constant 4.471500e-02 : f32
    %35 = vector.broadcast %cst_20 : f32 to vector<16x1024xf32>
    %36 = arith.mulf %35, %34 : vector<16x1024xf32>
    %37 = arith.addf %32, %36 : vector<16x1024xf32>
    %cst_21 = arith.constant 0.797884583 : f32
    %38 = vector.broadcast %cst_21 : f32 to vector<16x1024xf32>
    %39 = arith.mulf %38, %37 : vector<16x1024xf32>
    %40 = math.tanh %39 : vector<16x1024xf32>
    %cst_22 = arith.constant 1.000000e+00 : f32
    %41 = vector.broadcast %cst_22 : f32 to vector<16x1024xf32>
    %42 = arith.addf %41, %40 : vector<16x1024xf32>
    %cst_23 = arith.constant 5.000000e-01 : f32
    %43 = vector.broadcast %cst_23 : f32 to vector<16x1024xf32>
    %44 = arith.mulf %43, %42 : vector<16x1024xf32>
    %45 = arith.mulf %32, %44 : vector<16x1024xf32>
    %46 = arith.truncf %45 : vector<16x1024xf32> to vector<16x1024xbf16>
    %c0_24 = arith.constant 0 : index
    %c0_25 = arith.constant 0 : index
    %47 = vector.load %arg8[%c0_24, %c0_25] : memref<1024x24xbf16, #tpu.memory_space<vmem>>, vector<1024x24xbf16>
    %cst_26 = arith.constant dense<0.000000e+00> : vector<16x24xf32>
    %48 = tpu.matmul %46, %47, %cst_26 {dimension_numbers = #tpu.dot_dimension_numbers<[1], [0], [0], [1], [0, 0, 1, 1], [], []>} : vector<16x1024xbf16>, vector<1024x24xbf16>, vector<16x24xf32> -> vector<16x24xf32>
    %c0_27 = arith.constant 0 : index
    %c0_28 = arith.constant 0 : index
    %49 = vector.load %arg9[%c0_27, %c0_28] : memref<1x24xf32, #tpu.memory_space<vmem>>, vector<1x24xf32>
    %50 = vector.broadcast %49 : vector<1x24xf32> to vector<16x24xf32>
    %51 = arith.addf %48, %50 : vector<16x24xf32>
    %c0_29 = arith.constant 0 : index
    %c0_30 = arith.constant 0 : index
    %52 = vector.load %arg10[%c0_29, %c0_30] : memref<16x24xf32, #tpu.memory_space<vmem>>, vector<16x24xf32>
    tpu.vector_store %arg10[%c0_29, %c0_30], %51 {strides = array<i32>} : memref<16x24xf32, #tpu.memory_space<vmem>>, vector<16x24xf32>,
    return
  }
  func.func @transform_0(%arg0: i32) -> (i32, i32) {
    %c0_i32 = arith.constant 0 : i32
    %c0_i32_0 = arith.constant 0 : i32
    return %arg0, %c0_i32 : i32, i32
  }
  func.func @transform_1(%arg0: i32) -> (i32, i32) {
    %c0_i32 = arith.constant 0 : i32
    %c0_i32_0 = arith.constant 0 : i32
    %c0_i32_1 = arith.constant 0 : i32
    return %c0_i32, %c0_i32_0 : i32, i32
  }
  func.func @transform_2(%arg0: i32) -> (i32, i32) {
    %c0_i32 = arith.constant 0 : i32
    %c0_i32_0 = arith.constant 0 : i32
    %c0_i32_1 = arith.constant 0 : i32
    return %c0_i32, %c0_i32_0 : i32, i32
  }
  func.func @transform_3(%arg0: i32) -> (i32, i32) {
    %c0_i32 = arith.constant 0 : i32
    %c0_i32_0 = arith.constant 0 : i32
    %c0_i32_1 = arith.constant 0 : i32
    return %c0_i32, %c0_i32_0 : i32, i32
  }
  func.func @transform_4(%arg0: i32) -> (i32, i32) {
    %c0_i32 = arith.constant 0 : i32
    %c0_i32_0 = arith.constant 0 : i32
    %c0_i32_1 = arith.constant 0 : i32
    return %c0_i32, %c0_i32_0 : i32, i32
  }
  func.func @transform_5(%arg0: i32) -> (i32, i32) {
    %c0_i32 = arith.constant 0 : i32
    %c0_i32_0 = arith.constant 0 : i32
    %c0_i32_1 = arith.constant 0 : i32
    return %c0_i32, %c0_i32_0 : i32, i32
  }
  func.func @transform_6(%arg0: i32) -> (i32, i32) {
    %c0_i32 = arith.constant 0 : i32
    %c0_i32_0 = arith.constant 0 : i32
    %c0_i32_1 = arith.constant 0 : i32
    return %c0_i32, %c0_i32_0 : i32, i32
  }
  func.func @transform_7(%arg0: i32) -> (i32, i32) {
    %c0_i32 = arith.constant 0 : i32
    %c0_i32_0 = arith.constant 0 : i32
    %c0_i32_1 = arith.constant 0 : i32
    return %c0_i32, %c0_i32_0 : i32, i32
  }
  func.func @transform_8(%arg0: i32) -> (i32, i32) {
    %c0_i32 = arith.constant 0 : i32
    %c0_i32_0 = arith.constant 0 : i32
    %c0_i32_1 = arith.constant 0 : i32
    return %c0_i32, %c0_i32_0 : i32, i32
  }
  func.func @transform_9(%arg0: i32) -> (i32, i32) {
    %c0_i32 = arith.constant 0 : i32
    %c0_i32_0 = arith.constant 0 : i32
    return %arg0, %c0_i32 : i32, i32
  }
}

</mosaic_0001>

<llo_original>
// kernel: grid_model_forward.1
$region0: #{grid_model_forward.1}
  #allocation0 [shape = 'u32[]', space=smem, size = 0x4, offset = 0x4, fixed_abs, tag = 'smem constant byte address 0x4 - core index']
  #allocation1 [shape = 'u32[72,128]{1,0:T(1,128)}', space=vmem, size = 0x9000, scoped, tag = 'internal scratch']
  %s0 = inlined_call_operand.vmem [shape: bf16[16,128], index: 0, kind: input, shape index: {}]
  %s1 = inlined_call_operand.vmem [shape: bf16[128,1024], index: 1, kind: input, shape index: {}]
  %s2 = inlined_call_operand.vmem [shape: f32[1,1024], index: 2, kind: input, shape index: {}]
  %s3 = inlined_call_operand.hbm [shape: bf16[1024,512], index: 3, kind: input, shape index: {}]
  %s4 = inlined_call_operand.vmem [shape: f32[1,512], index: 4, kind: input, shape index: {}]
  %s5 = inlined_call_operand.hbm [shape: bf16[512,1024], index: 5, kind: input, shape index: {}]
  %s6 = inlined_call_operand.vmem [shape: f32[1,1024], index: 6, kind: input, shape index: {}]
  %s7 = inlined_call_operand.vmem [shape: bf16[1024,24], index: 7, kind: input, shape index: {}]
  %s8 = inlined_call_operand.vmem [shape: f32[1,24], index: 8, kind: input, shape index: {}]
  %s9 = inlined_call_operand.vmem [shape: f32[16,24], index: 9, kind: output, shape index: {}]
  %s10 = sld [smem:[#allocation0]]
  $region54: #{grid_model_forward.1} parent=0
    _
  %s12 = ssub.s32 1, %s10
  %s13 = scalar_select 0, %s12, %s10
  $region1: #{grid_model_forward.1} parent=0
    #allocation2 [shape = 'u8[1048576]{0}', space=vmem, size = 0x100000, scoped, tag = 'input window, operand 3, single buffered']
    #allocation3 [shape = 's32[1]{0}', space=sflag, size = 0x4, scoped, tag = 'scoped memory for grid_model_forward.1']
    #allocation4 [shape = 'u8[1048576]{0}', space=vmem, size = 0x100000, scoped, tag = 'input window, operand 5, single buffered']
    #allocation5 [shape = 's32[1]{0}', space=sflag, size = 0x4, scoped, tag = 'scoped memory for grid_model_forward.1']
    %14 = vsyncpa [#allocation3], 0
    %15 = vsyncpa [#allocation5], 0
    // Predicated region
    $region2: #{grid_model_forward.1} parent=1 // pred_check
      _
    $region3: #{grid_model_forward.1} parent=1 // pred_check_branch
      %17 = sbr.rel (0) target = $region5
    $region4: #{grid_model_forward.1} parent=1 // pred_region
      _
    $region5: #{grid_model_forward.1} parent=1 // pred_fallthru
      _
    // Predicated region
    $region6: #{grid_model_forward.1} parent=1 // pred_check
      _
    $region7: #{grid_model_forward.1} parent=1 // pred_check_branch
      %19 = sbr.rel (0) target = $region9
    $region8: #{grid_model_forward.1} parent=1 // pred_region
      _
    $region9: #{grid_model_forward.1} parent=1 // pred_fallthru
      _
    // Predicated region
    $region10: #{grid_model_forward.1} parent=1 // pred_check
      _
    $region11: #{grid_model_forward.1} parent=1 // pred_check_branch
      %21 = sbr.rel (0) target = $region13
    $region12: #{grid_model_forward.1} parent=1 // pred_region
      _
    $region13: #{grid_model_forward.1} parent=1 // pred_fallthru
      _
    // Predicated region
    $region14: #{grid_model_forward.1} parent=1 // pred_check
      _
    $region15: #{grid_model_forward.1} parent=1 // pred_check_branch
      %23 = sbr.rel (0) target = $region17
    $region16: #{grid_model_forward.1} parent=1 // pred_region
      %25 = vsyncadd [#allocation3], 0
      %s26 = sshll.u32 %s3, 4
      %s27 = int_to_ptr.hbm [resolvable:$true] %s26
      %s28 = sshll.u32 [#allocation2], 4
      %s29 = int_to_ptr.vmem [resolvable:$true] %s28
      %34 = dma.hbm_to_vmem [thread:$0]  %s27, 32768, %s29, [#allocation3], 256, 256, 16
    $region17: #{grid_model_forward.1} parent=1 // pred_fallthru
      _
    // Predicated region
    $region18: #{grid_model_forward.1} parent=1 // pred_check
      _
    $region19: #{grid_model_forward.1} parent=1 // pred_check_branch
      %36 = sbr.rel (0) target = $region21
    $region20: #{grid_model_forward.1} parent=1 // pred_region
      _
    $region21: #{grid_model_forward.1} parent=1 // pred_fallthru
      _
    // Predicated region
    $region22: #{grid_model_forward.1} parent=1 // pred_check
      _
    $region23: #{grid_model_forward.1} parent=1 // pred_check_branch
      %38 = sbr.rel (0) target = $region25
    $region24: #{grid_model_forward.1} parent=1 // pred_region
      %40 = vsyncadd [#allocation5], 0
      %s41 = sshll.u32 %s5, 4
      %s42 = int_to_ptr.hbm [resolvable:$true] %s41
      %s43 = sshll.u32 [#allocation4], 4
      %s44 = int_to_ptr.vmem [resolvable:$true] %s43
      %49 = dma.hbm_to_vmem [thread:$0]  %s42, 32768, %s44, [#allocation5], 512, 512, 32
    $region25: #{grid_model_forward.1} parent=1 // pred_fallthru
      _
    // Predicated region
    $region26: #{grid_model_forward.1} parent=1 // pred_check
      _
    $region27: #{grid_model_forward.1} parent=1 // pred_check_branch
      %51 = sbr.rel (0) target = $region29
    $region28: #{grid_model_forward.1} parent=1 // pred_region
      _
    $region29: #{grid_model_forward.1} parent=1 // pred_fallthru
      _
    // Predicated region
    $region30: #{grid_model_forward.1} parent=1 // pred_check
      _
    $region31: #{grid_model_forward.1} parent=1 // pred_check_branch
      %53 = sbr.rel (0) target = $region33
    $region32: #{grid_model_forward.1} parent=1 // pred_region
      _
    $region33: #{grid_model_forward.1} parent=1 // pred_fallthru
      _
    // Predicated region
    $region34: #{grid_model_forward.1} parent=1 // pred_check
      _
    $region35: #{grid_model_forward.1} parent=1 // pred_check_branch
      %55 = sbr.rel (0) target = $region37
    $region36: #{grid_model_forward.1} parent=1 // pred_region
      _
    $region37: #{grid_model_forward.1} parent=1 // pred_fallthru
      _
    // Predicated region
    $region38: #{grid_model_forward.1} parent=1 // pred_check
      _
    $region39: #{grid_model_forward.1} parent=1 // pred_check_branch
      %57 = sbr.rel (0) target = $region41
    $region40: #{grid_model_forward.1} parent=1 // pred_region
      %59 = dma.done [#allocation3], 32768
    $region41: #{grid_model_forward.1} parent=1 // pred_fallthru
      _
    // Predicated region
    $region42: #{grid_model_forward.1} parent=1 // pred_check
      _
    $region43: #{grid_model_forward.1} parent=1 // pred_check_branch
      %61 = sbr.rel (0) target = $region45
    $region44: #{grid_model_forward.1} parent=1 // pred_region
      %63 = dma.done [#allocation5], 32768
    $region45: #{grid_model_forward.1} parent=1 // pred_fallthru
      _
    %v64 = vld [vmem:[%s0] sm:$0xf]
    %v65 = vld [vmem:[%s0 + $0x4] sm:$0xf]
    %v66 = vld [vmem:[%s1] sm:$0xff]
    %v67 = vld [vmem:[%s1 + $0x8] sm:$0xff]
    %v68 = vld [vmem:[%s1 + $0x10] sm:$0xff]
    %v69 = vld [vmem:[%s1 + $0x18] sm:$0xff]
    %v70 = vld [vmem:[%s1 + $0x20] sm:$0xff]
    %v71 = vld [vmem:[%s1 + $0x28] sm:$0xff]
    %v72 = vld [vmem:[%s1 + $0x30] sm:$0xff]
    %v73 = vld [vmem:[%s1 + $0x38] sm:$0xff]
    %v74 = vld [vmem:[%s1 + $0x40] sm:$0xff]
    %v75 = vld [vmem:[%s1 + $0x48] sm:$0xff]
    %v76 = vld [vmem:[%s1 + $0x50] sm:$0xff]
    %v77 = vld [vmem:[%s1 + $0x58] sm:$0xff]
    %v78 = vld [vmem:[%s1 + $0x60] sm:$0xff]
    %v79 = vld [vmem:[%s1 + $0x68] sm:$0xff]
    %v80 = vld [vmem:[%s1 + $0x70] sm:$0xff]
    %v81 = vld [vmem:[%s1 + $0x78] sm:$0xff]
    %v82 = vld [vmem:[%s1 + $0x80] sm:$0xff]
    %v83 = vld [vmem:[%s1 + $0x88] sm:$0xff]
    %v84 = vld [vmem:[%s1 + $0x90] sm:$0xff]
    %v85 = vld [vmem:[%s1 + $0x98] sm:$0xff]
    %v86 = vld [vmem:[%s1 + $0xa0] sm:$0xff]
    %v87 = vld [vmem:[%s1 + $0xa8] sm:$0xff]
    %v88 = vld [vmem:[%s1 + $0xb0] sm:$0xff]
    %v89 = vld [vmem:[%s1 + $0xb8] sm:$0xff]
    %v90 = vld [vmem:[%s1 + $0xc0] sm:$0xff]
    %v91 = vld [vmem:[%s1 + $0xc8] sm:$0xff]
    %v92 = vld [vmem:[%s1 + $0xd0] sm:$0xff]
    %v93 = vld [vmem:[%s1 + $0xd8] sm:$0xff]
    %v94 = vld [vmem:[%s1 + $0xe0] sm:$0xff]
    %v95 = vld [vmem:[%s1 + $0xe8] sm:$0xff]
    %v96 = vld [vmem:[%s1 + $0xf0] sm:$0xff]
    %v97 = vld [vmem:[%s1 + $0xf8] sm:$0xff]
    %v98 = vld [vmem:[%s1 + $0x100] sm:$0xff]
    %v99 = vld [vmem:[%s1 + $0x108] sm:$0xff]
    %v100 = vld [vmem:[%s1 + $0x110] sm:$0xff]
    %v101 = vld [vmem:[%s1 + $0x118] sm:$0xff]
    %v102 = vld [vmem:[%s1 + $0x120] sm:$0xff]
    %v103 = vld [vmem:[%s1 + $0x128] sm:$0xff]
    %v104 = vld [vmem:[%s1 + $0x130] sm:$0xff]
    %v105 = vld [vmem:[%s1 + $0x138] sm:$0xff]
    %v106 = vld [vmem:[%s1 + $0x140] sm:$0xff]
    %v107 = vld [vmem:[%s1 + $0x148] sm:$0xff]
    %v108 = vld [vmem:[%s1 + $0x150] sm:$0xff]
    %v109 = vld [vmem:[%s1 + $0x158] sm:$0xff]
    %v110 = vld [vmem:[%s1 + $0x160] sm:$0xff]
    %v111 = vld [vmem:[%s1 + $0x168] sm:$0xff]
    %v112 = vld [vmem:[%s1 + $0x170] sm:$0xff]
    %v113 = vld [vmem:[%s1 + $0x178] sm:$0xff]
    %v114 = vld [vmem:[%s1 + $0x180] sm:$0xff]
    %v115 = vld [vmem:[%s1 + $0x188] sm:$0xff]
    %v116 = vld [vmem:[%s1 + $0x190] sm:$0xff]
    %v117 = vld [vmem:[%s1 + $0x198] sm:$0xff]
    %v118 = vld [vmem:[%s1 + $0x1a0] sm:$0xff]
    %v119 = vld [vmem:[%s1 + $0x1a8] sm:$0xff]
    %v120 = vld [vmem:[%s1 + $0x1b0] sm:$0xff]
    %v121 = vld [vmem:[%s1 + $0x1b8] sm:$0xff]
    %v122 = vld [vmem:[%s1 + $0x1c0] sm:$0xff]
    %v123 = vld [vmem:[%s1 + $0x1c8] sm:$0xff]
    %v124 = vld [vmem:[%s1 + $0x1d0] sm:$0xff]
    %v125 = vld [vmem:[%s1 + $0x1d8] sm:$0xff]
    %v126 = vld [vmem:[%s1 + $0x1e0] sm:$0xff]
    %v127 = vld [vmem:[%s1 + $0x1e8] sm:$0xff]
    %v128 = vld [vmem:[%s1 + $0x1f0] sm:$0xff]
    %v129 = vld [vmem:[%s1 + $0x1f8] sm:$0xff]
    %v130 = vld [vmem:[%s2] sm:$0xff]
    %v132 = vperm.slane %v130, 0
    %v133 = vperm.slane %v130, 1
    %v134 = vperm.slane %v130, 2
    %v135 = vperm.slane %v130, 3
    %v136 = vperm.slane %v130, 4
    %v137 = vperm.slane %v130, 5
    %v138 = vperm.slane %v130, 6
    %v139 = vperm.slane %v130, 7
    %v150 = vunpack.c.l.b16 %v64
    %v151 = vunpack.c.l.b16 %v65
    %v152 = vpack.c.b16 %v151, %v150
    %v218 = vunpack.c.l.b16 %v66
    %v219 = vunpack.c.h.b16 %v66
    %v220 = vunpack.c.l.b16 %v67
    %v221 = vunpack.c.h.b16 %v67
    %v222 = vunpack.c.l.b16 %v68
    %v223 = vunpack.c.h.b16 %v68
    %v224 = vunpack.c.l.b16 %v69
    %v225 = vunpack.c.h.b16 %v69
    %v226 = vunpack.c.l.b16 %v70
    %v227 = vunpack.c.h.b16 %v70
    %v228 = vunpack.c.l.b16 %v71
    %v229 = vunpack.c.h.b16 %v71
    %v230 = vunpack.c.l.b16 %v72
    %v231 = vunpack.c.h.b16 %v72
    %v232 = vunpack.c.l.b16 %v73
    %v233 = vunpack.c.h.b16 %v73
    %v234 = vunpack.c.l.b16 %v74
    %v235 = vunpack.c.h.b16 %v74
    %v236 = vunpack.c.l.b16 %v75
    %v237 = vunpack.c.h.b16 %v75
    %v238 = vunpack.c.l.b16 %v76
    %v239 = vunpack.c.h.b16 %v76
    %v240 = vunpack.c.l.b16 %v77
    %v241 = vunpack.c.h.b16 %v77
    %v242 = vunpack.c.l.b16 %v78
    %v243 = vunpack.c.h.b16 %v78
    %v244 = vunpack.c.l.b16 %v79
    %v245 = vunpack.c.h.b16 %v79
    %v246 = vunpack.c.l.b16 %v80
    %v247 = vunpack.c.h.b16 %v80
    %v248 = vunpack.c.l.b16 %v81
    %v249 = vunpack.c.h.b16 %v81
    %v250 = vunpack.c.l.b16 %v82
    %v251 = vunpack.c.h.b16 %v82
    %v252 = vunpack.c.l.b16 %v83
    %v253 = vunpack.c.h.b16 %v83
    %v254 = vunpack.c.l.b16 %v84
    %v255 = vunpack.c.h.b16 %v84
    %v256 = vunpack.c.l.b16 %v85
    %v257 = vunpack.c.h.b16 %v85
    %v258 = vunpack.c.l.b16 %v86
    %v259 = vunpack.c.h.b16 %v86
    %v260 = vunpack.c.l.b16 %v87
    %v261 = vunpack.c.h.b16 %v87
    %v262 = vunpack.c.l.b16 %v88
    %v263 = vunpack.c.h.b16 %v88
    %v264 = vunpack.c.l.b16 %v89
    %v265 = vunpack.c.h.b16 %v89
    %v266 = vunpack.c.l.b16 %v90
    %v267 = vunpack.c.h.b16 %v90
    %v268 = vunpack.c.l.b16 %v91
    %v269 = vunpack.c.h.b16 %v91
    %v270 = vunpack.c.l.b16 %v92
    %v271 = vunpack.c.h.b16 %v92
    %v272 = vunpack.c.l.b16 %v93
    %v273 = vunpack.c.h.b16 %v93
    %v274 = vunpack.c.l.b16 %v94
    %v275 = vunpack.c.h.b16 %v94
    %v276 = vunpack.c.l.b16 %v95
    %v277 = vunpack.c.h.b16 %v95
    %v278 = vunpack.c.l.b16 %v96
    %v279 = vunpack.c.h.b16 %v96
    %v280 = vunpack.c.l.b16 %v97
    %v281 = vunpack.c.h.b16 %v97
    %v282 = vunpack.c.l.b16 %v98
    %v283 = vunpack.c.h.b16 %v98
    %v284 = vunpack.c.l.b16 %v99
    %v285 = vunpack.c.h.b16 %v99
    %v286 = vunpack.c.l.b16 %v100
    %v287 = vunpack.c.h.b16 %v100
    %v288 = vunpack.c.l.b16 %v101
    %v289 = vunpack.c.h.b16 %v101
    %v290 = vunpack.c.l.b16 %v102
    %v291 = vunpack.c.h.b16 %v102
    %v292 = vunpack.c.l.b16 %v103
    %v293 = vunpack.c.h.b16 %v103
    %v294 = vunpack.c.l.b16 %v104
    %v295 = vunpack.c.h.b16 %v104
    %v296 = vunpack.c.l.b16 %v105
    %v297 = vunpack.c.h.b16 %v105
    %v298 = vunpack.c.l.b16 %v106
    %v299 = vunpack.c.h.b16 %v106
    %v300 = vunpack.c.l.b16 %v107
    %v301 = vunpack.c.h.b16 %v107
    %v302 = vunpack.c.l.b16 %v108
    %v303 = vunpack.c.h.b16 %v108
    %v304 = vunpack.c.l.b16 %v109
    %v305 = vunpack.c.h.b16 %v109
    %v306 = vunpack.c.l.b16 %v110
    %v307 = vunpack.c.h.b16 %v110
    %v308 = vunpack.c.l.b16 %v111
    %v309 = vunpack.c.h.b16 %v111
    %v310 = vunpack.c.l.b16 %v112
    %v311 = vunpack.c.h.b16 %v112
    %v312 = vunpack.c.l.b16 %v113
    %v313 = vunpack.c.h.b16 %v113
    %v314 = vunpack.c.l.b16 %v114
    %v315 = vunpack.c.h.b16 %v114
    %v316 = vunpack.c.l.b16 %v115
    %v317 = vunpack.c.h.b16 %v115
    %v318 = vunpack.c.l.b16 %v116
    %v319 = vunpack.c.h.b16 %v116
    %v320 = vunpack.c.l.b16 %v117
    %v321 = vunpack.c.h.b16 %v117
    %v322 = vunpack.c.l.b16 %v118
    %v323 = vunpack.c.h.b16 %v118
    %v324 = vunpack.c.l.b16 %v119
    %v325 = vunpack.c.h.b16 %v119
    %v326 = vunpack.c.l.b16 %v120
    %v327 = vunpack.c.h.b16 %v120
    %v328 = vunpack.c.l.b16 %v121
    %v329 = vunpack.c.h.b16 %v121
    %v330 = vunpack.c.l.b16 %v122
    %v331 = vunpack.c.h.b16 %v122
    %v332 = vunpack.c.l.b16 %v123
    %v333 = vunpack.c.h.b16 %v123
    %v334 = vunpack.c.l.b16 %v124
    %v335 = vunpack.c.h.b16 %v124
    %v336 = vunpack.c.l.b16 %v125
    %v337 = vunpack.c.h.b16 %v125
    %v338 = vunpack.c.l.b16 %v126
    %v339 = vunpack.c.h.b16 %v126
    %v340 = vunpack.c.l.b16 %v127
    %v341 = vunpack.c.h.b16 %v127
    %v342 = vunpack.c.l.b16 %v128
    %v343 = vunpack.c.h.b16 %v128
    %v344 = vunpack.c.l.b16 %v129
    %v345 = vunpack.c.h.b16 %v129
    %v346 = vpack.c.b16 %v226, %v218
    %v347 = vpack.c.b16 %v227, %v219
    %v348 = vpack.c.b16 %v228, %v220
    %v349 = vpack.c.b16 %v229, %v221
    %v350 = vpack.c.b16 %v230, %v222
    %v351 = vpack.c.b16 %v231, %v223
    %v352 = vpack.c.b16 %v232, %v224
    %v353 = vpack.c.b16 %v233, %v225
    %v354 = vpack.c.b16 %v242, %v234
    %v355 = vpack.c.b16 %v243, %v235
    %v356 = vpack.c.b16 %v244, %v236
    %v357 = vpack.c.b16 %v245, %v237
    %v358 = vpack.c.b16 %v246, %v238
    %v359 = vpack.c.b16 %v247, %v239
    %v360 = vpack.c.b16 %v248, %v240
    %v361 = vpack.c.b16 %v249, %v241
    %v362 = vpack.c.b16 %v258, %v250
    %v363 = vpack.c.b16 %v259, %v251
    %v364 = vpack.c.b16 %v260, %v252
    %v365 = vpack.c.b16 %v261, %v253
    %v366 = vpack.c.b16 %v262, %v254
    %v367 = vpack.c.b16 %v263, %v255
    %v368 = vpack.c.b16 %v264, %v256
    %v369 = vpack.c.b16 %v265, %v257
    %v370 = vpack.c.b16 %v274, %v266
    %v371 = vpack.c.b16 %v275, %v267
    %v372 = vpack.c.b16 %v276, %v268
    %v373 = vpack.c.b16 %v277, %v269
    %v374 = vpack.c.b16 %v278, %v270
    %v375 = vpack.c.b16 %v279, %v271
    %v376 = vpack.c.b16 %v280, %v272
    %v377 = vpack.c.b16 %v281, %v273
    %v378 = vpack.c.b16 %v290, %v282
    %v379 = vpack.c.b16 %v291, %v283
    %v380 = vpack.c.b16 %v292, %v284
    %v381 = vpack.c.b16 %v293, %v285
    %v382 = vpack.c.b16 %v294, %v286
    %v383 = vpack.c.b16 %v295, %v287
    %v384 = vpack.c.b16 %v296, %v288
    %v385 = vpack.c.b16 %v297, %v289
    %v386 = vpack.c.b16 %v306, %v298
    %v387 = vpack.c.b16 %v307, %v299
    %v388 = vpack.c.b16 %v308, %v300
    %v389 = vpack.c.b16 %v309, %v301
    %v390 = vpack.c.b16 %v310, %v302
    %v391 = vpack.c.b16 %v311, %v303
    %v392 = vpack.c.b16 %v312, %v304
    %v393 = vpack.c.b16 %v313, %v305
    %v394 = vpack.c.b16 %v322, %v314
    %v395 = vpack.c.b16 %v323, %v315
    %v396 = vpack.c.b16 %v324, %v316
    %v397 = vpack.c.b16 %v325, %v317
    %v398 = vpack.c.b16 %v326, %v318
    %v399 = vpack.c.b16 %v327, %v319
    %v400 = vpack.c.b16 %v328, %v320
    %v401 = vpack.c.b16 %v329, %v321
    %v402 = vpack.c.b16 %v338, %v330
    %v403 = vpack.c.b16 %v339, %v331
    %v404 = vpack.c.b16 %v340, %v332
    %v405 = vpack.c.b16 %v341, %v333
    %v406 = vpack.c.b16 %v342, %v334
    %v407 = vpack.c.b16 %v343, %v335
    %v408 = vpack.c.b16 %v344, %v336
    %v409 = vpack.c.b16 %v345, %v337
    %474 = vmatpush.bf16.msra.mxu0 %v402
    %475 = vmatpush.bf16.msra.mxu0 %v394
    %476 = vmatpush.bf16.msra.mxu0 %v386
    %477 = vmatpush.bf16.msra.mxu0 %v378
    %478 = vmatpush.bf16.msra.mxu0 %v370
    %479 = vmatpush.bf16.msra.mxu0 %v362
    %480 = vmatpush.bf16.msra.mxu0 %v354
    %481 = vmatpush.bf16.msra.mxu0 %v346
    %482 = vmatmul.bf16.gmra.mxu0 %v152
    %v483 = vpop.f32.mrf.mxu0
    %v484 = vadd.f32 %v132, %v483
    %v485 = vpop.f32.mrf.mxu0
    %v486 = vadd.f32 %v132, %v485
    %487 = vdwg.mxu0
    %488 = vmatpush.bf16.msra.mxu0 %v403
    %489 = vmatpush.bf16.msra.mxu0 %v395
    %490 = vmatpush.bf16.msra.mxu0 %v387
    %491 = vmatpush.bf16.msra.mxu0 %v379
    %492 = vmatpush.bf16.msra.mxu0 %v371
    %493 = vmatpush.bf16.msra.mxu0 %v363
    %494 = vmatpush.bf16.msra.mxu0 %v355
    %495 = vmatpush.bf16.msra.mxu0 %v347
    %496 = vmatmul.bf16.gmra.mxu0 %v152
    %v497 = vpop.f32.mrf.mxu0
    %v498 = vadd.f32 %v133, %v497
    %v499 = vpop.f32.mrf.mxu0
    %v500 = vadd.f32 %v133, %v499
    %501 = vdwg.mxu0
    %502 = vmatpush.bf16.msra.mxu0 %v404
    %503 = vmatpush.bf16.msra.mxu0 %v396
    %504 = vmatpush.bf16.msra.mxu0 %v388
    %505 = vmatpush.bf16.msra.mxu0 %v380
    %506 = vmatpush.bf16.msra.mxu0 %v372
    %507 = vmatpush.bf16.msra.mxu0 %v364
    %508 = vmatpush.bf16.msra.mxu0 %v356
    %509 = vmatpush.bf16.msra.mxu0 %v348
    %510 = vmatmul.bf16.gmra.mxu0 %v152
    %v511 = vpop.f32.mrf.mxu0
    %v512 = vadd.f32 %v134, %v511
    %v513 = vpop.f32.mrf.mxu0
    %v514 = vadd.f32 %v134, %v513
    %515 = vdwg.mxu0
    %516 = vmatpush.bf16.msra.mxu0 %v405
    %517 = vmatpush.bf16.msra.mxu0 %v397
    %518 = vmatpush.bf16.msra.mxu0 %v389
    %519 = vmatpush.bf16.msra.mxu0 %v381
    %520 = vmatpush.bf16.msra.mxu0 %v373
    %521 = vmatpush.bf16.msra.mxu0 %v365
    %522 = vmatpush.bf16.msra.mxu0 %v357
    %523 = vmatpush.bf16.msra.mxu0 %v349
    %524 = vmatmul.bf16.gmra.mxu0 %v152
    %v525 = vpop.f32.mrf.mxu0
    %v526 = vadd.f32 %v135, %v525
    %v527 = vpop.f32.mrf.mxu0
    %v528 = vadd.f32 %v135, %v527
    %529 = vdwg.mxu0
    %530 = vmatpush.bf16.msra.mxu0 %v406
    %531 = vmatpush.bf16.msra.mxu0 %v398
    %532 = vmatpush.bf16.msra.mxu0 %v390
    %533 = vmatpush.bf16.msra.mxu0 %v382
    %534 = vmatpush.bf16.msra.mxu0 %v374
    %535 = vmatpush.bf16.msra.mxu0 %v366
    %536 = vmatpush.bf16.msra.mxu0 %v358
    %537 = vmatpush.bf16.msra.mxu0 %v350
    %538 = vmatmul.bf16.gmra.mxu0 %v152
    %v539 = vpop.f32.mrf.mxu0
    %v540 = vadd.f32 %v136, %v539
    %v541 = vpop.f32.mrf.mxu0
    %v542 = vadd.f32 %v136, %v541
    %543 = vdwg.mxu0
    %544 = vmatpush.bf16.msra.mxu0 %v407
    %545 = vmatpush.bf16.msra.mxu0 %v399
    %546 = vmatpush.bf16.msra.mxu0 %v391
    %547 = vmatpush.bf16.msra.mxu0 %v383
    %548 = vmatpush.bf16.msra.mxu0 %v375
    %549 = vmatpush.bf16.msra.mxu0 %v367
    %550 = vmatpush.bf16.msra.mxu0 %v359
    %551 = vmatpush.bf16.msra.mxu0 %v351
    %552 = vmatmul.bf16.gmra.mxu0 %v152
    %v553 = vpop.f32.mrf.mxu0
    %v554 = vadd.f32 %v137, %v553
    %v555 = vpop.f32.mrf.mxu0
    %v556 = vadd.f32 %v137, %v555
    %557 = vdwg.mxu0
    %558 = vmatpush.bf16.msra.mxu0 %v408
    %559 = vmatpush.bf16.msra.mxu0 %v400
    %560 = vmatpush.bf16.msra.mxu0 %v392
    %561 = vmatpush.bf16.msra.mxu0 %v384
    %562 = vmatpush.bf16.msra.mxu0 %v376
    %563 = vmatpush.bf16.msra.mxu0 %v368
    %564 = vmatpush.bf16.msra.mxu0 %v360
    %565 = vmatpush.bf16.msra.mxu0 %v352
    %566 = vmatmul.bf16.gmra.mxu0 %v152
    %v567 = vpop.f32.mrf.mxu0
    %v568 = vadd.f32 %v138, %v567
    %v569 = vpop.f32.mrf.mxu0
    %v570 = vadd.f32 %v138, %v569
    %571 = vdwg.mxu0
    %572 = vmatpush.bf16.msra.mxu0 %v409
    %573 = vmatpush.bf16.msra.mxu0 %v401
    %574 = vmatpush.bf16.msra.mxu0 %v393
    %575 = vmatpush.bf16.msra.mxu0 %v385
    %576 = vmatpush.bf16.msra.mxu0 %v377
    %577 = vmatpush.bf16.msra.mxu0 %v369
    %578 = vmatpush.bf16.msra.mxu0 %v361
    %579 = vmatpush.bf16.msra.mxu0 %v353
    %580 = vmatmul.bf16.gmra.mxu0 %v152
    %v581 = vpop.f32.mrf.mxu0
    %v582 = vadd.f32 %v139, %v581
    %v583 = vpop.f32.mrf.mxu0
    %v584 = vadd.f32 %v139, %v583
    %585 = vdwg.mxu0
    %v586 = vmul.f32 %v484, %v484
    %v587 = vmul.f32 %v498, %v498
    %v588 = vmul.f32 %v512, %v512
    %v589 = vmul.f32 %v526, %v526
    %v590 = vmul.f32 %v540, %v540
    %v591 = vmul.f32 %v554, %v554
    %v592 = vmul.f32 %v568, %v568
    %v593 = vmul.f32 %v582, %v582
    %v594 = vmul.f32 %v486, %v486
    %v595 = vmul.f32 %v500, %v500
    %v596 = vmul.f32 %v514, %v514
    %v597 = vmul.f32 %v528, %v528
    %v598 = vmul.f32 %v542, %v542
    %v599 = vmul.f32 %v556, %v556
    %v600 = vmul.f32 %v570, %v570
    %v601 = vmul.f32 %v584, %v584
    %v602 = vmul.f32 %v484, %v586
    %v603 = vmul.f32 %v498, %v587
    %v604 = vmul.f32 %v512, %v588
    %v605 = vmul.f32 %v526, %v589
    %v606 = vmul.f32 %v540, %v590
    %v607 = vmul.f32 %v554, %v591
    %v608 = vmul.f32 %v568, %v592
    %v609 = vmul.f32 %v582, %v593
    %v610 = vmul.f32 %v486, %v594
    %v611 = vmul.f32 %v500, %v595
    %v612 = vmul.f32 %v514, %v596
    %v613 = vmul.f32 %v528, %v597
    %v614 = vmul.f32 %v542, %v598
    %v615 = vmul.f32 %v556, %v599
    %v616 = vmul.f32 %v570, %v600
    %v617 = vmul.f32 %v584, %v601
    %v618 = vmul.f32 %v602, 0.044715
    %v619 = vmul.f32 %v603, 0.044715
    %v620 = vmul.f32 %v604, 0.044715
    %v621 = vmul.f32 %v605, 0.044715
    %v622 = vmul.f32 %v606, 0.044715
    %v623 = vmul.f32 %v607, 0.044715
    %v624 = vmul.f32 %v608, 0.044715
    %v625 = vmul.f32 %v609, 0.044715
    %v626 = vmul.f32 %v610, 0.044715
    %v627 = vmul.f32 %v611, 0.044715
    %v628 = vmul.f32 %v612, 0.044715
    %v629 = vmul.f32 %v613, 0.044715
    %v630 = vmul.f32 %v614, 0.044715
    %v631 = vmul.f32 %v615, 0.044715
    %v632 = vmul.f32 %v616, 0.044715
    %v633 = vmul.f32 %v617, 0.044715
    %v634 = vadd.f32 %v484, %v618
    %v635 = vadd.f32 %v498, %v619
    %v636 = vadd.f32 %v512, %v620
    %v637 = vadd.f32 %v526, %v621
    %v638 = vadd.f32 %v540, %v622
    %v639 = vadd.f32 %v554, %v623
    %v640 = vadd.f32 %v568, %v624
    %v641 = vadd.f32 %v582, %v625
    %v642 = vadd.f32 %v486, %v626
    %v643 = vadd.f32 %v500, %v627
    %v644 = vadd.f32 %v514, %v628
    %v645 = vadd.f32 %v528, %v629
    %v646 = vadd.f32 %v542, %v630
    %v647 = vadd.f32 %v556, %v631
    %v648 = vadd.f32 %v570, %v632
    %v649 = vadd.f32 %v584, %v633
    %v650 = vmul.f32 %v634, 0.7978846
    %v651 = vmul.f32 %v635, 0.7978846
    %v652 = vmul.f32 %v636, 0.7978846
    %v653 = vmul.f32 %v637, 0.7978846
    %v654 = vmul.f32 %v638, 0.7978846
    %v655 = vmul.f32 %v639, 0.7978846
    %v656 = vmul.f32 %v640, 0.7978846
    %v657 = vmul.f32 %v641, 0.7978846
    %v658 = vmul.f32 %v642, 0.7978846
    %v659 = vmul.f32 %v643, 0.7978846
    %v660 = vmul.f32 %v644, 0.7978846
    %v661 = vmul.f32 %v645, 0.7978846
    %v662 = vmul.f32 %v646, 0.7978846
    %v663 = vmul.f32 %v647, 0.7978846
    %v664 = vmul.f32 %v648, 0.7978846
    %v665 = vmul.f32 %v649, 0.7978846
    %v666 = vtanh.pop %v650
    %v667 = vtanh.pop %v651
    %v668 = vtanh.pop %v652
    %v669 = vtanh.pop %v653
    %v670 = vtanh.pop %v654
    %v671 = vtanh.pop %v655
    %v672 = vtanh.pop %v656
    %v673 = vtanh.pop %v657
    %v674 = vtanh.pop %v658
    %v675 = vtanh.pop %v659
    %v676 = vtanh.pop %v660
    %v677 = vtanh.pop %v661
    %v678 = vtanh.pop %v662
    %v679 = vtanh.pop %v663
    %v680 = vtanh.pop %v664
    %v681 = vtanh.pop %v665
    %v682 = vadd.f32 %v666, 1.0
    %v683 = vadd.f32 %v667, 1.0
    %v684 = vadd.f32 %v668, 1.0
    %v685 = vadd.f32 %v669, 1.0
    %v686 = vadd.f32 %v670, 1.0
    %v687 = vadd.f32 %v671, 1.0
    %v688 = vadd.f32 %v672, 1.0
    %v689 = vadd.f32 %v673, 1.0
    %v690 = vadd.f32 %v674, 1.0
    %v691 = vadd.f32 %v675, 1.0
    %v692 = vadd.f32 %v676, 1.0
    %v693 = vadd.f32 %v677, 1.0
    %v694 = vadd.f32 %v678, 1.0
    %v695 = vadd.f32 %v679, 1.0
    %v696 = vadd.f32 %v680, 1.0
    %v697 = vadd.f32 %v681, 1.0
    %v698 = vmul.f32 %v682, 0.5
    %v699 = vmul.f32 %v683, 0.5
    %v700 = vmul.f32 %v684, 0.5
    %v701 = vmul.f32 %v685, 0.5
    %v702 = vmul.f32 %v686, 0.5
    %v703 = vmul.f32 %v687, 0.5
    %v704 = vmul.f32 %v688, 0.5
    %v705 = vmul.f32 %v689, 0.5
    %v706 = vmul.f32 %v690, 0.5
    %v707 = vmul.f32 %v691, 0.5
    %v708 = vmul.f32 %v692, 0.5
    %v709 = vmul.f32 %v693, 0.5
    %v710 = vmul.f32 %v694, 0.5
    %v711 = vmul.f32 %v695, 0.5
    %v712 = vmul.f32 %v696, 0.5
    %v713 = vmul.f32 %v697, 0.5
    %v714 = vmul.f32 %v484, %v698
    %v715 = vmul.f32 %v498, %v699
    %v716 = vmul.f32 %v512, %v700
    %v717 = vmul.f32 %v526, %v701
    %v718 = vmul.f32 %v540, %v702
    %v719 = vmul.f32 %v554, %v703
    %v720 = vmul.f32 %v568, %v704
    %v721 = vmul.f32 %v582, %v705
    %v722 = vmul.f32 %v486, %v706
    %v723 = vmul.f32 %v500, %v707
    %v724 = vmul.f32 %v514, %v708
    %v725 = vmul.f32 %v528, %v709
    %v726 = vmul.f32 %v542, %v710
    %v727 = vmul.f32 %v556, %v711
    %v728 = vmul.f32 %v570, %v712
    %v729 = vmul.f32 %v584, %v713
    %v730 = vpack.c.bf16 %v722, %v714
    %v731 = vpack.c.bf16 %v723, %v715
    %v732 = vpack.c.bf16 %v724, %v716
    %v733 = vpack.c.bf16 %v725, %v717
    %v734 = vpack.c.bf16 %v726, %v718
    %v735 = vpack.c.bf16 %v727, %v719
    %v736 = vpack.c.bf16 %v728, %v720
    %v737 = vpack.c.bf16 %v729, %v721
    %v738 = vld [vmem:[#allocation2] sm:$0xff]
    %v739 = vld [vmem:[#allocation2 + $0x8] sm:$0xff]
    %v740 = vld [vmem:[#allocation2 + $0x10] sm:$0xff]
    %v741 = vld [vmem:[#allocation2 + $0x18] sm:$0xff]
    %v742 = vld [vmem:[#allocation2 + $0x20] sm:$0xff]
    %v743 = vld [vmem:[#allocation2 + $0x28] sm:$0xff]
    %v744 = vld [vmem:[#allocation2 + $0x30] sm:$0xff]
    %v745 = vld [vmem:[#allocation2 + $0x38] sm:$0xff]
    %v746 = vld [vmem:[#allocation2 + $0x40] sm:$0xff]
    %v747 = vld [vmem:[#allocation2 + $0x48] sm:$0xff]
    %v748 = vld [vmem:[#allocation2 + $0x50] sm:$0xff]
    %v749 = vld [vmem:[#allocation2 + $0x58] sm:$0xff]
    %v750 = vld [vmem:[#allocation2 + $0x60] sm:$0xff]
    %v751 = vld [vmem:[#allocation2 + $0x68] sm:$0xff]
    %v752 = vld [vmem:[#allocation2 + $0x70] sm:$0xff]
    %v753 = vld [vmem:[#allocation2 + $0x78] sm:$0xff]
    %v754 = vld [vmem:[#allocation2 + $0x80] sm:$0xff]
    %v755 = vld [vmem:[#allocation2 + $0x88] sm:$0xff]
    %v756 = vld [vmem:[#allocation2 + $0x90] sm:$0xff]
    %v757 = vld [vmem:[#allocation2 + $0x98] sm:$0xff]
    %v758 = vld [vmem:[#allocation2 + $0xa0] sm:$0xff]
    %v759 = vld [vmem:[#allocation2 + $0xa8] sm:$0xff]
    %v760 = vld [vmem:[#allocation2 + $0xb0] sm:$0xff]
    %v761 = vld [vmem:[#allocation2 + $0xb8] sm:$0xff]
    %v762 = vld [vmem:[#allocation2 + $0xc0] sm:$0xff]
    %v763 = vld [vmem:[#allocation2 + $0xc8] sm:$0xff]
    %v764 = vld [vmem:[#allocation2 + $0xd0] sm:$0xff]
    %v765 = vld [vmem:[#allocation2 + $0xd8] sm:$0xff]
    %v766 = vld [vmem:[#allocation2 + $0xe0] sm:$0xff]
    %v767 = vld [vmem:[#allocation2 + $0xe8] sm:$0xff]
    %v768 = vld [vmem:[#allocation2 + $0xf0] sm:$0xff]
    %v769 = vld [vmem:[#allocation2 + $0xf8] sm:$0xff]
    %v770 = vld [vmem:[#allocation2 + $0x100] sm:$0xff]
    %v771 = vld [vmem:[#allocation2 + $0x108] sm:$0xff]
    %v772 = vld [vmem:[#allocation2 + $0x110] sm:$0xff]
    %v773 = vld [vmem:[#allocation2 + $0x118] sm:$0xff]
    %v774 = vld [vmem:[#allocation2 + $0x120] sm:$0xff]
    %v775 = vld [vmem:[#allocation2 + $0x128] sm:$0xff]
    %v776 = vld [vmem:[#allocation2 + $0x130] sm:$0xff]
    %v777 = vld [vmem:[#allocation2 + $0x138] sm:$0xff]
    %v778 = vld [vmem:[#allocation2 + $0x140] sm:$0xff]
    %v779 = vld [vmem:[#allocation2 + $0x148] sm:$0xff]
    %v780 = vld [vmem:[#allocation2 + $0x150] sm:$0xff]
    %v781 = vld [vmem:[#allocation2 + $0x158] sm:$0xff]
    %v782 = vld [vmem:[#allocation2 + $0x160] sm:$0xff]
    %v783 = vld [vmem:[#allocation2 + $0x168] sm:$0xff]
    %v784 = vld [vmem:[#allocation2 + $0x170] sm:$0xff]
    %v785 = vld [vmem:[#allocation2 + $0x178] sm:$0xff]
    %v786 = vld [vmem:[#allocation2 + $0x180] sm:$0xff]
    %v787 = vld [vmem:[#allocation2 + $0x188] sm:$0xff]
    %v788 = vld [vmem:[#allocation2 + $0x190] sm:$0xff]
    %v789 = vld [vmem:[#allocation2 + $0x198] sm:$0xff]
    %v790 = vld [vmem:[#allocation2 + $0x1a0] sm:$0xff]
    %v791 = vld [vmem:[#allocation2 + $0x1a8] sm:$0xff]
    %v792 = vld [vmem:[#allocation2 + $0x1b0] sm:$0xff]
    %v793 = vld [vmem:[#allocation2 + $0x1b8] sm:$0xff]
    %v794 = vld [vmem:[#allocation2 + $0x1c0] sm:$0xff]
    %v795 = vld [vmem:[#allocation2 + $0x1c8] sm:$0xff]
    %v796 = vld [vmem:[#allocation2 + $0x1d0] sm:$0xff]
    %v797 = vld [vmem:[#allocation2 + $0x1d8] sm:$0xff]
    %v798 = vld [vmem:[#allocation2 + $0x1e0] sm:$0xff]
    %v799 = vld [vmem:[#allocation2 + $0x1e8] sm:$0xff]
    %v800 = vld [vmem:[#allocation2 + $0x1f0] sm:$0xff]
    %v801 = vld [vmem:[#allocation2 + $0x1f8] sm:$0xff]
    %v802 = vld [vmem:[#allocation2 + $0x200] sm:$0xff]
    %v803 = vld [vmem:[#allocation2 + $0x208] sm:$0xff]
    %v804 = vld [vmem:[#allocation2 + $0x210] sm:$0xff]
    %v805 = vld [vmem:[#allocation2 + $0x218] sm:$0xff]
    %v806 = vld [vmem:[#allocation2 + $0x220] sm:$0xff]
    %v807 = vld [vmem:[#allocation2 + $0x228] sm:$0xff]
    %v808 = vld [vmem:[#allocation2 + $0x230] sm:$0xff]
    %v809 = vld [vmem:[#allocation2 + $0x238] sm:$0xff]
    %v810 = vld [vmem:[#allocation2 + $0x240] sm:$0xff]
    %v811 = vld [vmem:[#allocation2 + $0x248] sm:$0xff]
    %v812 = vld [vmem:[#allocation2 + $0x250] sm:$0xff]
    %v813 = vld [vmem:[#allocation2 + $0x258] sm:$0xff]
    %v814 = vld [vmem:[#allocation2 + $0x260] sm:$0xff]
    %v815 = vld [vmem:[#allocation2 + $0x268] sm:$0xff]
    %v816 = vld [vmem:[#allocation2 + $0x270] sm:$0xff]
    %v817 = vld [vmem:[#allocation2 + $0x278] sm:$0xff]
    %v818 = vld [vmem:[#allocation2 + $0x280] sm:$0xff]
    %v819 = vld [vmem:[#allocation2 + $0x288] sm:$0xff]
    %v820 = vld [vmem:[#allocation2 + $0x290] sm:$0xff]
    %v821 = vld [vmem:[#allocation2 + $0x298] sm:$0xff]
    %v822 = vld [vmem:[#allocation2 + $0x2a0] sm:$0xff]
    %v823 = vld [vmem:[#allocation2 + $0x2a8] sm:$0xff]
    %v824 = vld [vmem:[#allocation2 + $0x2b0] sm:$0xff]
    %v825 = vld [vmem:[#allocation2 + $0x2b8] sm:$0xff]
    %v826 = vld [vmem:[#allocation2 + $0x2c0] sm:$0xff]
    %v827 = vld [vmem:[#allocation2 + $0x2c8] sm:$0xff]
    %v828 = vld [vmem:[#allocation2 + $0x2d0] sm:$0xff]
    %v829 = vld [vmem:[#allocation2 + $0x2d8] sm:$0xff]
    %v830 = vld [vmem:[#allocation2 + $0x2e0] sm:$0xff]
    %v831 = vld [vmem:[#allocation2 + $0x2e8] sm:$0xff]
    %v832 = vld [vmem:[#allocation2 + $0x2f0] sm:$0xff]
    %v833 = vld [vmem:[#allocation2 + $0x2f8] sm:$0xff]
    %v834 = vld [vmem:[#allocation2 + $0x300] sm:$0xff]
    %v835 = vld [vmem:[#allocation2 + $0x308] sm:$0xff]
    %v836 = vld [vmem:[#allocation2 + $0x310] sm:$0xff]
    %v837 = vld [vmem:[#allocation2 + $0x318] sm:$0xff]
    %v838 = vld [vmem:[#allocation2 + $0x320] sm:$0xff]
    %v839 = vld [vmem:[#allocation2 + $0x328] sm:$0xff]
    %v840 = vld [vmem:[#allocation2 + $0x330] sm:$0xff]
    %v841 = vld [vmem:[#allocation2 + $0x338] sm:$0xff]
    %v842 = vld [vmem:[#allocation2 + $0x340] sm:$0xff]
    %v843 = vld [vmem:[#allocation2 + $0x348] sm:$0xff]
    %v844 = vld [vmem:[#allocation2 + $0x350] sm:$0xff]
    %v845 = vld [vmem:[#allocation2 + $0x358] sm:$0xff]
    %v846 = vld [vmem:[#allocation2 + $0x360] sm:$0xff]
    %v847 = vld [vmem:[#allocation2 + $0x368] sm:$0xff]
    %v848 = vld [vmem:[#allocation2 + $0x370] sm:$0xff]
    %v849 = vld [vmem:[#allocation2 + $0x378] sm:$0xff]
    %v850 = vld [vmem:[#allocation2 + $0x380] sm:$0xff]
    %v851 = vld [vmem:[#allocation2 + $0x388] sm:$0xff]
    %v852 = vld [vmem:[#allocation2 + $0x390] sm:$0xff]
    %v853 = vld [vmem:[#allocation2 + $0x398] sm:$0xff]
    %v854 = vld [vmem:[#allocation2 + $0x3a0] sm:$0xff]
    %v855 = vld [vmem:[#allocation2 + $0x3a8] sm:$0xff]
    %v856 = vld [vmem:[#allocation2 + $0x3b0] sm:$0xff]
    %v857 = vld [vmem:[#allocation2 + $0x3b8] sm:$0xff]
    %v858 = vld [vmem:[#allocation2 + $0x3c0] sm:$0xff]
    %v859 = vld [vmem:[#allocation2 + $0x3c8] sm:$0xff]
    %v860 = vld [vmem:[#allocation2 + $0x3d0] sm:$0xff]
    %v861 = vld [vmem:[#allocation2 + $0x3d8] sm:$0xff]
    %v862 = vld [vmem:[#allocation2 + $0x3e0] sm:$0xff]
    %v863 = vld [vmem:[#allocation2 + $0x3e8] sm:$0xff]
    %v864 = vld [vmem:[#allocation2 + $0x3f0] sm:$0xff]
    %v865 = vld [vmem:[#allocation2 + $0x3f8] sm:$0xff]
    %v866 = vld [vmem:[#allocation2 + $0x400] sm:$0xff]
    %v867 = vld [vmem:[#allocation2 + $0x408] sm:$0xff]
    %v868 = vld [vmem:[#allocation2 + $0x410] sm:$0xff]
    %v869 = vld [vmem:[#allocation2 + $0x418] sm:$0xff]
    %v870 = vld [vmem:[#allocation2 + $0x420] sm:$0xff]
    %v871 = vld [vmem:[#allocation2 + $0x428] sm:$0xff]
    %v872 = vld [vmem:[#allocation2 + $0x430] sm:$0xff]
    %v873 = vld [vmem:[#allocation2 + $0x438] sm:$0xff]
    %v874 = vld [vmem:[#allocation2 + $0x440] sm:$0xff]
    %v875 = vld [vmem:[#allocation2 + $0x448] sm:$0xff]
    %v876 = vld [vmem:[#allocation2 + $0x450] sm:$0xff]
    %v877 = vld [vmem:[#allocation2 + $0x458] sm:$0xff]
    %v878 = vld [vmem:[#allocation2 + $0x460] sm:$0xff]
    %v879 = vld [vmem:[#allocation2 + $0x468] sm:$0xff]
    %v880 = vld [vmem:[#allocation2 + $0x470] sm:$0xff]
    %v881 = vld [vmem:[#allocation2 + $0x478] sm:$0xff]
    %v882 = vld [vmem:[#allocation2 + $0x480] sm:$0xff]
    %v883 = vld [vmem:[#allocation2 + $0x488] sm:$0xff]
    %v884 = vld [vmem:[#allocation2 + $0x490] sm:$0xff]
    %v885 = vld [vmem:[#allocation2 + $0x498] sm:$0xff]
    %v886 = vld [vmem:[#allocation2 + $0x4a0] sm:$0xff]
    %v887 = vld [vmem:[#allocation2 + $0x4a8] sm:$0xff]
    %v888 = vld [vmem:[#allocation2 + $0x4b0] sm:$0xff]
    %v889 = vld [vmem:[#allocation2 + $0x4b8] sm:$0xff]
    %v890 = vld [vmem:[#allocation2 + $0x4c0] sm:$0xff]
    %v891 = vld [vmem:[#allocation2 + $0x4c8] sm:$0xff]
    %v892 = vld [vmem:[#allocation2 + $0x4d0] sm:$0xff]
    %v893 = vld [vmem:[#allocation2 + $0x4d8] sm:$0xff]
    %v894 = vld [vmem:[#allocation2 + $0x4e0] sm:$0xff]
    %v895 = vld [vmem:[#allocation2 + $0x4e8] sm:$0xff]
    %v896 = vld [vmem:[#allocation2 + $0x4f0] sm:$0xff]
    %v897 = vld [vmem:[#allocation2 + $0x4f8] sm:$0xff]
    %v898 = vld [vmem:[#allocation2 + $0x500] sm:$0xff]
    %v899 = vld [vmem:[#allocation2 + $0x508] sm:$0xff]
    %v900 = vld [vmem:[#allocation2 + $0x510] sm:$0xff]
    %v901 = vld [vmem:[#allocation2 + $0x518] sm:$0xff]
    %v902 = vld [vmem:[#allocation2 + $0x520] sm:$0xff]
    %v903 = vld [vmem:[#allocation2 + $0x528] sm:$0xff]
    %v904 = vld [vmem:[#allocation2 + $0x530] sm:$0xff]
    %v905 = vld [vmem:[#allocation2 + $0x538] sm:$0xff]
    %v906 = vld [vmem:[#allocation2 + $0x540] sm:$0xff]
    %v907 = vld [vmem:[#allocation2 + $0x548] sm:$0xff]
    %v908 = vld [vmem:[#allocation2 + $0x550] sm:$0xff]
    %v909 = vld [vmem:[#allocation2 + $0x558] sm:$0xff]
    %v910 = vld [vmem:[#allocation2 + $0x560] sm:$0xff]
    %v911 = vld [vmem:[#allocation2 + $0x568] sm:$0xff]
    %v912 = vld [vmem:[#allocation2 + $0x570] sm:$0xff]
    %v913 = vld [vmem:[#allocation2 + $0x578] sm:$0xff]
    %v914 = vld [vmem:[#allocation2 + $0x580] sm:$0xff]
    %v915 = vld [vmem:[#allocation2 + $0x588] sm:$0xff]
    %v916 = vld [vmem:[#allocation2 + $0x590] sm:$0xff]
    %v917 = vld [vmem:[#allocation2 + $0x598] sm:$0xff]
    %v918 = vld [vmem:[#allocation2 + $0x5a0] sm:$0xff]
    %v919 = vld [vmem:[#allocation2 + $0x5a8] sm:$0xff]
    %v920 = vld [vmem:[#allocation2 + $0x5b0] sm:$0xff]
    %v921 = vld [vmem:[#allocation2 + $0x5b8] sm:$0xff]
    %v922 = vld [vmem:[#allocation2 + $0x5c0] sm:$0xff]
    %v923 = vld [vmem:[#allocation2 + $0x5c8] sm:$0xff]
    %v924 = vld [vmem:[#allocation2 + $0x5d0] sm:$0xff]
    %v925 = vld [vmem:[#allocation2 + $0x5d8] sm:$0xff]
    %v926 = vld [vmem:[#allocation2 + $0x5e0] sm:$0xff]
    %v927 = vld [vmem:[#allocation2 + $0x5e8] sm:$0xff]
    %v928 = vld [vmem:[#allocation2 + $0x5f0] sm:$0xff]
    %v929 = vld [vmem:[#allocation2 + $0x5f8] sm:$0xff]
    %v930 = vld [vmem:[#allocation2 + $0x600] sm:$0xff]
    %v931 = vld [vmem:[#allocation2 + $0x608] sm:$0xff]
    %v932 = vld [vmem:[#allocation2 + $0x610] sm:$0xff]
    %v933 = vld [vmem:[#allocation2 + $0x618] sm:$0xff]
    %v934 = vld [vmem:[#allocation2 + $0x620] sm:$0xff]
    %v935 = vld [vmem:[#allocation2 + $0x628] sm:$0xff]
    %v936 = vld [vmem:[#allocation2 + $0x630] sm:$0xff]
    %v937 = vld [vmem:[#allocation2 + $0x638] sm:$0xff]
    %v938 = vld [vmem:[#allocation2 + $0x640] sm:$0xff]
    %v939 = vld [vmem:[#allocation2 + $0x648] sm:$0xff]
    %v940 = vld [vmem:[#allocation2 + $0x650] sm:$0xff]
    %v941 = vld [vmem:[#allocation2 + $0x658] sm:$0xff]
    %v942 = vld [vmem:[#allocation2 + $0x660] sm:$0xff]
    %v943 = vld [vmem:[#allocation2 + $0x668] sm:$0xff]
    %v944 = vld [vmem:[#allocation2 + $0x670] sm:$0xff]
    %v945 = vld [vmem:[#allocation2 + $0x678] sm:$0xff]
    %v946 = vld [vmem:[#allocation2 + $0x680] sm:$0xff]
    %v947 = vld [vmem:[#allocation2 + $0x688] sm:$0xff]
    %v948 = vld [vmem:[#allocation2 + $0x690] sm:$0xff]
    %v949 = vld [vmem:[#allocation2 + $0x698] sm:$0xff]
    %v950 = vld [vmem:[#allocation2 + $0x6a0] sm:$0xff]
    %v951 = vld [vmem:[#allocation2 + $0x6a8] sm:$0xff]
    %v952 = vld [vmem:[#allocation2 + $0x6b0] sm:$0xff]
    %v953 = vld [vmem:[#allocation2 + $0x6b8] sm:$0xff]
    %v954 = vld [vmem:[#allocation2 + $0x6c0] sm:$0xff]
    %v955 = vld [vmem:[#allocation2 + $0x6c8] sm:$0xff]
    %v956 = vld [vmem:[#allocation2 + $0x6d0] sm:$0xff]
    %v957 = vld [vmem:[#allocation2 + $0x6d8] sm:$0xff]
    %v958 = vld [vmem:[#allocation2 + $0x6e0] sm:$0xff]
    %v959 = vld [vmem:[#allocation2 + $0x6e8] sm:$0xff]
    %v960 = vld [vmem:[#allocation2 + $0x6f0] sm:$0xff]
    %v961 = vld [vmem:[#allocation2 + $0x6f8] sm:$0xff]
    %v962 = vld [vmem:[#allocation2 + $0x700] sm:$0xff]
    %v963 = vld [vmem:[#allocation2 + $0x708] sm:$0xff]
    %v964 = vld [vmem:[#allocation2 + $0x710] sm:$0xff]
    %v965 = vld [vmem:[#allocation2 + $0x718] sm:$0xff]
    %v966 = vld [vmem:[#allocation2 + $0x720] sm:$0xff]
    %v967 = vld [vmem:[#allocation2 + $0x728] sm:$0xff]
    %v968 = vld [vmem:[#allocation2 + $0x730] sm:$0xff]
    %v969 = vld [vmem:[#allocation2 + $0x738] sm:$0xff]
    %v970 = vld [vmem:[#allocation2 + $0x740] sm:$0xff]
    %v971 = vld [vmem:[#allocation2 + $0x748] sm:$0xff]
    %v972 = vld [vmem:[#allocation2 + $0x750] sm:$0xff]
    %v973 = vld [vmem:[#allocation2 + $0x758] sm:$0xff]
    %v974 = vld [vmem:[#allocation2 + $0x760] sm:$0xff]
    %v975 = vld [vmem:[#allocation2 + $0x768] sm:$0xff]
    %v976 = vld [vmem:[#allocation2 + $0x770] sm:$0xff]
    %v977 = vld [vmem:[#allocation2 + $0x778] sm:$0xff]
    %v978 = vld [vmem:[#allocation2 + $0x780] sm:$0xff]
    %v979 = vld [vmem:[#allocation2 + $0x788] sm:$0xff]
    %v980 = vld [vmem:[#allocation2 + $0x790] sm:$0xff]
    %v981 = vld [vmem:[#allocation2 + $0x798] sm:$0xff]
    %v982 = vld [vmem:[#allocation2 + $0x7a0] sm:$0xff]
    %v983 = vld [vmem:[#allocation2 + $0x7a8] sm:$0xff]
    %v984 = vld [vmem:[#allocation2 + $0x7b0] sm:$0xff]
    %v985 = vld [vmem:[#allocation2 + $0x7b8] sm:$0xff]
    %v986 = vld [vmem:[#allocation2 + $0x7c0] sm:$0xff]
    %v987 = vld [vmem:[#allocation2 + $0x7c8] sm:$0xff]
    %v988 = vld [vmem:[#allocation2 + $0x7d0] sm:$0xff]
    %v989 = vld [vmem:[#allocation2 + $0x7d8] sm:$0xff]
    %v990 = vld [vmem:[#allocation2 + $0x7e0] sm:$0xff]
    %v991 = vld [vmem:[#allocation2 + $0x7e8] sm:$0xff]
    %v992 = vld [vmem:[#allocation2 + $0x7f0] sm:$0xff]
    %v993 = vld [vmem:[#allocation2 + $0x7f8] sm:$0xff]
    %v994 = vld [vmem:[%s4] sm:$0xf]
    %v996 = vperm.slane %v994, 0
    %v997 = vperm.slane %v994, 1
    %v998 = vperm.slane %v994, 2
    %v999 = vperm.slane %v994, 3
    %v1260 = vunpack.c.l.b16 %v738
    %v1261 = vunpack.c.h.b16 %v738
    %v1262 = vunpack.c.l.b16 %v739
    %v1263 = vunpack.c.h.b16 %v739
    %v1264 = vunpack.c.l.b16 %v740
    %v1265 = vunpack.c.h.b16 %v740
    %v1266 = vunpack.c.l.b16 %v741
    %v1267 = vunpack.c.h.b16 %v741
    %v1268 = vunpack.c.l.b16 %v742
    %v1269 = vunpack.c.h.b16 %v742
    %v1270 = vunpack.c.l.b16 %v743
    %v1271 = vunpack.c.h.b16 %v743
    %v1272 = vunpack.c.l.b16 %v744
    %v1273 = vunpack.c.h.b16 %v744
    %v1274 = vunpack.c.l.b16 %v745
    %v1275 = vunpack.c.h.b16 %v745
    %v1276 = vunpack.c.l.b16 %v746
    %v1277 = vunpack.c.h.b16 %v746
    %v1278 = vunpack.c.l.b16 %v747
    %v1279 = vunpack.c.h.b16 %v747
    %v1280 = vunpack.c.l.b16 %v748
    %v1281 = vunpack.c.h.b16 %v748
    %v1282 = vunpack.c.l.b16 %v749
    %v1283 = vunpack.c.h.b16 %v749
    %v1284 = vunpack.c.l.b16 %v750
    %v1285 = vunpack.c.h.b16 %v750
    %v1286 = vunpack.c.l.b16 %v751
    %v1287 = vunpack.c.h.b16 %v751
    %v1288 = vunpack.c.l.b16 %v752
    %v1289 = vunpack.c.h.b16 %v752
    %v1290 = vunpack.c.l.b16 %v753
    %v1291 = vunpack.c.h.b16 %v753
    %v1292 = vunpack.c.l.b16 %v754
    %v1293 = vunpack.c.h.b16 %v754
    %v1294 = vunpack.c.l.b16 %v755
    %v1295 = vunpack.c.h.b16 %v755
    %v1296 = vunpack.c.l.b16 %v756
    %v1297 = vunpack.c.h.b16 %v756
    %v1298 = vunpack.c.l.b16 %v757
    %v1299 = vunpack.c.h.b16 %v757
    %v1300 = vunpack.c.l.b16 %v758
    %v1301 = vunpack.c.h.b16 %v758
    %v1302 = vunpack.c.l.b16 %v759
    %v1303 = vunpack.c.h.b16 %v759
    %v1304 = vunpack.c.l.b16 %v760
    %v1305 = vunpack.c.h.b16 %v760
    %v1306 = vunpack.c.l.b16 %v761
    %v1307 = vunpack.c.h.b16 %v761
    %v1308 = vunpack.c.l.b16 %v762
    %v1309 = vunpack.c.h.b16 %v762
    %v1310 = vunpack.c.l.b16 %v763
    %v1311 = vunpack.c.h.b16 %v763
    %v1312 = vunpack.c.l.b16 %v764
    %v1313 = vunpack.c.h.b16 %v764
    %v1314 = vunpack.c.l.b16 %v765
    %v1315 = vunpack.c.h.b16 %v765
    %v1316 = vunpack.c.l.b16 %v766
    %v1317 = vunpack.c.h.b16 %v766
    %v1318 = vunpack.c.l.b16 %v767
    %v1319 = vunpack.c.h.b16 %v767
    %v1320 = vunpack.c.l.b16 %v768
    %v1321 = vunpack.c.h.b16 %v768
    %v1322 = vunpack.c.l.b16 %v769
    %v1323 = vunpack.c.h.b16 %v769
    %v1324 = vunpack.c.l.b16 %v770
    %v1325 = vunpack.c.h.b16 %v770
    %v1326 = vunpack.c.l.b16 %v771
    %v1327 = vunpack.c.h.b16 %v771
    %v1328 = vunpack.c.l.b16 %v772
    %v1329 = vunpack.c.h.b16 %v772
    %v1330 = vunpack.c.l.b16 %v773
    %v1331 = vunpack.c.h.b16 %v773
    %v1332 = vunpack.c.l.b16 %v774
    %v1333 = vunpack.c.h.b16 %v774
    %v1334 = vunpack.c.l.b16 %v775
    %v1335 = vunpack.c.h.b16 %v775
    %v1336 = vunpack.c.l.b16 %v776
    %v1337 = vunpack.c.h.b16 %v776
    %v1338 = vunpack.c.l.b16 %v777
    %v1339 = vunpack.c.h.b16 %v777
    %v1340 = vunpack.c.l.b16 %v778
    %v1341 = vunpack.c.h.b16 %v778
    %v1342 = vunpack.c.l.b16 %v779
    %v1343 = vunpack.c.h.b16 %v779
    %v1344 = vunpack.c.l.b16 %v780
    %v1345 = vunpack.c.h.b16 %v780
    %v1346 = vunpack.c.l.b16 %v781
    %v1347 = vunpack.c.h.b16 %v781
    %v1348 = vunpack.c.l.b16 %v782
    %v1349 = vunpack.c.h.b16 %v782
    %v1350 = vunpack.c.l.b16 %v783
    %v1351 = vunpack.c.h.b16 %v783
    %v1352 = vunpack.c.l.b16 %v784
    %v1353 = vunpack.c.h.b16 %v784
    %v1354 = vunpack.c.l.b16 %v785
    %v1355 = vunpack.c.h.b16 %v785
    %v1356 = vunpack.c.l.b16 %v786
    %v1357 = vunpack.c.h.b16 %v786
    %v1358 = vunpack.c.l.b16 %v787
    %v1359 = vunpack.c.h.b16 %v787
    %v1360 = vunpack.c.l.b16 %v788
    %v1361 = vunpack.c.h.b16 %v788
    %v1362 = vunpack.c.l.b16 %v789
    %v1363 = vunpack.c.h.b16 %v789
    %v1364 = vunpack.c.l.b16 %v790
    %v1365 = vunpack.c.h.b16 %v790
    %v1366 = vunpack.c.l.b16 %v791
    %v1367 = vunpack.c.h.b16 %v791
    %v1368 = vunpack.c.l.b16 %v792
    %v1369 = vunpack.c.h.b16 %v792
    %v1370 = vunpack.c.l.b16 %v793
    %v1371 = vunpack.c.h.b16 %v793
    %v1372 = vunpack.c.l.b16 %v794
    %v1373 = vunpack.c.h.b16 %v794
    %v1374 = vunpack.c.l.b16 %v795
    %v1375 = vunpack.c.h.b16 %v795
    %v1376 = vunpack.c.l.b16 %v796
    %v1377 = vunpack.c.h.b16 %v796
    %v1378 = vunpack.c.l.b16 %v797
    %v1379 = vunpack.c.h.b16 %v797
    %v1380 = vunpack.c.l.b16 %v798
    %v1381 = vunpack.c.h.b16 %v798
    %v1382 = vunpack.c.l.b16 %v799
    %v1383 = vunpack.c.h.b16 %v799
    %v1384 = vunpack.c.l.b16 %v800
    %v1385 = vunpack.c.h.b16 %v800
    %v1386 = vunpack.c.l.b16 %v801
    %v1387 = vunpack.c.h.b16 %v801
    %v1388 = vunpack.c.l.b16 %v802
    %v1389 = vunpack.c.h.b16 %v802
    %v1390 = vunpack.c.l.b16 %v803
    %v1391 = vunpack.c.h.b16 %v803
    %v1392 = vunpack.c.l.b16 %v804
    %v1393 = vunpack.c.h.b16 %v804
    %v1394 = vunpack.c.l.b16 %v805
    %v1395 = vunpack.c.h.b16 %v805
    %v1396 = vunpack.c.l.b16 %v806
    %v1397 = vunpack.c.h.b16 %v806
    %v1398 = vunpack.c.l.b16 %v807
    %v1399 = vunpack.c.h.b16 %v807
    %v1400 = vunpack.c.l.b16 %v808
    %v1401 = vunpack.c.h.b16 %v808
    %v1402 = vunpack.c.l.b16 %v809
    %v1403 = vunpack.c.h.b16 %v809
    %v1404 = vunpack.c.l.b16 %v810
    %v1405 = vunpack.c.h.b16 %v810
    %v1406 = vunpack.c.l.b16 %v811
    %v1407 = vunpack.c.h.b16 %v811
    %v1408 = vunpack.c.l.b16 %v812
    %v1409 = vunpack.c.h.b16 %v812
    %v1410 = vunpack.c.l.b16 %v813
    %v1411 = vunpack.c.h.b16 %v813
    %v1412 = vunpack.c.l.b16 %v814
    %v1413 = vunpack.c.h.b16 %v814
    %v1414 = vunpack.c.l.b16 %v815
    %v1415 = vunpack.c.h.b16 %v815
    %v1416 = vunpack.c.l.b16 %v816
    %v1417 = vunpack.c.h.b16 %v816
    %v1418 = vunpack.c.l.b16 %v817
    %v1419 = vunpack.c.h.b16 %v817
    %v1420 = vunpack.c.l.b16 %v818
    %v1421 = vunpack.c.h.b16 %v818
    %v1422 = vunpack.c.l.b16 %v819
    %v1423 = vunpack.c.h.b16 %v819
    %v1424 = vunpack.c.l.b16 %v820
    %v1425 = vunpack.c.h.b16 %v820
    %v1426 = vunpack.c.l.b16 %v821
    %v1427 = vunpack.c.h.b16 %v821
    %v1428 = vunpack.c.l.b16 %v822
    %v1429 = vunpack.c.h.b16 %v822
    %v1430 = vunpack.c.l.b16 %v823
    %v1431 = vunpack.c.h.b16 %v823
    %v1432 = vunpack.c.l.b16 %v824
    %v1433 = vunpack.c.h.b16 %v824
    %v1434 = vunpack.c.l.b16 %v825
    %v1435 = vunpack.c.h.b16 %v825
    %v1436 = vunpack.c.l.b16 %v826
    %v1437 = vunpack.c.h.b16 %v826
    %v1438 = vunpack.c.l.b16 %v827
    %v1439 = vunpack.c.h.b16 %v827
    %v1440 = vunpack.c.l.b16 %v828
    %v1441 = vunpack.c.h.b16 %v828
    %v1442 = vunpack.c.l.b16 %v829
    %v1443 = vunpack.c.h.b16 %v829
    %v1444 = vunpack.c.l.b16 %v830
    %v1445 = vunpack.c.h.b16 %v830
    %v1446 = vunpack.c.l.b16 %v831
    %v1447 = vunpack.c.h.b16 %v831
    %v1448 = vunpack.c.l.b16 %v832
    %v1449 = vunpack.c.h.b16 %v832
    %v1450 = vunpack.c.l.b16 %v833
    %v1451 = vunpack.c.h.b16 %v833
    %v1452 = vunpack.c.l.b16 %v834
    %v1453 = vunpack.c.h.b16 %v834
    %v1454 = vunpack.c.l.b16 %v835
    %v1455 = vunpack.c.h.b16 %v835
    %v1456 = vunpack.c.l.b16 %v836
    %v1457 = vunpack.c.h.b16 %v836
    %v1458 = vunpack.c.l.b16 %v837
    %v1459 = vunpack.c.h.b16 %v837
    %v1460 = vunpack.c.l.b16 %v838
    %v1461 = vunpack.c.h.b16 %v838
    %v1462 = vunpack.c.l.b16 %v839
    %v1463 = vunpack.c.h.b16 %v839
    %v1464 = vunpack.c.l.b16 %v840
    %v1465 = vunpack.c.h.b16 %v840
    %v1466 = vunpack.c.l.b16 %v841
    %v1467 = vunpack.c.h.b16 %v841
    %v1468 = vunpack.c.l.b16 %v842
    %v1469 = vunpack.c.h.b16 %v842
    %v1470 = vunpack.c.l.b16 %v843
    %v1471 = vunpack.c.h.b16 %v843
    %v1472 = vunpack.c.l.b16 %v844
    %v1473 = vunpack.c.h.b16 %v844
    %v1474 = vunpack.c.l.b16 %v845
    %v1475 = vunpack.c.h.b16 %v845
    %v1476 = vunpack.c.l.b16 %v846
    %v1477 = vunpack.c.h.b16 %v846
    %v1478 = vunpack.c.l.b16 %v847
    %v1479 = vunpack.c.h.b16 %v847
    %v1480 = vunpack.c.l.b16 %v848
    %v1481 = vunpack.c.h.b16 %v848
    %v1482 = vunpack.c.l.b16 %v849
    %v1483 = vunpack.c.h.b16 %v849
    %v1484 = vunpack.c.l.b16 %v850
    %v1485 = vunpack.c.h.b16 %v850
    %v1486 = vunpack.c.l.b16 %v851
    %v1487 = vunpack.c.h.b16 %v851
    %v1488 = vunpack.c.l.b16 %v852
    %v1489 = vunpack.c.h.b16 %v852
    %v1490 = vunpack.c.l.b16 %v853
    %v1491 = vunpack.c.h.b16 %v853
    %v1492 = vunpack.c.l.b16 %v854
    %v1493 = vunpack.c.h.b16 %v854
    %v1494 = vunpack.c.l.b16 %v855
    %v1495 = vunpack.c.h.b16 %v855
    %v1496 = vunpack.c.l.b16 %v856
    %v1497 = vunpack.c.h.b16 %v856
    %v1498 = vunpack.c.l.b16 %v857
    %v1499 = vunpack.c.h.b16 %v857
    %v1500 = vunpack.c.l.b16 %v858
    %v1501 = vunpack.c.h.b16 %v858
    %v1502 = vunpack.c.l.b16 %v859
    %v1503 = vunpack.c.h.b16 %v859
    %v1504 = vunpack.c.l.b16 %v860
    %v1505 = vunpack.c.h.b16 %v860
    %v1506 = vunpack.c.l.b16 %v861
    %v1507 = vunpack.c.h.b16 %v861
    %v1508 = vunpack.c.l.b16 %v862
    %v1509 = vunpack.c.h.b16 %v862
    %v1510 = vunpack.c.l.b16 %v863
    %v1511 = vunpack.c.h.b16 %v863
    %v1512 = vunpack.c.l.b16 %v864
    %v1513 = vunpack.c.h.b16 %v864
    %v1514 = vunpack.c.l.b16 %v865
    %v1515 = vunpack.c.h.b16 %v865
    %v1516 = vunpack.c.l.b16 %v866
    %v1517 = vunpack.c.h.b16 %v866
    %v1518 = vunpack.c.l.b16 %v867
    %v1519 = vunpack.c.h.b16 %v867
    %v1520 = vunpack.c.l.b16 %v868
    %v1521 = vunpack.c.h.b16 %v868
    %v1522 = vunpack.c.l.b16 %v869
    %v1523 = vunpack.c.h.b16 %v869
    %v1524 = vunpack.c.l.b16 %v870
    %v1525 = vunpack.c.h.b16 %v870
    %v1526 = vunpack.c.l.b16 %v871
    %v1527 = vunpack.c.h.b16 %v871
    %v1528 = vunpack.c.l.b16 %v872
    %v1529 = vunpack.c.h.b16 %v872
    %v1530 = vunpack.c.l.b16 %v873
    %v1531 = vunpack.c.h.b16 %v873
    %v1532 = vunpack.c.l.b16 %v874
    %v1533 = vunpack.c.h.b16 %v874
    %v1534 = vunpack.c.l.b16 %v875
    %v1535 = vunpack.c.h.b16 %v875
    %v1536 = vunpack.c.l.b16 %v876
    %v1537 = vunpack.c.h.b16 %v876
    %v1538 = vunpack.c.l.b16 %v877
    %v1539 = vunpack.c.h.b16 %v877
    %v1540 = vunpack.c.l.b16 %v878
    %v1541 = vunpack.c.h.b16 %v878
    %v1542 = vunpack.c.l.b16 %v879
    %v1543 = vunpack.c.h.b16 %v879
    %v1544 = vunpack.c.l.b16 %v880
    %v1545 = vunpack.c.h.b16 %v880
    %v1546 = vunpack.c.l.b16 %v881
    %v1547 = vunpack.c.h.b16 %v881
    %v1548 = vunpack.c.l.b16 %v882
    %v1549 = vunpack.c.h.b16 %v882
    %v1550 = vunpack.c.l.b16 %v883
    %v1551 = vunpack.c.h.b16 %v883
    %v1552 = vunpack.c.l.b16 %v884
    %v1553 = vunpack.c.h.b16 %v884
    %v1554 = vunpack.c.l.b16 %v885
    %v1555 = vunpack.c.h.b16 %v885
    %v1556 = vunpack.c.l.b16 %v886
    %v1557 = vunpack.c.h.b16 %v886
    %v1558 = vunpack.c.l.b16 %v887
    %v1559 = vunpack.c.h.b16 %v887
    %v1560 = vunpack.c.l.b16 %v888
    %v1561 = vunpack.c.h.b16 %v888
    %v1562 = vunpack.c.l.b16 %v889
    %v1563 = vunpack.c.h.b16 %v889
    %v1564 = vunpack.c.l.b16 %v890
    %v1565 = vunpack.c.h.b16 %v890
    %v1566 = vunpack.c.l.b16 %v891
    %v1567 = vunpack.c.h.b16 %v891
    %v1568 = vunpack.c.l.b16 %v892
    %v1569 = vunpack.c.h.b16 %v892
    %v1570 = vunpack.c.l.b16 %v893
    %v1571 = vunpack.c.h.b16 %v893
    %v1572 = vunpack.c.l.b16 %v894
    %v1573 = vunpack.c.h.b16 %v894
    %v1574 = vunpack.c.l.b16 %v895
    %v1575 = vunpack.c.h.b16 %v895
    %v1576 = vunpack.c.l.b16 %v896
    %v1577 = vunpack.c.h.b16 %v896
    %v1578 = vunpack.c.l.b16 %v897
    %v1579 = vunpack.c.h.b16 %v897
    %v1580 = vunpack.c.l.b16 %v898
    %v1581 = vunpack.c.h.b16 %v898
    %v1582 = vunpack.c.l.b16 %v899
    %v1583 = vunpack.c.h.b16 %v899
    %v1584 = vunpack.c.l.b16 %v900
    %v1585 = vunpack.c.h.b16 %v900
    %v1586 = vunpack.c.l.b16 %v901
    %v1587 = vunpack.c.h.b16 %v901
    %v1588 = vunpack.c.l.b16 %v902
    %v1589 = vunpack.c.h.b16 %v902
    %v1590 = vunpack.c.l.b16 %v903
    %v1591 = vunpack.c.h.b16 %v903
    %v1592 = vunpack.c.l.b16 %v904
    %v1593 = vunpack.c.h.b16 %v904
    %v1594 = vunpack.c.l.b16 %v905
    %v1595 = vunpack.c.h.b16 %v905
    %v1596 = vunpack.c.l.b16 %v906
    %v1597 = vunpack.c.h.b16 %v906
    %v1598 = vunpack.c.l.b16 %v907
    %v1599 = vunpack.c.h.b16 %v907
    %v1600 = vunpack.c.l.b16 %v908
    %v1601 = vunpack.c.h.b16 %v908
    %v1602 = vunpack.c.l.b16 %v909
    %v1603 = vunpack.c.h.b16 %v909
    %v1604 = vunpack.c.l.b16 %v910
    %v1605 = vunpack.c.h.b16 %v910
    %v1606 = vunpack.c.l.b16 %v911
    %v1607 = vunpack.c.h.b16 %v911
    %v1608 = vunpack.c.l.b16 %v912
    %v1609 = vunpack.c.h.b16 %v912
    %v1610 = vunpack.c.l.b16 %v913
    %v1611 = vunpack.c.h.b16 %v913
    %v1612 = vunpack.c.l.b16 %v914
    %v1613 = vunpack.c.h.b16 %v914
    %v1614 = vunpack.c.l.b16 %v915
    %v1615 = vunpack.c.h.b16 %v915
    %v1616 = vunpack.c.l.b16 %v916
    %v1617 = vunpack.c.h.b16 %v916
    %v1618 = vunpack.c.l.b16 %v917
    %v1619 = vunpack.c.h.b16 %v917
    %v1620 = vunpack.c.l.b16 %v918
    %v1621 = vunpack.c.h.b16 %v918
    %v1622 = vunpack.c.l.b16 %v919
    %v1623 = vunpack.c.h.b16 %v919
    %v1624 = vunpack.c.l.b16 %v920
    %v1625 = vunpack.c.h.b16 %v920
    %v1626 = vunpack.c.l.b16 %v921
    %v1627 = vunpack.c.h.b16 %v921
    %v1628 = vunpack.c.l.b16 %v922
    %v1629 = vunpack.c.h.b16 %v922
    %v1630 = vunpack.c.l.b16 %v923
    %v1631 = vunpack.c.h.b16 %v923
    %v1632 = vunpack.c.l.b16 %v924
    %v1633 = vunpack.c.h.b16 %v924
    %v1634 = vunpack.c.l.b16 %v925
    %v1635 = vunpack.c.h.b16 %v925
    %v1636 = vunpack.c.l.b16 %v926
    %v1637 = vunpack.c.h.b16 %v926
    %v1638 = vunpack.c.l.b16 %v927
    %v1639 = vunpack.c.h.b16 %v927
    %v1640 = vunpack.c.l.b16 %v928
    %v1641 = vunpack.c.h.b16 %v928
    %v1642 = vunpack.c.l.b16 %v929
    %v1643 = vunpack.c.h.b16 %v929
    %v1644 = vunpack.c.l.b16 %v930
    %v1645 = vunpack.c.h.b16 %v930
    %v1646 = vunpack.c.l.b16 %v931
    %v1647 = vunpack.c.h.b16 %v931
    %v1648 = vunpack.c.l.b16 %v932
    %v1649 = vunpack.c.h.b16 %v932
    %v1650 = vunpack.c.l.b16 %v933
    %v1651 = vunpack.c.h.b16 %v933
    %v1652 = vunpack.c.l.b16 %v934
    %v1653 = vunpack.c.h.b16 %v934
    %v1654 = vunpack.c.l.b16 %v935
    %v1655 = vunpack.c.h.b16 %v935
    %v1656 = vunpack.c.l.b16 %v936
    %v1657 = vunpack.c.h.b16 %v936
    %v1658 = vunpack.c.l.b16 %v937
    %v1659 = vunpack.c.h.b16 %v937
    %v1660 = vunpack.c.l.b16 %v938
    %v1661 = vunpack.c.h.b16 %v938
    %v1662 = vunpack.c.l.b16 %v939
    %v1663 = vunpack.c.h.b16 %v939
    %v1664 = vunpack.c.l.b16 %v940
    %v1665 = vunpack.c.h.b16 %v940
    %v1666 = vunpack.c.l.b16 %v941
    %v1667 = vunpack.c.h.b16 %v941
    %v1668 = vunpack.c.l.b16 %v942
    %v1669 = vunpack.c.h.b16 %v942
    %v1670 = vunpack.c.l.b16 %v943
    %v1671 = vunpack.c.h.b16 %v943
    %v1672 = vunpack.c.l.b16 %v944
    %v1673 = vunpack.c.h.b16 %v944
    %v1674 = vunpack.c.l.b16 %v945
    %v1675 = vunpack.c.h.b16 %v945
    %v1676 = vunpack.c.l.b16 %v946
    %v1677 = vunpack.c.h.b16 %v946
    %v1678 = vunpack.c.l.b16 %v947
    %v1679 = vunpack.c.h.b16 %v947
    %v1680 = vunpack.c.l.b16 %v948
    %v1681 = vunpack.c.h.b16 %v948
    %v1682 = vunpack.c.l.b16 %v949
    %v1683 = vunpack.c.h.b16 %v949
    %v1684 = vunpack.c.l.b16 %v950
    %v1685 = vunpack.c.h.b16 %v950
    %v1686 = vunpack.c.l.b16 %v951
    %v1687 = vunpack.c.h.b16 %v951
    %v1688 = vunpack.c.l.b16 %v952
    %v1689 = vunpack.c.h.b16 %v952
    %v1690 = vunpack.c.l.b16 %v953
    %v1691 = vunpack.c.h.b16 %v953
    %v1692 = vunpack.c.l.b16 %v954
    %v1693 = vunpack.c.h.b16 %v954
    %v1694 = vunpack.c.l.b16 %v955
    %v1695 = vunpack.c.h.b16 %v955
    %v1696 = vunpack.c.l.b16 %v956
    %v1697 = vunpack.c.h.b16 %v956
    %v1698 = vunpack.c.l.b16 %v957
    %v1699 = vunpack.c.h.b16 %v957
    %v1700 = vunpack.c.l.b16 %v958
    %v1701 = vunpack.c.h.b16 %v958
    %v1702 = vunpack.c.l.b16 %v959
    %v1703 = vunpack.c.h.b16 %v959
    %v1704 = vunpack.c.l.b16 %v960
    %v1705 = vunpack.c.h.b16 %v960
    %v1706 = vunpack.c.l.b16 %v961
    %v1707 = vunpack.c.h.b16 %v961
    %v1708 = vunpack.c.l.b16 %v962
    %v1709 = vunpack.c.h.b16 %v962
    %v1710 = vunpack.c.l.b16 %v963
    %v1711 = vunpack.c.h.b16 %v963
    %v1712 = vunpack.c.l.b16 %v964
    %v1713 = vunpack.c.h.b16 %v964
    %v1714 = vunpack.c.l.b16 %v965
    %v1715 = vunpack.c.h.b16 %v965
    %v1716 = vunpack.c.l.b16 %v966
    %v1717 = vunpack.c.h.b16 %v966
    %v1718 = vunpack.c.l.b16 %v967
    %v1719 = vunpack.c.h.b16 %v967
    %v1720 = vunpack.c.l.b16 %v968
    %v1721 = vunpack.c.h.b16 %v968
    %v1722 = vunpack.c.l.b16 %v969
    %v1723 = vunpack.c.h.b16 %v969
    %v1724 = vunpack.c.l.b16 %v970
    %v1725 = vunpack.c.h.b16 %v970
    %v1726 = vunpack.c.l.b16 %v971
    %v1727 = vunpack.c.h.b16 %v971
    %v1728 = vunpack.c.l.b16 %v972
    %v1729 = vunpack.c.h.b16 %v972
    %v1730 = vunpack.c.l.b16 %v973
    %v1731 = vunpack.c.h.b16 %v973
    %v1732 = vunpack.c.l.b16 %v974
    %v1733 = vunpack.c.h.b16 %v974
    %v1734 = vunpack.c.l.b16 %v975
    %v1735 = vunpack.c.h.b16 %v975
    %v1736 = vunpack.c.l.b16 %v976
    %v1737 = vunpack.c.h.b16 %v976
    %v1738 = vunpack.c.l.b16 %v977
    %v1739 = vunpack.c.h.b16 %v977
    %v1740 = vunpack.c.l.b16 %v978
    %v1741 = vunpack.c.h.b16 %v978
    %v1742 = vunpack.c.l.b16 %v979
    %v1743 = vunpack.c.h.b16 %v979
    %v1744 = vunpack.c.l.b16 %v980
    %v1745 = vunpack.c.h.b16 %v980
    %v1746 = vunpack.c.l.b16 %v981
    %v1747 = vunpack.c.h.b16 %v981
    %v1748 = vunpack.c.l.b16 %v982
    %v1749 = vunpack.c.h.b16 %v982
    %v1750 = vunpack.c.l.b16 %v983
    %v1751 = vunpack.c.h.b16 %v983
    %v1752 = vunpack.c.l.b16 %v984
    %v1753 = vunpack.c.h.b16 %v984
    %v1754 = vunpack.c.l.b16 %v985
    %v1755 = vunpack.c.h.b16 %v985
    %v1756 = vunpack.c.l.b16 %v986
    %v1757 = vunpack.c.h.b16 %v986
    %v1758 = vunpack.c.l.b16 %v987
    %v1759 = vunpack.c.h.b16 %v987
    %v1760 = vunpack.c.l.b16 %v988
    %v1761 = vunpack.c.h.b16 %v988
    %v1762 = vunpack.c.l.b16 %v989
    %v1763 = vunpack.c.h.b16 %v989
    %v1764 = vunpack.c.l.b16 %v990
    %v1765 = vunpack.c.h.b16 %v990
    %v1766 = vunpack.c.l.b16 %v991
    %v1767 = vunpack.c.h.b16 %v991
    %v1768 = vunpack.c.l.b16 %v992
    %v1769 = vunpack.c.h.b16 %v992
    %v1770 = vunpack.c.l.b16 %v993
    %v1771 = vunpack.c.h.b16 %v993
    %v1772 = vpack.c.b16 %v1264, %v1260
    %v1773 = vpack.c.b16 %v1265, %v1261
    %v1774 = vpack.c.b16 %v1266, %v1262
    %v1775 = vpack.c.b16 %v1267, %v1263
    %v1776 = vpack.c.b16 %v1272, %v1268
    %v1777 = vpack.c.b16 %v1273, %v1269
    %v1778 = vpack.c.b16 %v1274, %v1270
    %v1779 = vpack.c.b16 %v1275, %v1271
    %v1780 = vpack.c.b16 %v1280, %v1276
    %v1781 = vpack.c.b16 %v1281, %v1277
    %v1782 = vpack.c.b16 %v1282, %v1278
    %v1783 = vpack.c.b16 %v1283, %v1279
    %v1784 = vpack.c.b16 %v1288, %v1284
    %v1785 = vpack.c.b16 %v1289, %v1285
    %v1786 = vpack.c.b16 %v1290, %v1286
    %v1787 = vpack.c.b16 %v1291, %v1287
    %v1788 = vpack.c.b16 %v1296, %v1292
    %v1789 = vpack.c.b16 %v1297, %v1293
    %v1790 = vpack.c.b16 %v1298, %v1294
    %v1791 = vpack.c.b16 %v1299, %v1295
    %v1792 = vpack.c.b16 %v1304, %v1300
    %v1793 = vpack.c.b16 %v1305, %v1301
    %v1794 = vpack.c.b16 %v1306, %v1302
    %v1795 = vpack.c.b16 %v1307, %v1303
    %v1796 = vpack.c.b16 %v1312, %v1308
    %v1797 = vpack.c.b16 %v1313, %v1309
    %v1798 = vpack.c.b16 %v1314, %v1310
    %v1799 = vpack.c.b16 %v1315, %v1311
    %v1800 = vpack.c.b16 %v1320, %v1316
    %v1801 = vpack.c.b16 %v1321, %v1317
    %v1802 = vpack.c.b16 %v1322, %v1318
    %v1803 = vpack.c.b16 %v1323, %v1319
    %v1804 = vpack.c.b16 %v1328, %v1324
    %v1805 = vpack.c.b16 %v1329, %v1325
    %v1806 = vpack.c.b16 %v1330, %v1326
    %v1807 = vpack.c.b16 %v1331, %v1327
    %v1808 = vpack.c.b16 %v1336, %v1332
    %v1809 = vpack.c.b16 %v1337, %v1333
    %v1810 = vpack.c.b16 %v1338, %v1334
    %v1811 = vpack.c.b16 %v1339, %v1335
    %v1812 = vpack.c.b16 %v1344, %v1340
    %v1813 = vpack.c.b16 %v1345, %v1341
    %v1814 = vpack.c.b16 %v1346, %v1342
    %v1815 = vpack.c.b16 %v1347, %v1343
    %v1816 = vpack.c.b16 %v1352, %v1348
    %v1817 = vpack.c.b16 %v1353, %v1349
    %v1818 = vpack.c.b16 %v1354, %v1350
    %v1819 = vpack.c.b16 %v1355, %v1351
    %v1820 = vpack.c.b16 %v1360, %v1356
    %v1821 = vpack.c.b16 %v1361, %v1357
    %v1822 = vpack.c.b16 %v1362, %v1358
    %v1823 = vpack.c.b16 %v1363, %v1359
    %v1824 = vpack.c.b16 %v1368, %v1364
    %v1825 = vpack.c.b16 %v1369, %v1365
    %v1826 = vpack.c.b16 %v1370, %v1366
    %v1827 = vpack.c.b16 %v1371, %v1367
    %v1828 = vpack.c.b16 %v1376, %v1372
    %v1829 = vpack.c.b16 %v1377, %v1373
    %v1830 = vpack.c.b16 %v1378, %v1374
    %v1831 = vpack.c.b16 %v1379, %v1375
    %v1832 = vpack.c.b16 %v1384, %v1380
    %v1833 = vpack.c.b16 %v1385, %v1381
    %v1834 = vpack.c.b16 %v1386, %v1382
    %v1835 = vpack.c.b16 %v1387, %v1383
    %v1836 = vpack.c.b16 %v1392, %v1388
    %v1837 = vpack.c.b16 %v1393, %v1389
    %v1838 = vpack.c.b16 %v1394, %v1390
    %v1839 = vpack.c.b16 %v1395, %v1391
    %v1840 = vpack.c.b16 %v1400, %v1396
    %v1841 = vpack.c.b16 %v1401, %v1397
    %v1842 = vpack.c.b16 %v1402, %v1398
    %v1843 = vpack.c.b16 %v1403, %v1399
    %v1844 = vpack.c.b16 %v1408, %v1404
    %v1845 = vpack.c.b16 %v1409, %v1405
    %v1846 = vpack.c.b16 %v1410, %v1406
    %v1847 = vpack.c.b16 %v1411, %v1407
    %v1848 = vpack.c.b16 %v1416, %v1412
    %v1849 = vpack.c.b16 %v1417, %v1413
    %v1850 = vpack.c.b16 %v1418, %v1414
    %v1851 = vpack.c.b16 %v1419, %v1415
    %v1852 = vpack.c.b16 %v1424, %v1420
    %v1853 = vpack.c.b16 %v1425, %v1421
    %v1854 = vpack.c.b16 %v1426, %v1422
    %v1855 = vpack.c.b16 %v1427, %v1423
    %v1856 = vpack.c.b16 %v1432, %v1428
    %v1857 = vpack.c.b16 %v1433, %v1429
    %v1858 = vpack.c.b16 %v1434, %v1430
    %v1859 = vpack.c.b16 %v1435, %v1431
    %v1860 = vpack.c.b16 %v1440, %v1436
    %v1861 = vpack.c.b16 %v1441, %v1437
    %v1862 = vpack.c.b16 %v1442, %v1438
    %v1863 = vpack.c.b16 %v1443, %v1439
    %v1864 = vpack.c.b16 %v1448, %v1444
    %v1865 = vpack.c.b16 %v1449, %v1445
    %v1866 = vpack.c.b16 %v1450, %v1446
    %v1867 = vpack.c.b16 %v1451, %v1447
    %v1868 = vpack.c.b16 %v1456, %v1452
    %v1869 = vpack.c.b16 %v1457, %v1453
    %v1870 = vpack.c.b16 %v1458, %v1454
    %v1871 = vpack.c.b16 %v1459, %v1455
    %v1872 = vpack.c.b16 %v1464, %v1460
    %v1873 = vpack.c.b16 %v1465, %v1461
    %v1874 = vpack.c.b16 %v1466, %v1462
    %v1875 = vpack.c.b16 %v1467, %v1463
    %v1876 = vpack.c.b16 %v1472, %v1468
    %v1877 = vpack.c.b16 %v1473, %v1469
    %v1878 = vpack.c.b16 %v1474, %v1470
    %v1879 = vpack.c.b16 %v1475, %v1471
    %v1880 = vpack.c.b16 %v1480, %v1476
    %v1881 = vpack.c.b16 %v1481, %v1477
    %v1882 = vpack.c.b16 %v1482, %v1478
    %v1883 = vpack.c.b16 %v1483, %v1479
    %v1884 = vpack.c.b16 %v1488, %v1484
    %v1885 = vpack.c.b16 %v1489, %v1485
    %v1886 = vpack.c.b16 %v1490, %v1486
    %v1887 = vpack.c.b16 %v1491, %v1487
    %v1888 = vpack.c.b16 %v1496, %v1492
    %v1889 = vpack.c.b16 %v1497, %v1493
    %v1890 = vpack.c.b16 %v1498, %v1494
    %v1891 = vpack.c.b16 %v1499, %v1495
    %v1892 = vpack.c.b16 %v1504, %v1500
    %v1893 = vpack.c.b16 %v1505, %v1501
    %v1894 = vpack.c.b16 %v1506, %v1502
    %v1895 = vpack.c.b16 %v1507, %v1503
    %v1896 = vpack.c.b16 %v1512, %v1508
    %v1897 = vpack.c.b16 %v1513, %v1509
    %v1898 = vpack.c.b16 %v1514, %v1510
    %v1899 = vpack.c.b16 %v1515, %v1511
    %v1900 = vpack.c.b16 %v1520, %v1516
    %v1901 = vpack.c.b16 %v1521, %v1517
    %v1902 = vpack.c.b16 %v1522, %v1518
    %v1903 = vpack.c.b16 %v1523, %v1519
    %v1904 = vpack.c.b16 %v1528, %v1524
    %v1905 = vpack.c.b16 %v1529, %v1525
    %v1906 = vpack.c.b16 %v1530, %v1526
    %v1907 = vpack.c.b16 %v1531, %v1527
    %v1908 = vpack.c.b16 %v1536, %v1532
    %v1909 = vpack.c.b16 %v1537, %v1533
    %v1910 = vpack.c.b16 %v1538, %v1534
    %v1911 = vpack.c.b16 %v1539, %v1535
    %v1912 = vpack.c.b16 %v1544, %v1540
    %v1913 = vpack.c.b16 %v1545, %v1541
    %v1914 = vpack.c.b16 %v1546, %v1542
    %v1915 = vpack.c.b16 %v1547, %v1543
    %v1916 = vpack.c.b16 %v1552, %v1548
    %v1917 = vpack.c.b16 %v1553, %v1549
    %v1918 = vpack.c.b16 %v1554, %v1550
    %v1919 = vpack.c.b16 %v1555, %v1551
    %v1920 = vpack.c.b16 %v1560, %v1556
    %v1921 = vpack.c.b16 %v1561, %v1557
    %v1922 = vpack.c.b16 %v1562, %v1558
    %v1923 = vpack.c.b16 %v1563, %v1559
    %v1924 = vpack.c.b16 %v1568, %v1564
    %v1925 = vpack.c.b16 %v1569, %v1565
    %v1926 = vpack.c.b16 %v1570, %v1566
    %v1927 = vpack.c.b16 %v1571, %v1567
    %v1928 = vpack.c.b16 %v1576, %v1572
    %v1929 = vpack.c.b16 %v1577, %v1573
    %v1930 = vpack.c.b16 %v1578, %v1574
    %v1931 = vpack.c.b16 %v1579, %v1575
    %v1932 = vpack.c.b16 %v1584, %v1580
    %v1933 = vpack.c.b16 %v1585, %v1581
    %v1934 = vpack.c.b16 %v1586, %v1582
    %v1935 = vpack.c.b16 %v1587, %v1583
    %v1936 = vpack.c.b16 %v1592, %v1588
    %v1937 = vpack.c.b16 %v1593, %v1589
    %v1938 = vpack.c.b16 %v1594, %v1590
    %v1939 = vpack.c.b16 %v1595, %v1591
    %v1940 = vpack.c.b16 %v1600, %v1596
    %v1941 = vpack.c.b16 %v1601, %v1597
    %v1942 = vpack.c.b16 %v1602, %v1598
    %v1943 = vpack.c.b16 %v1603, %v1599
    %v1944 = vpack.c.b16 %v1608, %v1604
    %v1945 = vpack.c.b16 %v1609, %v1605
    %v1946 = vpack.c.b16 %v1610, %v1606
    %v1947 = vpack.c.b16 %v1611, %v1607
    %v1948 = vpack.c.b16 %v1616, %v1612
    %v1949 = vpack.c.b16 %v1617, %v1613
    %v1950 = vpack.c.b16 %v1618, %v1614
    %v1951 = vpack.c.b16 %v1619, %v1615
    %v1952 = vpack.c.b16 %v1624, %v1620
    %v1953 = vpack.c.b16 %v1625, %v1621
    %v1954 = vpack.c.b16 %v1626, %v1622
    %v1955 = vpack.c.b16 %v1627, %v1623
    %v1956 = vpack.c.b16 %v1632, %v1628
    %v1957 = vpack.c.b16 %v1633, %v1629
    %v1958 = vpack.c.b16 %v1634, %v1630
    %v1959 = vpack.c.b16 %v1635, %v1631
    %v1960 = vpack.c.b16 %v1640, %v1636
    %v1961 = vpack.c.b16 %v1641, %v1637
    %v1962 = vpack.c.b16 %v1642, %v1638
    %v1963 = vpack.c.b16 %v1643, %v1639
    %v1964 = vpack.c.b16 %v1648, %v1644
    %v1965 = vpack.c.b16 %v1649, %v1645
    %v1966 = vpack.c.b16 %v1650, %v1646
    %v1967 = vpack.c.b16 %v1651, %v1647
    %v1968 = vpack.c.b16 %v1656, %v1652
    %v1969 = vpack.c.b16 %v1657, %v1653
    %v1970 = vpack.c.b16 %v1658, %v1654
    %v1971 = vpack.c.b16 %v1659, %v1655
    %v1972 = vpack.c.b16 %v1664, %v1660
    %v1973 = vpack.c.b16 %v1665, %v1661
    %v1974 = vpack.c.b16 %v1666, %v1662
    %v1975 = vpack.c.b16 %v1667, %v1663
    %v1976 = vpack.c.b16 %v1672, %v1668
    %v1977 = vpack.c.b16 %v1673, %v1669
    %v1978 = vpack.c.b16 %v1674, %v1670
    %v1979 = vpack.c.b16 %v1675, %v1671
    %v1980 = vpack.c.b16 %v1680, %v1676
    %v1981 = vpack.c.b16 %v1681, %v1677
    %v1982 = vpack.c.b16 %v1682, %v1678
    %v1983 = vpack.c.b16 %v1683, %v1679
    %v1984 = vpack.c.b16 %v1688, %v1684
    %v1985 = vpack.c.b16 %v1689, %v1685
    %v1986 = vpack.c.b16 %v1690, %v1686
    %v1987 = vpack.c.b16 %v1691, %v1687
    %v1988 = vpack.c.b16 %v1696, %v1692
    %v1989 = vpack.c.b16 %v1697, %v1693
    %v1990 = vpack.c.b16 %v1698, %v1694
    %v1991 = vpack.c.b16 %v1699, %v1695
    %v1992 = vpack.c.b16 %v1704, %v1700
    %v1993 = vpack.c.b16 %v1705, %v1701
    %v1994 = vpack.c.b16 %v1706, %v1702
    %v1995 = vpack.c.b16 %v1707, %v1703
    %v1996 = vpack.c.b16 %v1712, %v1708
    %v1997 = vpack.c.b16 %v1713, %v1709
    %v1998 = vpack.c.b16 %v1714, %v1710
    %v1999 = vpack.c.b16 %v1715, %v1711
    %v2000 = vpack.c.b16 %v1720, %v1716
    %v2001 = vpack.c.b16 %v1721, %v1717
    %v2002 = vpack.c.b16 %v1722, %v1718
    %v2003 = vpack.c.b16 %v1723, %v1719
    %v2004 = vpack.c.b16 %v1728, %v1724
    %v2005 = vpack.c.b16 %v1729, %v1725
    %v2006 = vpack.c.b16 %v1730, %v1726
    %v2007 = vpack.c.b16 %v1731, %v1727
    %v2008 = vpack.c.b16 %v1736, %v1732
    %v2009 = vpack.c.b16 %v1737, %v1733
    %v2010 = vpack.c.b16 %v1738, %v1734
    %v2011 = vpack.c.b16 %v1739, %v1735
    %v2012 = vpack.c.b16 %v1744, %v1740
    %v2013 = vpack.c.b16 %v1745, %v1741
    %v2014 = vpack.c.b16 %v1746, %v1742
    %v2015 = vpack.c.b16 %v1747, %v1743
    %v2016 = vpack.c.b16 %v1752, %v1748
    %v2017 = vpack.c.b16 %v1753, %v1749
    %v2018 = vpack.c.b16 %v1754, %v1750
    %v2019 = vpack.c.b16 %v1755, %v1751
    %v2020 = vpack.c.b16 %v1760, %v1756
    %v2021 = vpack.c.b16 %v1761, %v1757
    %v2022 = vpack.c.b16 %v1762, %v1758
    %v2023 = vpack.c.b16 %v1763, %v1759
    %v2024 = vpack.c.b16 %v1768, %v1764
    %v2025 = vpack.c.b16 %v1769, %v1765
    %v2026 = vpack.c.b16 %v1770, %v1766
    %v2027 = vpack.c.b16 %v1771, %v1767
    %2284 = vmatpush.bf16.msra.mxu0 %v1800
    %2285 = vmatpush.bf16.msra.mxu0 %v1796
    %2286 = vmatpush.bf16.msra.mxu0 %v1792
    %2287 = vmatpush.bf16.msra.mxu0 %v1788
    %2288 = vmatpush.bf16.msra.mxu0 %v1784
    %2289 = vmatpush.bf16.msra.mxu0 %v1780
    %2290 = vmatpush.bf16.msra.mxu0 %v1776
    %2291 = vmatpush.bf16.msra.mxu0 %v1772
    %2292 = vmatmul.bf16.gmra.mxu0 %v730
    %v2293 = vpop.f32.mrf.mxu0
    %v2294 = vadd.f32 %v996, %v2293
    %v2295 = vpop.f32.mrf.mxu0
    %v2296 = vadd.f32 %v996, %v2295
    %2297 = vdwg.mxu0
    %2298 = vmatpush.bf16.msra.mxu0 %v1832
    %2299 = vmatpush.bf16.msra.mxu0 %v1828
    %2300 = vmatpush.bf16.msra.mxu0 %v1824
    %2301 = vmatpush.bf16.msra.mxu0 %v1820
    %2302 = vmatpush.bf16.msra.mxu0 %v1816
    %2303 = vmatpush.bf16.msra.mxu0 %v1812
    %2304 = vmatpush.bf16.msra.mxu0 %v1808
    %2305 = vmatpush.bf16.msra.mxu0 %v1804
    %2306 = vmatmul.bf16.gmra.mxu0 %v731
    %v2307 = vpop.f32.mrf.mxu0
    %v2308 = vadd.f32 %v2294, %v2307
    %v2309 = vpop.f32.mrf.mxu0
    %v2310 = vadd.f32 %v2296, %v2309
    %2311 = vdwg.mxu0
    %2312 = vmatpush.bf16.msra.mxu0 %v1864
    %2313 = vmatpush.bf16.msra.mxu0 %v1860
    %2314 = vmatpush.bf16.msra.mxu0 %v1856
    %2315 = vmatpush.bf16.msra.mxu0 %v1852
    %2316 = vmatpush.bf16.msra.mxu0 %v1848
    %2317 = vmatpush.bf16.msra.mxu0 %v1844
    %2318 = vmatpush.bf16.msra.mxu0 %v1840
    %2319 = vmatpush.bf16.msra.mxu0 %v1836
    %2320 = vmatmul.bf16.gmra.mxu0 %v732
    %v2321 = vpop.f32.mrf.mxu0
    %v2322 = vadd.f32 %v2308, %v2321
    %v2323 = vpop.f32.mrf.mxu0
    %v2324 = vadd.f32 %v2310, %v2323
    %2325 = vdwg.mxu0
    %2326 = vmatpush.bf16.msra.mxu0 %v1896
    %2327 = vmatpush.bf16.msra.mxu0 %v1892
    %2328 = vmatpush.bf16.msra.mxu0 %v1888
    %2329 = vmatpush.bf16.msra.mxu0 %v1884
    %2330 = vmatpush.bf16.msra.mxu0 %v1880
    %2331 = vmatpush.bf16.msra.mxu0 %v1876
    %2332 = vmatpush.bf16.msra.mxu0 %v1872
    %2333 = vmatpush.bf16.msra.mxu0 %v1868
    %2334 = vmatmul.bf16.gmra.mxu0 %v733
    %v2335 = vpop.f32.mrf.mxu0
    %v2336 = vadd.f32 %v2322, %v2335
    %v2337 = vpop.f32.mrf.mxu0
    %v2338 = vadd.f32 %v2324, %v2337
    %2339 = vdwg.mxu0
    %2340 = vmatpush.bf16.msra.mxu0 %v1928
    %2341 = vmatpush.bf16.msra.mxu0 %v1924
    %2342 = vmatpush.bf16.msra.mxu0 %v1920
    %2343 = vmatpush.bf16.msra.mxu0 %v1916
    %2344 = vmatpush.bf16.msra.mxu0 %v1912
    %2345 = vmatpush.bf16.msra.mxu0 %v1908
    %2346 = vmatpush.bf16.msra.mxu0 %v1904
    %2347 = vmatpush.bf16.msra.mxu0 %v1900
    %2348 = vmatmul.bf16.gmra.mxu0 %v734
    %v2349 = vpop.f32.mrf.mxu0
    %v2350 = vadd.f32 %v2336, %v2349
    %v2351 = vpop.f32.mrf.mxu0
    %v2352 = vadd.f32 %v2338, %v2351
    %2353 = vdwg.mxu0
    %2354 = vmatpush.bf16.msra.mxu0 %v1960
    %2355 = vmatpush.bf16.msra.mxu0 %v1956
    %2356 = vmatpush.bf16.msra.mxu0 %v1952
    %2357 = vmatpush.bf16.msra.mxu0 %v1948
    %2358 = vmatpush.bf16.msra.mxu0 %v1944
    %2359 = vmatpush.bf16.msra.mxu0 %v1940
    %2360 = vmatpush.bf16.msra.mxu0 %v1936
    %2361 = vmatpush.bf16.msra.mxu0 %v1932
    %2362 = vmatmul.bf16.gmra.mxu0 %v735
    %v2363 = vpop.f32.mrf.mxu0
    %v2364 = vadd.f32 %v2350, %v2363
    %v2365 = vpop.f32.mrf.mxu0
    %v2366 = vadd.f32 %v2352, %v2365
    %2367 = vdwg.mxu0
    %2368 = vmatpush.bf16.msra.mxu0 %v1992
    %2369 = vmatpush.bf16.msra.mxu0 %v1988
    %2370 = vmatpush.bf16.msra.mxu0 %v1984
    %2371 = vmatpush.bf16.msra.mxu0 %v1980
    %2372 = vmatpush.bf16.msra.mxu0 %v1976
    %2373 = vmatpush.bf16.msra.mxu0 %v1972
    %2374 = vmatpush.bf16.msra.mxu0 %v1968
    %2375 = vmatpush.bf16.msra.mxu0 %v1964
    %2376 = vmatmul.bf16.gmra.mxu0 %v736
    %v2377 = vpop.f32.mrf.mxu0
    %v2378 = vadd.f32 %v2364, %v2377
    %v2379 = vpop.f32.mrf.mxu0
    %v2380 = vadd.f32 %v2366, %v2379
    %2381 = vdwg.mxu0
    %2382 = vmatpush.bf16.msra.mxu0 %v2024
    %2383 = vmatpush.bf16.msra.mxu0 %v2020
    %2384 = vmatpush.bf16.msra.mxu0 %v2016
    %2385 = vmatpush.bf16.msra.mxu0 %v2012
    %2386 = vmatpush.bf16.msra.mxu0 %v2008
    %2387 = vmatpush.bf16.msra.mxu0 %v2004
    %2388 = vmatpush.bf16.msra.mxu0 %v2000
    %2389 = vmatpush.bf16.msra.mxu0 %v1996
    %2390 = vmatmul.bf16.gmra.mxu0 %v737
    %v2391 = vpop.f32.mrf.mxu0
    %v2392 = vadd.f32 %v2378, %v2391
    %v2393 = vpop.f32.mrf.mxu0
    %v2394 = vadd.f32 %v2380, %v2393
    %2395 = vdwg.mxu0
    %2396 = vmatpush.bf16.msra.mxu0 %v1801
    %2397 = vmatpush.bf16.msra.mxu0 %v1797
    %2398 = vmatpush.bf16.msra.mxu0 %v1793
    %2399 = vmatpush.bf16.msra.mxu0 %v1789
    %2400 = vmatpush.bf16.msra.mxu0 %v1785
    %2401 = vmatpush.bf16.msra.mxu0 %v1781
    %2402 = vmatpush.bf16.msra.mxu0 %v1777
    %2403 = vmatpush.bf16.msra.mxu0 %v1773
    %2404 = vmatmul.bf16.gmra.mxu0 %v730
    %v2405 = vpop.f32.mrf.mxu0
    %v2406 = vadd.f32 %v997, %v2405
    %v2407 = vpop.f32.mrf.mxu0
    %v2408 = vadd.f32 %v997, %v2407
    %2409 = vdwg.mxu0
    %2410 = vmatpush.bf16.msra.mxu0 %v1833
    %2411 = vmatpush.bf16.msra.mxu0 %v1829
    %2412 = vmatpush.bf16.msra.mxu0 %v1825
    %2413 = vmatpush.bf16.msra.mxu0 %v1821
    %2414 = vmatpush.bf16.msra.mxu0 %v1817
    %2415 = vmatpush.bf16.msra.mxu0 %v1813
    %2416 = vmatpush.bf16.msra.mxu0 %v1809
    %2417 = vmatpush.bf16.msra.mxu0 %v1805
    %2418 = vmatmul.bf16.gmra.mxu0 %v731
    %v2419 = vpop.f32.mrf.mxu0
    %v2420 = vadd.f32 %v2406, %v2419
    %v2421 = vpop.f32.mrf.mxu0
    %v2422 = vadd.f32 %v2408, %v2421
    %2423 = vdwg.mxu0
    %2424 = vmatpush.bf16.msra.mxu0 %v1865
    %2425 = vmatpush.bf16.msra.mxu0 %v1861
    %2426 = vmatpush.bf16.msra.mxu0 %v1857
    %2427 = vmatpush.bf16.msra.mxu0 %v1853
    %2428 = vmatpush.bf16.msra.mxu0 %v1849
    %2429 = vmatpush.bf16.msra.mxu0 %v1845
    %2430 = vmatpush.bf16.msra.mxu0 %v1841
    %2431 = vmatpush.bf16.msra.mxu0 %v1837
    %2432 = vmatmul.bf16.gmra.mxu0 %v732
    %v2433 = vpop.f32.mrf.mxu0
    %v2434 = vadd.f32 %v2420, %v2433
    %v2435 = vpop.f32.mrf.mxu0
    %v2436 = vadd.f32 %v2422, %v2435
    %2437 = vdwg.mxu0
    %2438 = vmatpush.bf16.msra.mxu0 %v1897
    %2439 = vmatpush.bf16.msra.mxu0 %v1893
    %2440 = vmatpush.bf16.msra.mxu0 %v1889
    %2441 = vmatpush.bf16.msra.mxu0 %v1885
    %2442 = vmatpush.bf16.msra.mxu0 %v1881
    %2443 = vmatpush.bf16.msra.mxu0 %v1877
    %2444 = vmatpush.bf16.msra.mxu0 %v1873
    %2445 = vmatpush.bf16.msra.mxu0 %v1869
    %2446 = vmatmul.bf16.gmra.mxu0 %v733
    %v2447 = vpop.f32.mrf.mxu0
    %v2448 = vadd.f32 %v2434, %v2447
    %v2449 = vpop.f32.mrf.mxu0
    %v2450 = vadd.f32 %v2436, %v2449
    %2451 = vdwg.mxu0
    %2452 = vmatpush.bf16.msra.mxu0 %v1929
    %2453 = vmatpush.bf16.msra.mxu0 %v1925
    %2454 = vmatpush.bf16.msra.mxu0 %v1921
    %2455 = vmatpush.bf16.msra.mxu0 %v1917
    %2456 = vmatpush.bf16.msra.mxu0 %v1913
    %2457 = vmatpush.bf16.msra.mxu0 %v1909
    %2458 = vmatpush.bf16.msra.mxu0 %v1905
    %2459 = vmatpush.bf16.msra.mxu0 %v1901
    %2460 = vmatmul.bf16.gmra.mxu0 %v734
    %v2461 = vpop.f32.mrf.mxu0
    %v2462 = vadd.f32 %v2448, %v2461
    %v2463 = vpop.f32.mrf.mxu0
    %v2464 = vadd.f32 %v2450, %v2463
    %2465 = vdwg.mxu0
    %2466 = vmatpush.bf16.msra.mxu0 %v1961
    %2467 = vmatpush.bf16.msra.mxu0 %v1957
    %2468 = vmatpush.bf16.msra.mxu0 %v1953
    %2469 = vmatpush.bf16.msra.mxu0 %v1949
    %2470 = vmatpush.bf16.msra.mxu0 %v1945
    %2471 = vmatpush.bf16.msra.mxu0 %v1941
    %2472 = vmatpush.bf16.msra.mxu0 %v1937
    %2473 = vmatpush.bf16.msra.mxu0 %v1933
    %2474 = vmatmul.bf16.gmra.mxu0 %v735
    %v2475 = vpop.f32.mrf.mxu0
    %v2476 = vadd.f32 %v2462, %v2475
    %v2477 = vpop.f32.mrf.mxu0
    %v2478 = vadd.f32 %v2464, %v2477
    %2479 = vdwg.mxu0
    %2480 = vmatpush.bf16.msra.mxu0 %v1993
    %2481 = vmatpush.bf16.msra.mxu0 %v1989
    %2482 = vmatpush.bf16.msra.mxu0 %v1985
    %2483 = vmatpush.bf16.msra.mxu0 %v1981
    %2484 = vmatpush.bf16.msra.mxu0 %v1977
    %2485 = vmatpush.bf16.msra.mxu0 %v1973
    %2486 = vmatpush.bf16.msra.mxu0 %v1969
    %2487 = vmatpush.bf16.msra.mxu0 %v1965
    %2488 = vmatmul.bf16.gmra.mxu0 %v736
    %v2489 = vpop.f32.mrf.mxu0
    %v2490 = vadd.f32 %v2476, %v2489
    %v2491 = vpop.f32.mrf.mxu0
    %v2492 = vadd.f32 %v2478, %v2491
    %2493 = vdwg.mxu0
    %2494 = vmatpush.bf16.msra.mxu0 %v2025
    %2495 = vmatpush.bf16.msra.mxu0 %v2021
    %2496 = vmatpush.bf16.msra.mxu0 %v2017
    %2497 = vmatpush.bf16.msra.mxu0 %v2013
    %2498 = vmatpush.bf16.msra.mxu0 %v2009
    %2499 = vmatpush.bf16.msra.mxu0 %v2005
    %2500 = vmatpush.bf16.msra.mxu0 %v2001
    %2501 = vmatpush.bf16.msra.mxu0 %v1997
    %2502 = vmatmul.bf16.gmra.mxu0 %v737
    %v2503 = vpop.f32.mrf.mxu0
    %v2504 = vadd.f32 %v2490, %v2503
    %v2505 = vpop.f32.mrf.mxu0
    %v2506 = vadd.f32 %v2492, %v2505
    %2507 = vdwg.mxu0
    %2508 = vmatpush.bf16.msra.mxu0 %v1802
    %2509 = vmatpush.bf16.msra.mxu0 %v1798
    %2510 = vmatpush.bf16.msra.mxu0 %v1794
    %2511 = vmatpush.bf16.msra.mxu0 %v1790
    %2512 = vmatpush.bf16.msra.mxu0 %v1786
    %2513 = vmatpush.bf16.msra.mxu0 %v1782
    %2514 = vmatpush.bf16.msra.mxu0 %v1778
    %2515 = vmatpush.bf16.msra.mxu0 %v1774
    %2516 = vmatmul.bf16.gmra.mxu0 %v730
    %v2517 = vpop.f32.mrf.mxu0
    %v2518 = vadd.f32 %v998, %v2517
    %v2519 = vpop.f32.mrf.mxu0
    %v2520 = vadd.f32 %v998, %v2519
    %2521 = vdwg.mxu0
    %2522 = vmatpush.bf16.msra.mxu0 %v1834
    %2523 = vmatpush.bf16.msra.mxu0 %v1830
    %2524 = vmatpush.bf16.msra.mxu0 %v1826
    %2525 = vmatpush.bf16.msra.mxu0 %v1822
    %2526 = vmatpush.bf16.msra.mxu0 %v1818
    %2527 = vmatpush.bf16.msra.mxu0 %v1814
    %2528 = vmatpush.bf16.msra.mxu0 %v1810
    %2529 = vmatpush.bf16.msra.mxu0 %v1806
    %2530 = vmatmul.bf16.gmra.mxu0 %v731
    %v2531 = vpop.f32.mrf.mxu0
    %v2532 = vadd.f32 %v2518, %v2531
    %v2533 = vpop.f32.mrf.mxu0
    %v2534 = vadd.f32 %v2520, %v2533
    %2535 = vdwg.mxu0
    %2536 = vmatpush.bf16.msra.mxu0 %v1866
    %2537 = vmatpush.bf16.msra.mxu0 %v1862
    %2538 = vmatpush.bf16.msra.mxu0 %v1858
    %2539 = vmatpush.bf16.msra.mxu0 %v1854
    %2540 = vmatpush.bf16.msra.mxu0 %v1850
    %2541 = vmatpush.bf16.msra.mxu0 %v1846
    %2542 = vmatpush.bf16.msra.mxu0 %v1842
    %2543 = vmatpush.bf16.msra.mxu0 %v1838
    %2544 = vmatmul.bf16.gmra.mxu0 %v732
    %v2545 = vpop.f32.mrf.mxu0
    %v2546 = vadd.f32 %v2532, %v2545
    %v2547 = vpop.f32.mrf.mxu0
    %v2548 = vadd.f32 %v2534, %v2547
    %2549 = vdwg.mxu0
    %2550 = vmatpush.bf16.msra.mxu0 %v1898
    %2551 = vmatpush.bf16.msra.mxu0 %v1894
    %2552 = vmatpush.bf16.msra.mxu0 %v1890
    %2553 = vmatpush.bf16.msra.mxu0 %v1886
    %2554 = vmatpush.bf16.msra.mxu0 %v1882
    %2555 = vmatpush.bf16.msra.mxu0 %v1878
    %2556 = vmatpush.bf16.msra.mxu0 %v1874
    %2557 = vmatpush.bf16.msra.mxu0 %v1870
    %2558 = vmatmul.bf16.gmra.mxu0 %v733
    %v2559 = vpop.f32.mrf.mxu0
    %v2560 = vadd.f32 %v2546, %v2559
    %v2561 = vpop.f32.mrf.mxu0
    %v2562 = vadd.f32 %v2548, %v2561
    %2563 = vdwg.mxu0
    %2564 = vmatpush.bf16.msra.mxu0 %v1930
    %2565 = vmatpush.bf16.msra.mxu0 %v1926
    %2566 = vmatpush.bf16.msra.mxu0 %v1922
    %2567 = vmatpush.bf16.msra.mxu0 %v1918
    %2568 = vmatpush.bf16.msra.mxu0 %v1914
    %2569 = vmatpush.bf16.msra.mxu0 %v1910
    %2570 = vmatpush.bf16.msra.mxu0 %v1906
    %2571 = vmatpush.bf16.msra.mxu0 %v1902
    %2572 = vmatmul.bf16.gmra.mxu0 %v734
    %v2573 = vpop.f32.mrf.mxu0
    %v2574 = vadd.f32 %v2560, %v2573
    %v2575 = vpop.f32.mrf.mxu0
    %v2576 = vadd.f32 %v2562, %v2575
    %2577 = vdwg.mxu0
    %2578 = vmatpush.bf16.msra.mxu0 %v1962
    %2579 = vmatpush.bf16.msra.mxu0 %v1958
    %2580 = vmatpush.bf16.msra.mxu0 %v1954
    %2581 = vmatpush.bf16.msra.mxu0 %v1950
    %2582 = vmatpush.bf16.msra.mxu0 %v1946
    %2583 = vmatpush.bf16.msra.mxu0 %v1942
    %2584 = vmatpush.bf16.msra.mxu0 %v1938
    %2585 = vmatpush.bf16.msra.mxu0 %v1934
    %2586 = vmatmul.bf16.gmra.mxu0 %v735
    %v2587 = vpop.f32.mrf.mxu0
    %v2588 = vadd.f32 %v2574, %v2587
    %v2589 = vpop.f32.mrf.mxu0
    %v2590 = vadd.f32 %v2576, %v2589
    %2591 = vdwg.mxu0
    %2592 = vmatpush.bf16.msra.mxu0 %v1994
    %2593 = vmatpush.bf16.msra.mxu0 %v1990
    %2594 = vmatpush.bf16.msra.mxu0 %v1986
    %2595 = vmatpush.bf16.msra.mxu0 %v1982
    %2596 = vmatpush.bf16.msra.mxu0 %v1978
    %2597 = vmatpush.bf16.msra.mxu0 %v1974
    %2598 = vmatpush.bf16.msra.mxu0 %v1970
    %2599 = vmatpush.bf16.msra.mxu0 %v1966
    %2600 = vmatmul.bf16.gmra.mxu0 %v736
    %v2601 = vpop.f32.mrf.mxu0
    %v2602 = vadd.f32 %v2588, %v2601
    %v2603 = vpop.f32.mrf.mxu0
    %v2604 = vadd.f32 %v2590, %v2603
    %2605 = vdwg.mxu0
    %2606 = vmatpush.bf16.msra.mxu0 %v2026
    %2607 = vmatpush.bf16.msra.mxu0 %v2022
    %2608 = vmatpush.bf16.msra.mxu0 %v2018
    %2609 = vmatpush.bf16.msra.mxu0 %v2014
    %2610 = vmatpush.bf16.msra.mxu0 %v2010
    %2611 = vmatpush.bf16.msra.mxu0 %v2006
    %2612 = vmatpush.bf16.msra.mxu0 %v2002
    %2613 = vmatpush.bf16.msra.mxu0 %v1998
    %2614 = vmatmul.bf16.gmra.mxu0 %v737
    %v2615 = vpop.f32.mrf.mxu0
    %v2616 = vadd.f32 %v2602, %v2615
    %v2617 = vpop.f32.mrf.mxu0
    %v2618 = vadd.f32 %v2604, %v2617
    %2619 = vdwg.mxu0
    %2620 = vmatpush.bf16.msra.mxu0 %v1803
    %2621 = vmatpush.bf16.msra.mxu0 %v1799
    %2622 = vmatpush.bf16.msra.mxu0 %v1795
    %2623 = vmatpush.bf16.msra.mxu0 %v1791
    %2624 = vmatpush.bf16.msra.mxu0 %v1787
    %2625 = vmatpush.bf16.msra.mxu0 %v1783
    %2626 = vmatpush.bf16.msra.mxu0 %v1779
    %2627 = vmatpush.bf16.msra.mxu0 %v1775
    %2628 = vmatmul.bf16.gmra.mxu0 %v730
    %v2629 = vpop.f32.mrf.mxu0
    %v2630 = vadd.f32 %v999, %v2629
    %v2631 = vpop.f32.mrf.mxu0
    %v2632 = vadd.f32 %v999, %v2631
    %2633 = vdwg.mxu0
    %2634 = vmatpush.bf16.msra.mxu0 %v1835
    %2635 = vmatpush.bf16.msra.mxu0 %v1831
    %2636 = vmatpush.bf16.msra.mxu0 %v1827
    %2637 = vmatpush.bf16.msra.mxu0 %v1823
    %2638 = vmatpush.bf16.msra.mxu0 %v1819
    %2639 = vmatpush.bf16.msra.mxu0 %v1815
    %2640 = vmatpush.bf16.msra.mxu0 %v1811
    %2641 = vmatpush.bf16.msra.mxu0 %v1807
    %2642 = vmatmul.bf16.gmra.mxu0 %v731
    %v2643 = vpop.f32.mrf.mxu0
    %v2644 = vadd.f32 %v2630, %v2643
    %v2645 = vpop.f32.mrf.mxu0
    %v2646 = vadd.f32 %v2632, %v2645
    %2647 = vdwg.mxu0
    %2648 = vmatpush.bf16.msra.mxu0 %v1867
    %2649 = vmatpush.bf16.msra.mxu0 %v1863
    %2650 = vmatpush.bf16.msra.mxu0 %v1859
    %2651 = vmatpush.bf16.msra.mxu0 %v1855
    %2652 = vmatpush.bf16.msra.mxu0 %v1851
    %2653 = vmatpush.bf16.msra.mxu0 %v1847
    %2654 = vmatpush.bf16.msra.mxu0 %v1843
    %2655 = vmatpush.bf16.msra.mxu0 %v1839
    %2656 = vmatmul.bf16.gmra.mxu0 %v732
    %v2657 = vpop.f32.mrf.mxu0
    %v2658 = vadd.f32 %v2644, %v2657
    %v2659 = vpop.f32.mrf.mxu0
    %v2660 = vadd.f32 %v2646, %v2659
    %2661 = vdwg.mxu0
    %2662 = vmatpush.bf16.msra.mxu0 %v1899
    %2663 = vmatpush.bf16.msra.mxu0 %v1895
    %2664 = vmatpush.bf16.msra.mxu0 %v1891
    %2665 = vmatpush.bf16.msra.mxu0 %v1887
    %2666 = vmatpush.bf16.msra.mxu0 %v1883
    %2667 = vmatpush.bf16.msra.mxu0 %v1879
    %2668 = vmatpush.bf16.msra.mxu0 %v1875
    %2669 = vmatpush.bf16.msra.mxu0 %v1871
    %2670 = vmatmul.bf16.gmra.mxu0 %v733
    %v2671 = vpop.f32.mrf.mxu0
    %v2672 = vadd.f32 %v2658, %v2671
    %v2673 = vpop.f32.mrf.mxu0
    %v2674 = vadd.f32 %v2660, %v2673
    %2675 = vdwg.mxu0
    %2676 = vmatpush.bf16.msra.mxu0 %v1931
    %2677 = vmatpush.bf16.msra.mxu0 %v1927
    %2678 = vmatpush.bf16.msra.mxu0 %v1923
    %2679 = vmatpush.bf16.msra.mxu0 %v1919
    %2680 = vmatpush.bf16.msra.mxu0 %v1915
    %2681 = vmatpush.bf16.msra.mxu0 %v1911
    %2682 = vmatpush.bf16.msra.mxu0 %v1907
    %2683 = vmatpush.bf16.msra.mxu0 %v1903
    %2684 = vmatmul.bf16.gmra.mxu0 %v734
    %v2685 = vpop.f32.mrf.mxu0
    %v2686 = vadd.f32 %v2672, %v2685
    %v2687 = vpop.f32.mrf.mxu0
    %v2688 = vadd.f32 %v2674, %v2687
    %2689 = vdwg.mxu0
    %2690 = vmatpush.bf16.msra.mxu0 %v1963
    %2691 = vmatpush.bf16.msra.mxu0 %v1959
    %2692 = vmatpush.bf16.msra.mxu0 %v1955
    %2693 = vmatpush.bf16.msra.mxu0 %v1951
    %2694 = vmatpush.bf16.msra.mxu0 %v1947
    %2695 = vmatpush.bf16.msra.mxu0 %v1943
    %2696 = vmatpush.bf16.msra.mxu0 %v1939
    %2697 = vmatpush.bf16.msra.mxu0 %v1935
    %2698 = vmatmul.bf16.gmra.mxu0 %v735
    %v2699 = vpop.f32.mrf.mxu0
    %v2700 = vadd.f32 %v2686, %v2699
    %v2701 = vpop.f32.mrf.mxu0
    %v2702 = vadd.f32 %v2688, %v2701
    %2703 = vdwg.mxu0
    %2704 = vmatpush.bf16.msra.mxu0 %v1995
    %2705 = vmatpush.bf16.msra.mxu0 %v1991
    %2706 = vmatpush.bf16.msra.mxu0 %v1987
    %2707 = vmatpush.bf16.msra.mxu0 %v1983
    %2708 = vmatpush.bf16.msra.mxu0 %v1979
    %2709 = vmatpush.bf16.msra.mxu0 %v1975
    %2710 = vmatpush.bf16.msra.mxu0 %v1971
    %2711 = vmatpush.bf16.msra.mxu0 %v1967
    %2712 = vmatmul.bf16.gmra.mxu0 %v736
    %v2713 = vpop.f32.mrf.mxu0
    %v2714 = vadd.f32 %v2700, %v2713
    %v2715 = vpop.f32.mrf.mxu0
    %v2716 = vadd.f32 %v2702, %v2715
    %2717 = vdwg.mxu0
    %2718 = vmatpush.bf16.msra.mxu0 %v2027
    %2719 = vmatpush.bf16.msra.mxu0 %v2023
    %2720 = vmatpush.bf16.msra.mxu0 %v2019
    %2721 = vmatpush.bf16.msra.mxu0 %v2015
    %2722 = vmatpush.bf16.msra.mxu0 %v2011
    %2723 = vmatpush.bf16.msra.mxu0 %v2007
    %2724 = vmatpush.bf16.msra.mxu0 %v2003
    %2725 = vmatpush.bf16.msra.mxu0 %v1999
    %2726 = vmatmul.bf16.gmra.mxu0 %v737
    %v2727 = vpop.f32.mrf.mxu0
    %v2728 = vadd.f32 %v2714, %v2727
    %v2729 = vpop.f32.mrf.mxu0
    %v2730 = vadd.f32 %v2716, %v2729
    %2731 = vdwg.mxu0
    %v2732 = vmax.f32 %v2392, 0.0
    %v2733 = vmax.f32 %v2504, 0.0
    %v2734 = vmax.f32 %v2616, 0.0
    %v2735 = vmax.f32 %v2728, 0.0
    %v2736 = vmax.f32 %v2394, 0.0
    %v2737 = vmax.f32 %v2506, 0.0
    %v2738 = vmax.f32 %v2618, 0.0
    %v2739 = vmax.f32 %v2730, 0.0
    %v2740 = vpack.c.bf16 %v2736, %v2732
    %v2741 = vpack.c.bf16 %v2737, %v2733
    %v2742 = vpack.c.bf16 %v2738, %v2734
    %v2743 = vpack.c.bf16 %v2739, %v2735
    %v2744 = vld [vmem:[#allocation4] sm:$0xff]
    %v2745 = vld [vmem:[#allocation4 + $0x8] sm:$0xff]
    %v2746 = vld [vmem:[#allocation4 + $0x10] sm:$0xff]
    %v2747 = vld [vmem:[#allocation4 + $0x18] sm:$0xff]
    %v2748 = vld [vmem:[#allocation4 + $0x20] sm:$0xff]
    %v2749 = vld [vmem:[#allocation4 + $0x28] sm:$0xff]
    %v2750 = vld [vmem:[#allocation4 + $0x30] sm:$0xff]
    %v2751 = vld [vmem:[#allocation4 + $0x38] sm:$0xff]
    %v2752 = vld [vmem:[#allocation4 + $0x40] sm:$0xff]
    %v2753 = vld [vmem:[#allocation4 + $0x48] sm:$0xff]
    %v2754 = vld [vmem:[#allocation4 + $0x50] sm:$0xff]
    %v2755 = vld [vmem:[#allocation4 + $0x58] sm:$0xff]
    %v2756 = vld [vmem:[#allocation4 + $0x60] sm:$0xff]
    %v2757 = vld [vmem:[#allocation4 + $0x68] sm:$0xff]
    %v2758 = vld [vmem:[#allocation4 + $0x70] sm:$0xff]
    %v2759 = vld [vmem:[#allocation4 + $0x78] sm:$0xff]
    %v2760 = vld [vmem:[#allocation4 + $0x80] sm:$0xff]
    %v2761 = vld [vmem:[#allocation4 + $0x88] sm:$0xff]
    %v2762 = vld [vmem:[#allocation4 + $0x90] sm:$0xff]
    %v2763 = vld [vmem:[#allocation4 + $0x98] sm:$0xff]
    %v2764 = vld [vmem:[#allocation4 + $0xa0] sm:$0xff]
    %v2765 = vld [vmem:[#allocation4 + $0xa8] sm:$0xff]
    %v2766 = vld [vmem:[#allocation4 + $0xb0] sm:$0xff]
    %v2767 = vld [vmem:[#allocation4 + $0xb8] sm:$0xff]
    %v2768 = vld [vmem:[#allocation4 + $0xc0] sm:$0xff]
    %v2769 = vld [vmem:[#allocation4 + $0xc8] sm:$0xff]
    %v2770 = vld [vmem:[#allocation4 + $0xd0] sm:$0xff]
    %v2771 = vld [vmem:[#allocation4 + $0xd8] sm:$0xff]
    %v2772 = vld [vmem:[#allocation4 + $0xe0] sm:$0xff]
    %v2773 = vld [vmem:[#allocation4 + $0xe8] sm:$0xff]
    %v2774 = vld [vmem:[#allocation4 + $0xf0] sm:$0xff]
    %v2775 = vld [vmem:[#allocation4 + $0xf8] sm:$0xff]
    %v2776 = vld [vmem:[#allocation4 + $0x100] sm:$0xff]
    %v2777 = vld [vmem:[#allocation4 + $0x108] sm:$0xff]
    %v2778 = vld [vmem:[#allocation4 + $0x110] sm:$0xff]
    %v2779 = vld [vmem:[#allocation4 + $0x118] sm:$0xff]
    %v2780 = vld [vmem:[#allocation4 + $0x120] sm:$0xff]
    %v2781 = vld [vmem:[#allocation4 + $0x128] sm:$0xff]
    %v2782 = vld [vmem:[#allocation4 + $0x130] sm:$0xff]
    %v2783 = vld [vmem:[#allocation4 + $0x138] sm:$0xff]
    %v2784 = vld [vmem:[#allocation4 + $0x140] sm:$0xff]
    %v2785 = vld [vmem:[#allocation4 + $0x148] sm:$0xff]
    %v2786 = vld [vmem:[#allocation4 + $0x150] sm:$0xff]
    %v2787 = vld [vmem:[#allocation4 + $0x158] sm:$0xff]
    %v2788 = vld [vmem:[#allocation4 + $0x160] sm:$0xff]
    %v2789 = vld [vmem:[#allocation4 + $0x168] sm:$0xff]
    %v2790 = vld [vmem:[#allocation4 + $0x170] sm:$0xff]
    %v2791 = vld [vmem:[#allocation4 + $0x178] sm:$0xff]
    %v2792 = vld [vmem:[#allocation4 + $0x180] sm:$0xff]
    %v2793 = vld [vmem:[#allocation4 + $0x188] sm:$0xff]
    %v2794 = vld [vmem:[#allocation4 + $0x190] sm:$0xff]
    %v2795 = vld [vmem:[#allocation4 + $0x198] sm:$0xff]
    %v2796 = vld [vmem:[#allocation4 + $0x1a0] sm:$0xff]
    %v2797 = vld [vmem:[#allocation4 + $0x1a8] sm:$0xff]
    %v2798 = vld [vmem:[#allocation4 + $0x1b0] sm:$0xff]
    %v2799 = vld [vmem:[#allocation4 + $0x1b8] sm:$0xff]
    %v2800 = vld [vmem:[#allocation4 + $0x1c0] sm:$0xff]
    %v2801 = vld [vmem:[#allocation4 + $0x1c8] sm:$0xff]
    %v2802 = vld [vmem:[#allocation4 + $0x1d0] sm:$0xff]
    %v2803 = vld [vmem:[#allocation4 + $0x1d8] sm:$0xff]
    %v2804 = vld [vmem:[#allocation4 + $0x1e0] sm:$0xff]
    %v2805 = vld [vmem:[#allocation4 + $0x1e8] sm:$0xff]
    %v2806 = vld [vmem:[#allocation4 + $0x1f0] sm:$0xff]
    %v2807 = vld [vmem:[#allocation4 + $0x1f8] sm:$0xff]
    %v2808 = vld [vmem:[#allocation4 + $0x200] sm:$0xff]
    %v2809 = vld [vmem:[#allocation4 + $0x208] sm:$0xff]
    %v2810 = vld [vmem:[#allocation4 + $0x210] sm:$0xff]
    %v2811 = vld [vmem:[#allocation4 + $0x218] sm:$0xff]
    %v2812 = vld [vmem:[#allocation4 + $0x220] sm:$0xff]
    %v2813 = vld [vmem:[#allocation4 + $0x228] sm:$0xff]
    %v2814 = vld [vmem:[#allocation4 + $0x230] sm:$0xff]
    %v2815 = vld [vmem:[#allocation4 + $0x238] sm:$0xff]
    %v2816 = vld [vmem:[#allocation4 + $0x240] sm:$0xff]
    %v2817 = vld [vmem:[#allocation4 + $0x248] sm:$0xff]
    %v2818 = vld [vmem:[#allocation4 + $0x250] sm:$0xff]
    %v2819 = vld [vmem:[#allocation4 + $0x258] sm:$0xff]
    %v2820 = vld [vmem:[#allocation4 + $0x260] sm:$0xff]
    %v2821 = vld [vmem:[#allocation4 + $0x268] sm:$0xff]
    %v2822 = vld [vmem:[#allocation4 + $0x270] sm:$0xff]
    %v2823 = vld [vmem:[#allocation4 + $0x278] sm:$0xff]
    %v2824 = vld [vmem:[#allocation4 + $0x280] sm:$0xff]
    %v2825 = vld [vmem:[#allocation4 + $0x288] sm:$0xff]
    %v2826 = vld [vmem:[#allocation4 + $0x290] sm:$0xff]
    %v2827 = vld [vmem:[#allocation4 + $0x298] sm:$0xff]
    %v2828 = vld [vmem:[#allocation4 + $0x2a0] sm:$0xff]
    %v2829 = vld [vmem:[#allocation4 + $0x2a8] sm:$0xff]
    %v2830 = vld [vmem:[#allocation4 + $0x2b0] sm:$0xff]
    %v2831 = vld [vmem:[#allocation4 + $0x2b8] sm:$0xff]
    %v2832 = vld [vmem:[#allocation4 + $0x2c0] sm:$0xff]
    %v2833 = vld [vmem:[#allocation4 + $0x2c8] sm:$0xff]
    %v2834 = vld [vmem:[#allocation4 + $0x2d0] sm:$0xff]
    %v2835 = vld [vmem:[#allocation4 + $0x2d8] sm:$0xff]
    %v2836 = vld [vmem:[#allocation4 + $0x2e0] sm:$0xff]
    %v2837 = vld [vmem:[#allocation4 + $0x2e8] sm:$0xff]
    %v2838 = vld [vmem:[#allocation4 + $0x2f0] sm:$0xff]
    %v2839 = vld [vmem:[#allocation4 + $0x2f8] sm:$0xff]
    %v2840 = vld [vmem:[#allocation4 + $0x300] sm:$0xff]
    %v2841 = vld [vmem:[#allocation4 + $0x308] sm:$0xff]
    %v2842 = vld [vmem:[#allocation4 + $0x310] sm:$0xff]
    %v2843 = vld [vmem:[#allocation4 + $0x318] sm:$0xff]
    %v2844 = vld [vmem:[#allocation4 + $0x320] sm:$0xff]
    %v2845 = vld [vmem:[#allocation4 + $0x328] sm:$0xff]
    %v2846 = vld [vmem:[#allocation4 + $0x330] sm:$0xff]
    %v2847 = vld [vmem:[#allocation4 + $0x338] sm:$0xff]
    %v2848 = vld [vmem:[#allocation4 + $0x340] sm:$0xff]
    %v2849 = vld [vmem:[#allocation4 + $0x348] sm:$0xff]
    %v2850 = vld [vmem:[#allocation4 + $0x350] sm:$0xff]
    %v2851 = vld [vmem:[#allocation4 + $0x358] sm:$0xff]
    %v2852 = vld [vmem:[#allocation4 + $0x360] sm:$0xff]
    %v2853 = vld [vmem:[#allocation4 + $0x368] sm:$0xff]
    %v2854 = vld [vmem:[#allocation4 + $0x370] sm:$0xff]
    %v2855 = vld [vmem:[#allocation4 + $0x378] sm:$0xff]
    %v2856 = vld [vmem:[#allocation4 + $0x380] sm:$0xff]
    %v2857 = vld [vmem:[#allocation4 + $0x388] sm:$0xff]
    %v2858 = vld [vmem:[#allocation4 + $0x390] sm:$0xff]
    %v2859 = vld [vmem:[#allocation4 + $0x398] sm:$0xff]
    %v2860 = vld [vmem:[#allocation4 + $0x3a0] sm:$0xff]
    %v2861 = vld [vmem:[#allocation4 + $0x3a8] sm:$0xff]
    %v2862 = vld [vmem:[#allocation4 + $0x3b0] sm:$0xff]
    %v2863 = vld [vmem:[#allocation4 + $0x3b8] sm:$0xff]
    %v2864 = vld [vmem:[#allocation4 + $0x3c0] sm:$0xff]
    %v2865 = vld [vmem:[#allocation4 + $0x3c8] sm:$0xff]
    %v2866 = vld [vmem:[#allocation4 + $0x3d0] sm:$0xff]
    %v2867 = vld [vmem:[#allocation4 + $0x3d8] sm:$0xff]
    %v2868 = vld [vmem:[#allocation4 + $0x3e0] sm:$0xff]
    %v2869 = vld [vmem:[#allocation4 + $0x3e8] sm:$0xff]
    %v2870 = vld [vmem:[#allocation4 + $0x3f0] sm:$0xff]
    %v2871 = vld [vmem:[#allocation4 + $0x3f8] sm:$0xff]
    %v2872 = vld [vmem:[#allocation4 + $0x400] sm:$0xff]
    %v2873 = vld [vmem:[#allocation4 + $0x408] sm:$0xff]
    %v2874 = vld [vmem:[#allocation4 + $0x410] sm:$0xff]
    %v2875 = vld [vmem:[#allocation4 + $0x418] sm:$0xff]
    %v2876 = vld [vmem:[#allocation4 + $0x420] sm:$0xff]
    %v2877 = vld [vmem:[#allocation4 + $0x428] sm:$0xff]
    %v2878 = vld [vmem:[#allocation4 + $0x430] sm:$0xff]
    %v2879 = vld [vmem:[#allocation4 + $0x438] sm:$0xff]
    %v2880 = vld [vmem:[#allocation4 + $0x440] sm:$0xff]
    %v2881 = vld [vmem:[#allocation4 + $0x448] sm:$0xff]
    %v2882 = vld [vmem:[#allocation4 + $0x450] sm:$0xff]
    %v2883 = vld [vmem:[#allocation4 + $0x458] sm:$0xff]
    %v2884 = vld [vmem:[#allocation4 + $0x460] sm:$0xff]
    %v2885 = vld [vmem:[#allocation4 + $0x468] sm:$0xff]
    %v2886 = vld [vmem:[#allocation4 + $0x470] sm:$0xff]
    %v2887 = vld [vmem:[#allocation4 + $0x478] sm:$0xff]
    %v2888 = vld [vmem:[#allocation4 + $0x480] sm:$0xff]
    %v2889 = vld [vmem:[#allocation4 + $0x488] sm:$0xff]
    %v2890 = vld [vmem:[#allocation4 + $0x490] sm:$0xff]
    %v2891 = vld [vmem:[#allocation4 + $0x498] sm:$0xff]
    %v2892 = vld [vmem:[#allocation4 + $0x4a0] sm:$0xff]
    %v2893 = vld [vmem:[#allocation4 + $0x4a8] sm:$0xff]
    %v2894 = vld [vmem:[#allocation4 + $0x4b0] sm:$0xff]
    %v2895 = vld [vmem:[#allocation4 + $0x4b8] sm:$0xff]
    %v2896 = vld [vmem:[#allocation4 + $0x4c0] sm:$0xff]
    %v2897 = vld [vmem:[#allocation4 + $0x4c8] sm:$0xff]
    %v2898 = vld [vmem:[#allocation4 + $0x4d0] sm:$0xff]
    %v2899 = vld [vmem:[#allocation4 + $0x4d8] sm:$0xff]
    %v2900 = vld [vmem:[#allocation4 + $0x4e0] sm:$0xff]
    %v2901 = vld [vmem:[#allocation4 + $0x4e8] sm:$0xff]
    %v2902 = vld [vmem:[#allocation4 + $0x4f0] sm:$0xff]
    %v2903 = vld [vmem:[#allocation4 + $0x4f8] sm:$0xff]
    %v2904 = vld [vmem:[#allocation4 + $0x500] sm:$0xff]
    %v2905 = vld [vmem:[#allocation4 + $0x508] sm:$0xff]
    %v2906 = vld [vmem:[#allocation4 + $0x510] sm:$0xff]
    %v2907 = vld [vmem:[#allocation4 + $0x518] sm:$0xff]
    %v2908 = vld [vmem:[#allocation4 + $0x520] sm:$0xff]
    %v2909 = vld [vmem:[#allocation4 + $0x528] sm:$0xff]
    %v2910 = vld [vmem:[#allocation4 + $0x530] sm:$0xff]
    %v2911 = vld [vmem:[#allocation4 + $0x538] sm:$0xff]
    %v2912 = vld [vmem:[#allocation4 + $0x540] sm:$0xff]
    %v2913 = vld [vmem:[#allocation4 + $0x548] sm:$0xff]
    %v2914 = vld [vmem:[#allocation4 + $0x550] sm:$0xff]
    %v2915 = vld [vmem:[#allocation4 + $0x558] sm:$0xff]
    %v2916 = vld [vmem:[#allocation4 + $0x560] sm:$0xff]
    %v2917 = vld [vmem:[#allocation4 + $0x568] sm:$0xff]
    %v2918 = vld [vmem:[#allocation4 + $0x570] sm:$0xff]
    %v2919 = vld [vmem:[#allocation4 + $0x578] sm:$0xff]
    %v2920 = vld [vmem:[#allocation4 + $0x580] sm:$0xff]
    %v2921 = vld [vmem:[#allocation4 + $0x588] sm:$0xff]
    %v2922 = vld [vmem:[#allocation4 + $0x590] sm:$0xff]
    %v2923 = vld [vmem:[#allocation4 + $0x598] sm:$0xff]
    %v2924 = vld [vmem:[#allocation4 + $0x5a0] sm:$0xff]
    %v2925 = vld [vmem:[#allocation4 + $0x5a8] sm:$0xff]
    %v2926 = vld [vmem:[#allocation4 + $0x5b0] sm:$0xff]
    %v2927 = vld [vmem:[#allocation4 + $0x5b8] sm:$0xff]
    %v2928 = vld [vmem:[#allocation4 + $0x5c0] sm:$0xff]
    %v2929 = vld [vmem:[#allocation4 + $0x5c8] sm:$0xff]
    %v2930 = vld [vmem:[#allocation4 + $0x5d0] sm:$0xff]
    %v2931 = vld [vmem:[#allocation4 + $0x5d8] sm:$0xff]
    %v2932 = vld [vmem:[#allocation4 + $0x5e0] sm:$0xff]
    %v2933 = vld [vmem:[#allocation4 + $0x5e8] sm:$0xff]
    %v2934 = vld [vmem:[#allocation4 + $0x5f0] sm:$0xff]
    %v2935 = vld [vmem:[#allocation4 + $0x5f8] sm:$0xff]
    %v2936 = vld [vmem:[#allocation4 + $0x600] sm:$0xff]
    %v2937 = vld [vmem:[#allocation4 + $0x608] sm:$0xff]
    %v2938 = vld [vmem:[#allocation4 + $0x610] sm:$0xff]
    %v2939 = vld [vmem:[#allocation4 + $0x618] sm:$0xff]
    %v2940 = vld [vmem:[#allocation4 + $0x620] sm:$0xff]
    %v2941 = vld [vmem:[#allocation4 + $0x628] sm:$0xff]
    %v2942 = vld [vmem:[#allocation4 + $0x630] sm:$0xff]
    %v2943 = vld [vmem:[#allocation4 + $0x638] sm:$0xff]
    %v2944 = vld [vmem:[#allocation4 + $0x640] sm:$0xff]
    %v2945 = vld [vmem:[#allocation4 + $0x648] sm:$0xff]
    %v2946 = vld [vmem:[#allocation4 + $0x650] sm:$0xff]
    %v2947 = vld [vmem:[#allocation4 + $0x658] sm:$0xff]
    %v2948 = vld [vmem:[#allocation4 + $0x660] sm:$0xff]
    %v2949 = vld [vmem:[#allocation4 + $0x668] sm:$0xff]
    %v2950 = vld [vmem:[#allocation4 + $0x670] sm:$0xff]
    %v2951 = vld [vmem:[#allocation4 + $0x678] sm:$0xff]
    %v2952 = vld [vmem:[#allocation4 + $0x680] sm:$0xff]
    %v2953 = vld [vmem:[#allocation4 + $0x688] sm:$0xff]
    %v2954 = vld [vmem:[#allocation4 + $0x690] sm:$0xff]
    %v2955 = vld [vmem:[#allocation4 + $0x698] sm:$0xff]
    %v2956 = vld [vmem:[#allocation4 + $0x6a0] sm:$0xff]
    %v2957 = vld [vmem:[#allocation4 + $0x6a8] sm:$0xff]
    %v2958 = vld [vmem:[#allocation4 + $0x6b0] sm:$0xff]
    %v2959 = vld [vmem:[#allocation4 + $0x6b8] sm:$0xff]
    %v2960 = vld [vmem:[#allocation4 + $0x6c0] sm:$0xff]
    %v2961 = vld [vmem:[#allocation4 + $0x6c8] sm:$0xff]
    %v2962 = vld [vmem:[#allocation4 + $0x6d0] sm:$0xff]
    %v2963 = vld [vmem:[#allocation4 + $0x6d8] sm:$0xff]
    %v2964 = vld [vmem:[#allocation4 + $0x6e0] sm:$0xff]
    %v2965 = vld [vmem:[#allocation4 + $0x6e8] sm:$0xff]
    %v2966 = vld [vmem:[#allocation4 + $0x6f0] sm:$0xff]
    %v2967 = vld [vmem:[#allocation4 + $0x6f8] sm:$0xff]
    %v2968 = vld [vmem:[#allocation4 + $0x700] sm:$0xff]
    %v2969 = vld [vmem:[#allocation4 + $0x708] sm:$0xff]
    %v2970 = vld [vmem:[#allocation4 + $0x710] sm:$0xff]
    %v2971 = vld [vmem:[#allocation4 + $0x718] sm:$0xff]
    %v2972 = vld [vmem:[#allocation4 + $0x720] sm:$0xff]
    %v2973 = vld [vmem:[#allocation4 + $0x728] sm:$0xff]
    %v2974 = vld [vmem:[#allocation4 + $0x730] sm:$0xff]
    %v2975 = vld [vmem:[#allocation4 + $0x738] sm:$0xff]
    %v2976 = vld [vmem:[#allocation4 + $0x740] sm:$0xff]
    %v2977 = vld [vmem:[#allocation4 + $0x748] sm:$0xff]
    %v2978 = vld [vmem:[#allocation4 + $0x750] sm:$0xff]
    %v2979 = vld [vmem:[#allocation4 + $0x758] sm:$0xff]
    %v2980 = vld [vmem:[#allocation4 + $0x760] sm:$0xff]
    %v2981 = vld [vmem:[#allocation4 + $0x768] sm:$0xff]
    %v2982 = vld [vmem:[#allocation4 + $0x770] sm:$0xff]
    %v2983 = vld [vmem:[#allocation4 + $0x778] sm:$0xff]
    %v2984 = vld [vmem:[#allocation4 + $0x780] sm:$0xff]
    %v2985 = vld [vmem:[#allocation4 + $0x788] sm:$0xff]
    %v2986 = vld [vmem:[#allocation4 + $0x790] sm:$0xff]
    %v2987 = vld [vmem:[#allocation4 + $0x798] sm:$0xff]
    %v2988 = vld [vmem:[#allocation4 + $0x7a0] sm:$0xff]
    %v2989 = vld [vmem:[#allocation4 + $0x7a8] sm:$0xff]
    %v2990 = vld [vmem:[#allocation4 + $0x7b0] sm:$0xff]
    %v2991 = vld [vmem:[#allocation4 + $0x7b8] sm:$0xff]
    %v2992 = vld [vmem:[#allocation4 + $0x7c0] sm:$0xff]
    %v2993 = vld [vmem:[#allocation4 + $0x7c8] sm:$0xff]
    %v2994 = vld [vmem:[#allocation4 + $0x7d0] sm:$0xff]
    %v2995 = vld [vmem:[#allocation4 + $0x7d8] sm:$0xff]
    %v2996 = vld [vmem:[#allocation4 + $0x7e0] sm:$0xff]
    %v2997 = vld [vmem:[#allocation4 + $0x7e8] sm:$0xff]
    %v2998 = vld [vmem:[#allocation4 + $0x7f0] sm:$0xff]
    %v2999 = vld [vmem:[#allocation4 + $0x7f8] sm:$0xff]
    %v3000 = vld [vmem:[%s6] sm:$0xff]
    %v3002 = vperm.slane %v3000, 0
    %v3003 = vperm.slane %v3000, 1
    %v3004 = vperm.slane %v3000, 2
    %v3005 = vperm.slane %v3000, 3
    %v3006 = vperm.slane %v3000, 4
    %v3007 = vperm.slane %v3000, 5
    %v3008 = vperm.slane %v3000, 6
    %v3009 = vperm.slane %v3000, 7
    %v3274 = vunpack.c.l.b16 %v2744
    %v3275 = vunpack.c.h.b16 %v2744
    %v3276 = vunpack.c.l.b16 %v2745
    %v3277 = vunpack.c.h.b16 %v2745
    %v3278 = vunpack.c.l.b16 %v2746
    %v3279 = vunpack.c.h.b16 %v2746
    %v3280 = vunpack.c.l.b16 %v2747
    %v3281 = vunpack.c.h.b16 %v2747
    %v3282 = vunpack.c.l.b16 %v2748
    %v3283 = vunpack.c.h.b16 %v2748
    %v3284 = vunpack.c.l.b16 %v2749
    %v3285 = vunpack.c.h.b16 %v2749
    %v3286 = vunpack.c.l.b16 %v2750
    %v3287 = vunpack.c.h.b16 %v2750
    %v3288 = vunpack.c.l.b16 %v2751
    %v3289 = vunpack.c.h.b16 %v2751
    %v3290 = vunpack.c.l.b16 %v2752
    %v3291 = vunpack.c.h.b16 %v2752
    %v3292 = vunpack.c.l.b16 %v2753
    %v3293 = vunpack.c.h.b16 %v2753
    %v3294 = vunpack.c.l.b16 %v2754
    %v3295 = vunpack.c.h.b16 %v2754
    %v3296 = vunpack.c.l.b16 %v2755
    %v3297 = vunpack.c.h.b16 %v2755
    %v3298 = vunpack.c.l.b16 %v2756
    %v3299 = vunpack.c.h.b16 %v2756
    %v3300 = vunpack.c.l.b16 %v2757
    %v3301 = vunpack.c.h.b16 %v2757
    %v3302 = vunpack.c.l.b16 %v2758
    %v3303 = vunpack.c.h.b16 %v2758
    %v3304 = vunpack.c.l.b16 %v2759
    %v3305 = vunpack.c.h.b16 %v2759
    %v3306 = vunpack.c.l.b16 %v2760
    %v3307 = vunpack.c.h.b16 %v2760
    %v3308 = vunpack.c.l.b16 %v2761
    %v3309 = vunpack.c.h.b16 %v2761
    %v3310 = vunpack.c.l.b16 %v2762
    %v3311 = vunpack.c.h.b16 %v2762
    %v3312 = vunpack.c.l.b16 %v2763
    %v3313 = vunpack.c.h.b16 %v2763
    %v3314 = vunpack.c.l.b16 %v2764
    %v3315 = vunpack.c.h.b16 %v2764
    %v3316 = vunpack.c.l.b16 %v2765
    %v3317 = vunpack.c.h.b16 %v2765
    %v3318 = vunpack.c.l.b16 %v2766
    %v3319 = vunpack.c.h.b16 %v2766
    %v3320 = vunpack.c.l.b16 %v2767
    %v3321 = vunpack.c.h.b16 %v2767
    %v3322 = vunpack.c.l.b16 %v2768
    %v3323 = vunpack.c.h.b16 %v2768
    %v3324 = vunpack.c.l.b16 %v2769
    %v3325 = vunpack.c.h.b16 %v2769
    %v3326 = vunpack.c.l.b16 %v2770
    %v3327 = vunpack.c.h.b16 %v2770
    %v3328 = vunpack.c.l.b16 %v2771
    %v3329 = vunpack.c.h.b16 %v2771
    %v3330 = vunpack.c.l.b16 %v2772
    %v3331 = vunpack.c.h.b16 %v2772
    %v3332 = vunpack.c.l.b16 %v2773
    %v3333 = vunpack.c.h.b16 %v2773
    %v3334 = vunpack.c.l.b16 %v2774
    %v3335 = vunpack.c.h.b16 %v2774
    %v3336 = vunpack.c.l.b16 %v2775
    %v3337 = vunpack.c.h.b16 %v2775
    %v3338 = vunpack.c.l.b16 %v2776
    %v3339 = vunpack.c.h.b16 %v2776
    %v3340 = vunpack.c.l.b16 %v2777
    %v3341 = vunpack.c.h.b16 %v2777
    %v3342 = vunpack.c.l.b16 %v2778
    %v3343 = vunpack.c.h.b16 %v2778
    %v3344 = vunpack.c.l.b16 %v2779
    %v3345 = vunpack.c.h.b16 %v2779
    %v3346 = vunpack.c.l.b16 %v2780
    %v3347 = vunpack.c.h.b16 %v2780
    %v3348 = vunpack.c.l.b16 %v2781
    %v3349 = vunpack.c.h.b16 %v2781
    %v3350 = vunpack.c.l.b16 %v2782
    %v3351 = vunpack.c.h.b16 %v2782
    %v3352 = vunpack.c.l.b16 %v2783
    %v3353 = vunpack.c.h.b16 %v2783
    %v3354 = vunpack.c.l.b16 %v2784
    %v3355 = vunpack.c.h.b16 %v2784
    %v3356 = vunpack.c.l.b16 %v2785
    %v3357 = vunpack.c.h.b16 %v2785
    %v3358 = vunpack.c.l.b16 %v2786
    %v3359 = vunpack.c.h.b16 %v2786
    %v3360 = vunpack.c.l.b16 %v2787
    %v3361 = vunpack.c.h.b16 %v2787
    %v3362 = vunpack.c.l.b16 %v2788
    %v3363 = vunpack.c.h.b16 %v2788
    %v3364 = vunpack.c.l.b16 %v2789
    %v3365 = vunpack.c.h.b16 %v2789
    %v3366 = vunpack.c.l.b16 %v2790
    %v3367 = vunpack.c.h.b16 %v2790
    %v3368 = vunpack.c.l.b16 %v2791
    %v3369 = vunpack.c.h.b16 %v2791
    %v3370 = vunpack.c.l.b16 %v2792
    %v3371 = vunpack.c.h.b16 %v2792
    %v3372 = vunpack.c.l.b16 %v2793
    %v3373 = vunpack.c.h.b16 %v2793
    %v3374 = vunpack.c.l.b16 %v2794
    %v3375 = vunpack.c.h.b16 %v2794
    %v3376 = vunpack.c.l.b16 %v2795
    %v3377 = vunpack.c.h.b16 %v2795
    %v3378 = vunpack.c.l.b16 %v2796
    %v3379 = vunpack.c.h.b16 %v2796
    %v3380 = vunpack.c.l.b16 %v2797
    %v3381 = vunpack.c.h.b16 %v2797
    %v3382 = vunpack.c.l.b16 %v2798
    %v3383 = vunpack.c.h.b16 %v2798
    %v3384 = vunpack.c.l.b16 %v2799
    %v3385 = vunpack.c.h.b16 %v2799
    %v3386 = vunpack.c.l.b16 %v2800
    %v3387 = vunpack.c.h.b16 %v2800
    %v3388 = vunpack.c.l.b16 %v2801
    %v3389 = vunpack.c.h.b16 %v2801
    %v3390 = vunpack.c.l.b16 %v2802
    %v3391 = vunpack.c.h.b16 %v2802
    %v3392 = vunpack.c.l.b16 %v2803
    %v3393 = vunpack.c.h.b16 %v2803
    %v3394 = vunpack.c.l.b16 %v2804
    %v3395 = vunpack.c.h.b16 %v2804
    %v3396 = vunpack.c.l.b16 %v2805
    %v3397 = vunpack.c.h.b16 %v2805
    %v3398 = vunpack.c.l.b16 %v2806
    %v3399 = vunpack.c.h.b16 %v2806
    %v3400 = vunpack.c.l.b16 %v2807
    %v3401 = vunpack.c.h.b16 %v2807
    %v3402 = vunpack.c.l.b16 %v2808
    %v3403 = vunpack.c.h.b16 %v2808
    %v3404 = vunpack.c.l.b16 %v2809
    %v3405 = vunpack.c.h.b16 %v2809
    %v3406 = vunpack.c.l.b16 %v2810
    %v3407 = vunpack.c.h.b16 %v2810
    %v3408 = vunpack.c.l.b16 %v2811
    %v3409 = vunpack.c.h.b16 %v2811
    %v3410 = vunpack.c.l.b16 %v2812
    %v3411 = vunpack.c.h.b16 %v2812
    %v3412 = vunpack.c.l.b16 %v2813
    %v3413 = vunpack.c.h.b16 %v2813
    %v3414 = vunpack.c.l.b16 %v2814
    %v3415 = vunpack.c.h.b16 %v2814
    %v3416 = vunpack.c.l.b16 %v2815
    %v3417 = vunpack.c.h.b16 %v2815
    %v3418 = vunpack.c.l.b16 %v2816
    %v3419 = vunpack.c.h.b16 %v2816
    %v3420 = vunpack.c.l.b16 %v2817
    %v3421 = vunpack.c.h.b16 %v2817
    %v3422 = vunpack.c.l.b16 %v2818
    %v3423 = vunpack.c.h.b16 %v2818
    %v3424 = vunpack.c.l.b16 %v2819
    %v3425 = vunpack.c.h.b16 %v2819
    %v3426 = vunpack.c.l.b16 %v2820
    %v3427 = vunpack.c.h.b16 %v2820
    %v3428 = vunpack.c.l.b16 %v2821
    %v3429 = vunpack.c.h.b16 %v2821
    %v3430 = vunpack.c.l.b16 %v2822
    %v3431 = vunpack.c.h.b16 %v2822
    %v3432 = vunpack.c.l.b16 %v2823
    %v3433 = vunpack.c.h.b16 %v2823
    %v3434 = vunpack.c.l.b16 %v2824
    %v3435 = vunpack.c.h.b16 %v2824
    %v3436 = vunpack.c.l.b16 %v2825
    %v3437 = vunpack.c.h.b16 %v2825
    %v3438 = vunpack.c.l.b16 %v2826
    %v3439 = vunpack.c.h.b16 %v2826
    %v3440 = vunpack.c.l.b16 %v2827
    %v3441 = vunpack.c.h.b16 %v2827
    %v3442 = vunpack.c.l.b16 %v2828
    %v3443 = vunpack.c.h.b16 %v2828
    %v3444 = vunpack.c.l.b16 %v2829
    %v3445 = vunpack.c.h.b16 %v2829
    %v3446 = vunpack.c.l.b16 %v2830
    %v3447 = vunpack.c.h.b16 %v2830
    %v3448 = vunpack.c.l.b16 %v2831
    %v3449 = vunpack.c.h.b16 %v2831
    %v3450 = vunpack.c.l.b16 %v2832
    %v3451 = vunpack.c.h.b16 %v2832
    %v3452 = vunpack.c.l.b16 %v2833
    %v3453 = vunpack.c.h.b16 %v2833
    %v3454 = vunpack.c.l.b16 %v2834
    %v3455 = vunpack.c.h.b16 %v2834
    %v3456 = vunpack.c.l.b16 %v2835
    %v3457 = vunpack.c.h.b16 %v2835
    %v3458 = vunpack.c.l.b16 %v2836
    %v3459 = vunpack.c.h.b16 %v2836
    %v3460 = vunpack.c.l.b16 %v2837
    %v3461 = vunpack.c.h.b16 %v2837
    %v3462 = vunpack.c.l.b16 %v2838
    %v3463 = vunpack.c.h.b16 %v2838
    %v3464 = vunpack.c.l.b16 %v2839
    %v3465 = vunpack.c.h.b16 %v2839
    %v3466 = vunpack.c.l.b16 %v2840
    %v3467 = vunpack.c.h.b16 %v2840
    %v3468 = vunpack.c.l.b16 %v2841
    %v3469 = vunpack.c.h.b16 %v2841
    %v3470 = vunpack.c.l.b16 %v2842
    %v3471 = vunpack.c.h.b16 %v2842
    %v3472 = vunpack.c.l.b16 %v2843
    %v3473 = vunpack.c.h.b16 %v2843
    %v3474 = vunpack.c.l.b16 %v2844
    %v3475 = vunpack.c.h.b16 %v2844
    %v3476 = vunpack.c.l.b16 %v2845
    %v3477 = vunpack.c.h.b16 %v2845
    %v3478 = vunpack.c.l.b16 %v2846
    %v3479 = vunpack.c.h.b16 %v2846
    %v3480 = vunpack.c.l.b16 %v2847
    %v3481 = vunpack.c.h.b16 %v2847
    %v3482 = vunpack.c.l.b16 %v2848
    %v3483 = vunpack.c.h.b16 %v2848
    %v3484 = vunpack.c.l.b16 %v2849
    %v3485 = vunpack.c.h.b16 %v2849
    %v3486 = vunpack.c.l.b16 %v2850
    %v3487 = vunpack.c.h.b16 %v2850
    %v3488 = vunpack.c.l.b16 %v2851
    %v3489 = vunpack.c.h.b16 %v2851
    %v3490 = vunpack.c.l.b16 %v2852
    %v3491 = vunpack.c.h.b16 %v2852
    %v3492 = vunpack.c.l.b16 %v2853
    %v3493 = vunpack.c.h.b16 %v2853
    %v3494 = vunpack.c.l.b16 %v2854
    %v3495 = vunpack.c.h.b16 %v2854
    %v3496 = vunpack.c.l.b16 %v2855
    %v3497 = vunpack.c.h.b16 %v2855
    %v3498 = vunpack.c.l.b16 %v2856
    %v3499 = vunpack.c.h.b16 %v2856
    %v3500 = vunpack.c.l.b16 %v2857
    %v3501 = vunpack.c.h.b16 %v2857
    %v3502 = vunpack.c.l.b16 %v2858
    %v3503 = vunpack.c.h.b16 %v2858
    %v3504 = vunpack.c.l.b16 %v2859
    %v3505 = vunpack.c.h.b16 %v2859
    %v3506 = vunpack.c.l.b16 %v2860
    %v3507 = vunpack.c.h.b16 %v2860
    %v3508 = vunpack.c.l.b16 %v2861
    %v3509 = vunpack.c.h.b16 %v2861
    %v3510 = vunpack.c.l.b16 %v2862
    %v3511 = vunpack.c.h.b16 %v2862
    %v3512 = vunpack.c.l.b16 %v2863
    %v3513 = vunpack.c.h.b16 %v2863
    %v3514 = vunpack.c.l.b16 %v2864
    %v3515 = vunpack.c.h.b16 %v2864
    %v3516 = vunpack.c.l.b16 %v2865
    %v3517 = vunpack.c.h.b16 %v2865
    %v3518 = vunpack.c.l.b16 %v2866
    %v3519 = vunpack.c.h.b16 %v2866
    %v3520 = vunpack.c.l.b16 %v2867
    %v3521 = vunpack.c.h.b16 %v2867
    %v3522 = vunpack.c.l.b16 %v2868
    %v3523 = vunpack.c.h.b16 %v2868
    %v3524 = vunpack.c.l.b16 %v2869
    %v3525 = vunpack.c.h.b16 %v2869
    %v3526 = vunpack.c.l.b16 %v2870
    %v3527 = vunpack.c.h.b16 %v2870
    %v3528 = vunpack.c.l.b16 %v2871
    %v3529 = vunpack.c.h.b16 %v2871
    %v3530 = vunpack.c.l.b16 %v2872
    %v3531 = vunpack.c.h.b16 %v2872
    %v3532 = vunpack.c.l.b16 %v2873
    %v3533 = vunpack.c.h.b16 %v2873
    %v3534 = vunpack.c.l.b16 %v2874
    %v3535 = vunpack.c.h.b16 %v2874
    %v3536 = vunpack.c.l.b16 %v2875
    %v3537 = vunpack.c.h.b16 %v2875
    %v3538 = vunpack.c.l.b16 %v2876
    %v3539 = vunpack.c.h.b16 %v2876
    %v3540 = vunpack.c.l.b16 %v2877
    %v3541 = vunpack.c.h.b16 %v2877
    %v3542 = vunpack.c.l.b16 %v2878
    %v3543 = vunpack.c.h.b16 %v2878
    %v3544 = vunpack.c.l.b16 %v2879
    %v3545 = vunpack.c.h.b16 %v2879
    %v3546 = vunpack.c.l.b16 %v2880
    %v3547 = vunpack.c.h.b16 %v2880
    %v3548 = vunpack.c.l.b16 %v2881
    %v3549 = vunpack.c.h.b16 %v2881
    %v3550 = vunpack.c.l.b16 %v2882
    %v3551 = vunpack.c.h.b16 %v2882
    %v3552 = vunpack.c.l.b16 %v2883
    %v3553 = vunpack.c.h.b16 %v2883
    %v3554 = vunpack.c.l.b16 %v2884
    %v3555 = vunpack.c.h.b16 %v2884
    %v3556 = vunpack.c.l.b16 %v2885
    %v3557 = vunpack.c.h.b16 %v2885
    %v3558 = vunpack.c.l.b16 %v2886
    %v3559 = vunpack.c.h.b16 %v2886
    %v3560 = vunpack.c.l.b16 %v2887
    %v3561 = vunpack.c.h.b16 %v2887
    %v3562 = vunpack.c.l.b16 %v2888
    %v3563 = vunpack.c.h.b16 %v2888
    %v3564 = vunpack.c.l.b16 %v2889
    %v3565 = vunpack.c.h.b16 %v2889
    %v3566 = vunpack.c.l.b16 %v2890
    %v3567 = vunpack.c.h.b16 %v2890
    %v3568 = vunpack.c.l.b16 %v2891
    %v3569 = vunpack.c.h.b16 %v2891
    %v3570 = vunpack.c.l.b16 %v2892
    %v3571 = vunpack.c.h.b16 %v2892
    %v3572 = vunpack.c.l.b16 %v2893
    %v3573 = vunpack.c.h.b16 %v2893
    %v3574 = vunpack.c.l.b16 %v2894
    %v3575 = vunpack.c.h.b16 %v2894
    %v3576 = vunpack.c.l.b16 %v2895
    %v3577 = vunpack.c.h.b16 %v2895
    %v3578 = vunpack.c.l.b16 %v2896
    %v3579 = vunpack.c.h.b16 %v2896
    %v3580 = vunpack.c.l.b16 %v2897
    %v3581 = vunpack.c.h.b16 %v2897
    %v3582 = vunpack.c.l.b16 %v2898
    %v3583 = vunpack.c.h.b16 %v2898
    %v3584 = vunpack.c.l.b16 %v2899
    %v3585 = vunpack.c.h.b16 %v2899
    %v3586 = vunpack.c.l.b16 %v2900
    %v3587 = vunpack.c.h.b16 %v2900
    %v3588 = vunpack.c.l.b16 %v2901
    %v3589 = vunpack.c.h.b16 %v2901
    %v3590 = vunpack.c.l.b16 %v2902
    %v3591 = vunpack.c.h.b16 %v2902
    %v3592 = vunpack.c.l.b16 %v2903
    %v3593 = vunpack.c.h.b16 %v2903
    %v3594 = vunpack.c.l.b16 %v2904
    %v3595 = vunpack.c.h.b16 %v2904
    %v3596 = vunpack.c.l.b16 %v2905
    %v3597 = vunpack.c.h.b16 %v2905
    %v3598 = vunpack.c.l.b16 %v2906
    %v3599 = vunpack.c.h.b16 %v2906
    %v3600 = vunpack.c.l.b16 %v2907
    %v3601 = vunpack.c.h.b16 %v2907
    %v3602 = vunpack.c.l.b16 %v2908
    %v3603 = vunpack.c.h.b16 %v2908
    %v3604 = vunpack.c.l.b16 %v2909
    %v3605 = vunpack.c.h.b16 %v2909
    %v3606 = vunpack.c.l.b16 %v2910
    %v3607 = vunpack.c.h.b16 %v2910
    %v3608 = vunpack.c.l.b16 %v2911
    %v3609 = vunpack.c.h.b16 %v2911
    %v3610 = vunpack.c.l.b16 %v2912
    %v3611 = vunpack.c.h.b16 %v2912
    %v3612 = vunpack.c.l.b16 %v2913
    %v3613 = vunpack.c.h.b16 %v2913
    %v3614 = vunpack.c.l.b16 %v2914
    %v3615 = vunpack.c.h.b16 %v2914
    %v3616 = vunpack.c.l.b16 %v2915
    %v3617 = vunpack.c.h.b16 %v2915
    %v3618 = vunpack.c.l.b16 %v2916
    %v3619 = vunpack.c.h.b16 %v2916
    %v3620 = vunpack.c.l.b16 %v2917
    %v3621 = vunpack.c.h.b16 %v2917
    %v3622 = vunpack.c.l.b16 %v2918
    %v3623 = vunpack.c.h.b16 %v2918
    %v3624 = vunpack.c.l.b16 %v2919
    %v3625 = vunpack.c.h.b16 %v2919
    %v3626 = vunpack.c.l.b16 %v2920
    %v3627 = vunpack.c.h.b16 %v2920
    %v3628 = vunpack.c.l.b16 %v2921
    %v3629 = vunpack.c.h.b16 %v2921
    %v3630 = vunpack.c.l.b16 %v2922
    %v3631 = vunpack.c.h.b16 %v2922
    %v3632 = vunpack.c.l.b16 %v2923
    %v3633 = vunpack.c.h.b16 %v2923
    %v3634 = vunpack.c.l.b16 %v2924
    %v3635 = vunpack.c.h.b16 %v2924
    %v3636 = vunpack.c.l.b16 %v2925
    %v3637 = vunpack.c.h.b16 %v2925
    %v3638 = vunpack.c.l.b16 %v2926
    %v3639 = vunpack.c.h.b16 %v2926
    %v3640 = vunpack.c.l.b16 %v2927
    %v3641 = vunpack.c.h.b16 %v2927
    %v3642 = vunpack.c.l.b16 %v2928
    %v3643 = vunpack.c.h.b16 %v2928
    %v3644 = vunpack.c.l.b16 %v2929
    %v3645 = vunpack.c.h.b16 %v2929
    %v3646 = vunpack.c.l.b16 %v2930
    %v3647 = vunpack.c.h.b16 %v2930
    %v3648 = vunpack.c.l.b16 %v2931
    %v3649 = vunpack.c.h.b16 %v2931
    %v3650 = vunpack.c.l.b16 %v2932
    %v3651 = vunpack.c.h.b16 %v2932
    %v3652 = vunpack.c.l.b16 %v2933
    %v3653 = vunpack.c.h.b16 %v2933
    %v3654 = vunpack.c.l.b16 %v2934
    %v3655 = vunpack.c.h.b16 %v2934
    %v3656 = vunpack.c.l.b16 %v2935
    %v3657 = vunpack.c.h.b16 %v2935
    %v3658 = vunpack.c.l.b16 %v2936
    %v3659 = vunpack.c.h.b16 %v2936
    %v3660 = vunpack.c.l.b16 %v2937
    %v3661 = vunpack.c.h.b16 %v2937
    %v3662 = vunpack.c.l.b16 %v2938
    %v3663 = vunpack.c.h.b16 %v2938
    %v3664 = vunpack.c.l.b16 %v2939
    %v3665 = vunpack.c.h.b16 %v2939
    %v3666 = vunpack.c.l.b16 %v2940
    %v3667 = vunpack.c.h.b16 %v2940
    %v3668 = vunpack.c.l.b16 %v2941
    %v3669 = vunpack.c.h.b16 %v2941
    %v3670 = vunpack.c.l.b16 %v2942
    %v3671 = vunpack.c.h.b16 %v2942
    %v3672 = vunpack.c.l.b16 %v2943
    %v3673 = vunpack.c.h.b16 %v2943
    %v3674 = vunpack.c.l.b16 %v2944
    %v3675 = vunpack.c.h.b16 %v2944
    %v3676 = vunpack.c.l.b16 %v2945
    %v3677 = vunpack.c.h.b16 %v2945
    %v3678 = vunpack.c.l.b16 %v2946
    %v3679 = vunpack.c.h.b16 %v2946
    %v3680 = vunpack.c.l.b16 %v2947
    %v3681 = vunpack.c.h.b16 %v2947
    %v3682 = vunpack.c.l.b16 %v2948
    %v3683 = vunpack.c.h.b16 %v2948
    %v3684 = vunpack.c.l.b16 %v2949
    %v3685 = vunpack.c.h.b16 %v2949
    %v3686 = vunpack.c.l.b16 %v2950
    %v3687 = vunpack.c.h.b16 %v2950
    %v3688 = vunpack.c.l.b16 %v2951
    %v3689 = vunpack.c.h.b16 %v2951
    %v3690 = vunpack.c.l.b16 %v2952
    %v3691 = vunpack.c.h.b16 %v2952
    %v3692 = vunpack.c.l.b16 %v2953
    %v3693 = vunpack.c.h.b16 %v2953
    %v3694 = vunpack.c.l.b16 %v2954
    %v3695 = vunpack.c.h.b16 %v2954
    %v3696 = vunpack.c.l.b16 %v2955
    %v3697 = vunpack.c.h.b16 %v2955
    %v3698 = vunpack.c.l.b16 %v2956
    %v3699 = vunpack.c.h.b16 %v2956
    %v3700 = vunpack.c.l.b16 %v2957
    %v3701 = vunpack.c.h.b16 %v2957
    %v3702 = vunpack.c.l.b16 %v2958
    %v3703 = vunpack.c.h.b16 %v2958
    %v3704 = vunpack.c.l.b16 %v2959
    %v3705 = vunpack.c.h.b16 %v2959
    %v3706 = vunpack.c.l.b16 %v2960
    %v3707 = vunpack.c.h.b16 %v2960
    %v3708 = vunpack.c.l.b16 %v2961
    %v3709 = vunpack.c.h.b16 %v2961
    %v3710 = vunpack.c.l.b16 %v2962
    %v3711 = vunpack.c.h.b16 %v2962
    %v3712 = vunpack.c.l.b16 %v2963
    %v3713 = vunpack.c.h.b16 %v2963
    %v3714 = vunpack.c.l.b16 %v2964
    %v3715 = vunpack.c.h.b16 %v2964
    %v3716 = vunpack.c.l.b16 %v2965
    %v3717 = vunpack.c.h.b16 %v2965
    %v3718 = vunpack.c.l.b16 %v2966
    %v3719 = vunpack.c.h.b16 %v2966
    %v3720 = vunpack.c.l.b16 %v2967
    %v3721 = vunpack.c.h.b16 %v2967
    %v3722 = vunpack.c.l.b16 %v2968
    %v3723 = vunpack.c.h.b16 %v2968
    %v3724 = vunpack.c.l.b16 %v2969
    %v3725 = vunpack.c.h.b16 %v2969
    %v3726 = vunpack.c.l.b16 %v2970
    %v3727 = vunpack.c.h.b16 %v2970
    %v3728 = vunpack.c.l.b16 %v2971
    %v3729 = vunpack.c.h.b16 %v2971
    %v3730 = vunpack.c.l.b16 %v2972
    %v3731 = vunpack.c.h.b16 %v2972
    %v3732 = vunpack.c.l.b16 %v2973
    %v3733 = vunpack.c.h.b16 %v2973
    %v3734 = vunpack.c.l.b16 %v2974
    %v3735 = vunpack.c.h.b16 %v2974
    %v3736 = vunpack.c.l.b16 %v2975
    %v3737 = vunpack.c.h.b16 %v2975
    %v3738 = vunpack.c.l.b16 %v2976
    %v3739 = vunpack.c.h.b16 %v2976
    %v3740 = vunpack.c.l.b16 %v2977
    %v3741 = vunpack.c.h.b16 %v2977
    %v3742 = vunpack.c.l.b16 %v2978
    %v3743 = vunpack.c.h.b16 %v2978
    %v3744 = vunpack.c.l.b16 %v2979
    %v3745 = vunpack.c.h.b16 %v2979
    %v3746 = vunpack.c.l.b16 %v2980
    %v3747 = vunpack.c.h.b16 %v2980
    %v3748 = vunpack.c.l.b16 %v2981
    %v3749 = vunpack.c.h.b16 %v2981
    %v3750 = vunpack.c.l.b16 %v2982
    %v3751 = vunpack.c.h.b16 %v2982
    %v3752 = vunpack.c.l.b16 %v2983
    %v3753 = vunpack.c.h.b16 %v2983
    %v3754 = vunpack.c.l.b16 %v2984
    %v3755 = vunpack.c.h.b16 %v2984
    %v3756 = vunpack.c.l.b16 %v2985
    %v3757 = vunpack.c.h.b16 %v2985
    %v3758 = vunpack.c.l.b16 %v2986
    %v3759 = vunpack.c.h.b16 %v2986
    %v3760 = vunpack.c.l.b16 %v2987
    %v3761 = vunpack.c.h.b16 %v2987
    %v3762 = vunpack.c.l.b16 %v2988
    %v3763 = vunpack.c.h.b16 %v2988
    %v3764 = vunpack.c.l.b16 %v2989
    %v3765 = vunpack.c.h.b16 %v2989
    %v3766 = vunpack.c.l.b16 %v2990
    %v3767 = vunpack.c.h.b16 %v2990
    %v3768 = vunpack.c.l.b16 %v2991
    %v3769 = vunpack.c.h.b16 %v2991
    %v3770 = vunpack.c.l.b16 %v2992
    %v3771 = vunpack.c.h.b16 %v2992
    %v3772 = vunpack.c.l.b16 %v2993
    %v3773 = vunpack.c.h.b16 %v2993
    %v3774 = vunpack.c.l.b16 %v2994
    %v3775 = vunpack.c.h.b16 %v2994
    %v3776 = vunpack.c.l.b16 %v2995
    %v3777 = vunpack.c.h.b16 %v2995
    %v3778 = vunpack.c.l.b16 %v2996
    %v3779 = vunpack.c.h.b16 %v2996
    %v3780 = vunpack.c.l.b16 %v2997
    %v3781 = vunpack.c.h.b16 %v2997
    %v3782 = vunpack.c.l.b16 %v2998
    %v3783 = vunpack.c.h.b16 %v2998
    %v3784 = vunpack.c.l.b16 %v2999
    %v3785 = vunpack.c.h.b16 %v2999
    %v3786 = vpack.c.b16 %v3282, %v3274
    %v3787 = vpack.c.b16 %v3283, %v3275
    %v3788 = vpack.c.b16 %v3284, %v3276
    %v3789 = vpack.c.b16 %v3285, %v3277
    %v3790 = vpack.c.b16 %v3286, %v3278
    %v3791 = vpack.c.b16 %v3287, %v3279
    %v3792 = vpack.c.b16 %v3288, %v3280
    %v3793 = vpack.c.b16 %v3289, %v3281
    %v3794 = vpack.c.b16 %v3298, %v3290
    %v3795 = vpack.c.b16 %v3299, %v3291
    %v3796 = vpack.c.b16 %v3300, %v3292
    %v3797 = vpack.c.b16 %v3301, %v3293
    %v3798 = vpack.c.b16 %v3302, %v3294
    %v3799 = vpack.c.b16 %v3303, %v3295
    %v3800 = vpack.c.b16 %v3304, %v3296
    %v3801 = vpack.c.b16 %v3305, %v3297
    %v3802 = vpack.c.b16 %v3314, %v3306
    %v3803 = vpack.c.b16 %v3315, %v3307
    %v3804 = vpack.c.b16 %v3316, %v3308
    %v3805 = vpack.c.b16 %v3317, %v3309
    %v3806 = vpack.c.b16 %v3318, %v3310
    %v3807 = vpack.c.b16 %v3319, %v3311
    %v3808 = vpack.c.b16 %v3320, %v3312
    %v3809 = vpack.c.b16 %v3321, %v3313
    %v3810 = vpack.c.b16 %v3330, %v3322
    %v3811 = vpack.c.b16 %v3331, %v3323
    %v3812 = vpack.c.b16 %v3332, %v3324
    %v3813 = vpack.c.b16 %v3333, %v3325
    %v3814 = vpack.c.b16 %v3334, %v3326
    %v3815 = vpack.c.b16 %v3335, %v3327
    %v3816 = vpack.c.b16 %v3336, %v3328
    %v3817 = vpack.c.b16 %v3337, %v3329
    %v3818 = vpack.c.b16 %v3346, %v3338
    %v3819 = vpack.c.b16 %v3347, %v3339
    %v3820 = vpack.c.b16 %v3348, %v3340
    %v3821 = vpack.c.b16 %v3349, %v3341
    %v3822 = vpack.c.b16 %v3350, %v3342
    %v3823 = vpack.c.b16 %v3351, %v3343
    %v3824 = vpack.c.b16 %v3352, %v3344
    %v3825 = vpack.c.b16 %v3353, %v3345
    %v3826 = vpack.c.b16 %v3362, %v3354
    %v3827 = vpack.c.b16 %v3363, %v3355
    %v3828 = vpack.c.b16 %v3364, %v3356
    %v3829 = vpack.c.b16 %v3365, %v3357
    %v3830 = vpack.c.b16 %v3366, %v3358
    %v3831 = vpack.c.b16 %v3367, %v3359
    %v3832 = vpack.c.b16 %v3368, %v3360
    %v3833 = vpack.c.b16 %v3369, %v3361
    %v3834 = vpack.c.b16 %v3378, %v3370
    %v3835 = vpack.c.b16 %v3379, %v3371
    %v3836 = vpack.c.b16 %v3380, %v3372
    %v3837 = vpack.c.b16 %v3381, %v3373
    %v3838 = vpack.c.b16 %v3382, %v3374
    %v3839 = vpack.c.b16 %v3383, %v3375
    %v3840 = vpack.c.b16 %v3384, %v3376
    %v3841 = vpack.c.b16 %v3385, %v3377
    %v3842 = vpack.c.b16 %v3394, %v3386
    %v3843 = vpack.c.b16 %v3395, %v3387
    %v3844 = vpack.c.b16 %v3396, %v3388
    %v3845 = vpack.c.b16 %v3397, %v3389
    %v3846 = vpack.c.b16 %v3398, %v3390
    %v3847 = vpack.c.b16 %v3399, %v3391
    %v3848 = vpack.c.b16 %v3400, %v3392
    %v3849 = vpack.c.b16 %v3401, %v3393
    %v3850 = vpack.c.b16 %v3410, %v3402
    %v3851 = vpack.c.b16 %v3411, %v3403
    %v3852 = vpack.c.b16 %v3412, %v3404
    %v3853 = vpack.c.b16 %v3413, %v3405
    %v3854 = vpack.c.b16 %v3414, %v3406
    %v3855 = vpack.c.b16 %v3415, %v3407
    %v3856 = vpack.c.b16 %v3416, %v3408
    %v3857 = vpack.c.b16 %v3417, %v3409
    %v3858 = vpack.c.b16 %v3426, %v3418
    %v3859 = vpack.c.b16 %v3427, %v3419
    %v3860 = vpack.c.b16 %v3428, %v3420
    %v3861 = vpack.c.b16 %v3429, %v3421
    %v3862 = vpack.c.b16 %v3430, %v3422
    %v3863 = vpack.c.b16 %v3431, %v3423
    %v3864 = vpack.c.b16 %v3432, %v3424
    %v3865 = vpack.c.b16 %v3433, %v3425
    %v3866 = vpack.c.b16 %v3442, %v3434
    %v3867 = vpack.c.b16 %v3443, %v3435
    %v3868 = vpack.c.b16 %v3444, %v3436
    %v3869 = vpack.c.b16 %v3445, %v3437
    %v3870 = vpack.c.b16 %v3446, %v3438
    %v3871 = vpack.c.b16 %v3447, %v3439
    %v3872 = vpack.c.b16 %v3448, %v3440
    %v3873 = vpack.c.b16 %v3449, %v3441
    %v3874 = vpack.c.b16 %v3458, %v3450
    %v3875 = vpack.c.b16 %v3459, %v3451
    %v3876 = vpack.c.b16 %v3460, %v3452
    %v3877 = vpack.c.b16 %v3461, %v3453
    %v3878 = vpack.c.b16 %v3462, %v3454
    %v3879 = vpack.c.b16 %v3463, %v3455
    %v3880 = vpack.c.b16 %v3464, %v3456
    %v3881 = vpack.c.b16 %v3465, %v3457
    %v3882 = vpack.c.b16 %v3474, %v3466
    %v3883 = vpack.c.b16 %v3475, %v3467
    %v3884 = vpack.c.b16 %v3476, %v3468
    %v3885 = vpack.c.b16 %v3477, %v3469
    %v3886 = vpack.c.b16 %v3478, %v3470
    %v3887 = vpack.c.b16 %v3479, %v3471
    %v3888 = vpack.c.b16 %v3480, %v3472
    %v3889 = vpack.c.b16 %v3481, %v3473
    %v3890 = vpack.c.b16 %v3490, %v3482
    %v3891 = vpack.c.b16 %v3491, %v3483
    %v3892 = vpack.c.b16 %v3492, %v3484
    %v3893 = vpack.c.b16 %v3493, %v3485
    %v3894 = vpack.c.b16 %v3494, %v3486
    %v3895 = vpack.c.b16 %v3495, %v3487
    %v3896 = vpack.c.b16 %v3496, %v3488
    %v3897 = vpack.c.b16 %v3497, %v3489
    %v3898 = vpack.c.b16 %v3506, %v3498
    %v3899 = vpack.c.b16 %v3507, %v3499
    %v3900 = vpack.c.b16 %v3508, %v3500
    %v3901 = vpack.c.b16 %v3509, %v3501
    %v3902 = vpack.c.b16 %v3510, %v3502
    %v3903 = vpack.c.b16 %v3511, %v3503
    %v3904 = vpack.c.b16 %v3512, %v3504
    %v3905 = vpack.c.b16 %v3513, %v3505
    %v3906 = vpack.c.b16 %v3522, %v3514
    %v3907 = vpack.c.b16 %v3523, %v3515
    %v3908 = vpack.c.b16 %v3524, %v3516
    %v3909 = vpack.c.b16 %v3525, %v3517
    %v3910 = vpack.c.b16 %v3526, %v3518
    %v3911 = vpack.c.b16 %v3527, %v3519
    %v3912 = vpack.c.b16 %v3528, %v3520
    %v3913 = vpack.c.b16 %v3529, %v3521
    %v3914 = vpack.c.b16 %v3538, %v3530
    %v3915 = vpack.c.b16 %v3539, %v3531
    %v3916 = vpack.c.b16 %v3540, %v3532
    %v3917 = vpack.c.b16 %v3541, %v3533
    %v3918 = vpack.c.b16 %v3542, %v3534
    %v3919 = vpack.c.b16 %v3543, %v3535
    %v3920 = vpack.c.b16 %v3544, %v3536
    %v3921 = vpack.c.b16 %v3545, %v3537
    %v3922 = vpack.c.b16 %v3554, %v3546
    %v3923 = vpack.c.b16 %v3555, %v3547
    %v3924 = vpack.c.b16 %v3556, %v3548
    %v3925 = vpack.c.b16 %v3557, %v3549
    %v3926 = vpack.c.b16 %v3558, %v3550
    %v3927 = vpack.c.b16 %v3559, %v3551
    %v3928 = vpack.c.b16 %v3560, %v3552
    %v3929 = vpack.c.b16 %v3561, %v3553
    %v3930 = vpack.c.b16 %v3570, %v3562
    %v3931 = vpack.c.b16 %v3571, %v3563
    %v3932 = vpack.c.b16 %v3572, %v3564
    %v3933 = vpack.c.b16 %v3573, %v3565
    %v3934 = vpack.c.b16 %v3574, %v3566
    %v3935 = vpack.c.b16 %v3575, %v3567
    %v3936 = vpack.c.b16 %v3576, %v3568
    %v3937 = vpack.c.b16 %v3577, %v3569
    %v3938 = vpack.c.b16 %v3586, %v3578
    %v3939 = vpack.c.b16 %v3587, %v3579
    %v3940 = vpack.c.b16 %v3588, %v3580
    %v3941 = vpack.c.b16 %v3589, %v3581
    %v3942 = vpack.c.b16 %v3590, %v3582
    %v3943 = vpack.c.b16 %v3591, %v3583
    %v3944 = vpack.c.b16 %v3592, %v3584
    %v3945 = vpack.c.b16 %v3593, %v3585
    %v3946 = vpack.c.b16 %v3602, %v3594
    %v3947 = vpack.c.b16 %v3603, %v3595
    %v3948 = vpack.c.b16 %v3604, %v3596
    %v3949 = vpack.c.b16 %v3605, %v3597
    %v3950 = vpack.c.b16 %v3606, %v3598
    %v3951 = vpack.c.b16 %v3607, %v3599
    %v3952 = vpack.c.b16 %v3608, %v3600
    %v3953 = vpack.c.b16 %v3609, %v3601
    %v3954 = vpack.c.b16 %v3618, %v3610
    %v3955 = vpack.c.b16 %v3619, %v3611
    %v3956 = vpack.c.b16 %v3620, %v3612
    %v3957 = vpack.c.b16 %v3621, %v3613
    %v3958 = vpack.c.b16 %v3622, %v3614
    %v3959 = vpack.c.b16 %v3623, %v3615
    %v3960 = vpack.c.b16 %v3624, %v3616
    %v3961 = vpack.c.b16 %v3625, %v3617
    %v3962 = vpack.c.b16 %v3634, %v3626
    %v3963 = vpack.c.b16 %v3635, %v3627
    %v3964 = vpack.c.b16 %v3636, %v3628
    %v3965 = vpack.c.b16 %v3637, %v3629
    %v3966 = vpack.c.b16 %v3638, %v3630
    %v3967 = vpack.c.b16 %v3639, %v3631
    %v3968 = vpack.c.b16 %v3640, %v3632
    %v3969 = vpack.c.b16 %v3641, %v3633
    %v3970 = vpack.c.b16 %v3650, %v3642
    %v3971 = vpack.c.b16 %v3651, %v3643
    %v3972 = vpack.c.b16 %v3652, %v3644
    %v3973 = vpack.c.b16 %v3653, %v3645
    %v3974 = vpack.c.b16 %v3654, %v3646
    %v3975 = vpack.c.b16 %v3655, %v3647
    %v3976 = vpack.c.b16 %v3656, %v3648
    %v3977 = vpack.c.b16 %v3657, %v3649
    %v3978 = vpack.c.b16 %v3666, %v3658
    %v3979 = vpack.c.b16 %v3667, %v3659
    %v3980 = vpack.c.b16 %v3668, %v3660
    %v3981 = vpack.c.b16 %v3669, %v3661
    %v3982 = vpack.c.b16 %v3670, %v3662
    %v3983 = vpack.c.b16 %v3671, %v3663
    %v3984 = vpack.c.b16 %v3672, %v3664
    %v3985 = vpack.c.b16 %v3673, %v3665
    %v3986 = vpack.c.b16 %v3682, %v3674
    %v3987 = vpack.c.b16 %v3683, %v3675
    %v3988 = vpack.c.b16 %v3684, %v3676
    %v3989 = vpack.c.b16 %v3685, %v3677
    %v3990 = vpack.c.b16 %v3686, %v3678
    %v3991 = vpack.c.b16 %v3687, %v3679
    %v3992 = vpack.c.b16 %v3688, %v3680
    %v3993 = vpack.c.b16 %v3689, %v3681
    %v3994 = vpack.c.b16 %v3698, %v3690
    %v3995 = vpack.c.b16 %v3699, %v3691
    %v3996 = vpack.c.b16 %v3700, %v3692
    %v3997 = vpack.c.b16 %v3701, %v3693
    %v3998 = vpack.c.b16 %v3702, %v3694
    %v3999 = vpack.c.b16 %v3703, %v3695
    %v4000 = vpack.c.b16 %v3704, %v3696
    %v4001 = vpack.c.b16 %v3705, %v3697
    %v4002 = vpack.c.b16 %v3714, %v3706
    %v4003 = vpack.c.b16 %v3715, %v3707
    %v4004 = vpack.c.b16 %v3716, %v3708
    %v4005 = vpack.c.b16 %v3717, %v3709
    %v4006 = vpack.c.b16 %v3718, %v3710
    %v4007 = vpack.c.b16 %v3719, %v3711
    %v4008 = vpack.c.b16 %v3720, %v3712
    %v4009 = vpack.c.b16 %v3721, %v3713
    %v4010 = vpack.c.b16 %v3730, %v3722
    %v4011 = vpack.c.b16 %v3731, %v3723
    %v4012 = vpack.c.b16 %v3732, %v3724
    %v4013 = vpack.c.b16 %v3733, %v3725
    %v4014 = vpack.c.b16 %v3734, %v3726
    %v4015 = vpack.c.b16 %v3735, %v3727
    %v4016 = vpack.c.b16 %v3736, %v3728
    %v4017 = vpack.c.b16 %v3737, %v3729
    %v4018 = vpack.c.b16 %v3746, %v3738
    %v4019 = vpack.c.b16 %v3747, %v3739
    %v4020 = vpack.c.b16 %v3748, %v3740
    %v4021 = vpack.c.b16 %v3749, %v3741
    %v4022 = vpack.c.b16 %v3750, %v3742
    %v4023 = vpack.c.b16 %v3751, %v3743
    %v4024 = vpack.c.b16 %v3752, %v3744
    %v4025 = vpack.c.b16 %v3753, %v3745
    %v4026 = vpack.c.b16 %v3762, %v3754
    %v4027 = vpack.c.b16 %v3763, %v3755
    %v4028 = vpack.c.b16 %v3764, %v3756
    %v4029 = vpack.c.b16 %v3765, %v3757
    %v4030 = vpack.c.b16 %v3766, %v3758
    %v4031 = vpack.c.b16 %v3767, %v3759
    %v4032 = vpack.c.b16 %v3768, %v3760
    %v4033 = vpack.c.b16 %v3769, %v3761
    %v4034 = vpack.c.b16 %v3778, %v3770
    %v4035 = vpack.c.b16 %v3779, %v3771
    %v4036 = vpack.c.b16 %v3780, %v3772
    %v4037 = vpack.c.b16 %v3781, %v3773
    %v4038 = vpack.c.b16 %v3782, %v3774
    %v4039 = vpack.c.b16 %v3783, %v3775
    %v4040 = vpack.c.b16 %v3784, %v3776
    %v4041 = vpack.c.b16 %v3785, %v3777
    %4298 = vmatpush.bf16.msra.mxu0 %v3842
    %4299 = vmatpush.bf16.msra.mxu0 %v3834
    %4300 = vmatpush.bf16.msra.mxu0 %v3826
    %4301 = vmatpush.bf16.msra.mxu0 %v3818
    %4302 = vmatpush.bf16.msra.mxu0 %v3810
    %4303 = vmatpush.bf16.msra.mxu0 %v3802
    %4304 = vmatpush.bf16.msra.mxu0 %v3794
    %4305 = vmatpush.bf16.msra.mxu0 %v3786
    %4306 = vmatmul.bf16.gmra.mxu0 %v2740
    %v4307 = vpop.f32.mrf.mxu0
    %v4308 = vadd.f32 %v3002, %v4307
    %v4309 = vpop.f32.mrf.mxu0
    %v4310 = vadd.f32 %v3002, %v4309
    %4311 = vdwg.mxu0
    %4312 = vmatpush.bf16.msra.mxu0 %v3906
    %4313 = vmatpush.bf16.msra.mxu0 %v3898
    %4314 = vmatpush.bf16.msra.mxu0 %v3890
    %4315 = vmatpush.bf16.msra.mxu0 %v3882
    %4316 = vmatpush.bf16.msra.mxu0 %v3874
    %4317 = vmatpush.bf16.msra.mxu0 %v3866
    %4318 = vmatpush.bf16.msra.mxu0 %v3858
    %4319 = vmatpush.bf16.msra.mxu0 %v3850
    %4320 = vmatmul.bf16.gmra.mxu0 %v2741
    %v4321 = vpop.f32.mrf.mxu0
    %v4322 = vadd.f32 %v4308, %v4321
    %v4323 = vpop.f32.mrf.mxu0
    %v4324 = vadd.f32 %v4310, %v4323
    %4325 = vdwg.mxu0
    %4326 = vmatpush.bf16.msra.mxu0 %v3970
    %4327 = vmatpush.bf16.msra.mxu0 %v3962
    %4328 = vmatpush.bf16.msra.mxu0 %v3954
    %4329 = vmatpush.bf16.msra.mxu0 %v3946
    %4330 = vmatpush.bf16.msra.mxu0 %v3938
    %4331 = vmatpush.bf16.msra.mxu0 %v3930
    %4332 = vmatpush.bf16.msra.mxu0 %v3922
    %4333 = vmatpush.bf16.msra.mxu0 %v3914
    %4334 = vmatmul.bf16.gmra.mxu0 %v2742
    %v4335 = vpop.f32.mrf.mxu0
    %v4336 = vadd.f32 %v4322, %v4335
    %v4337 = vpop.f32.mrf.mxu0
    %v4338 = vadd.f32 %v4324, %v4337
    %4339 = vdwg.mxu0
    %4340 = vmatpush.bf16.msra.mxu0 %v4034
    %4341 = vmatpush.bf16.msra.mxu0 %v4026
    %4342 = vmatpush.bf16.msra.mxu0 %v4018
    %4343 = vmatpush.bf16.msra.mxu0 %v4010
    %4344 = vmatpush.bf16.msra.mxu0 %v4002
    %4345 = vmatpush.bf16.msra.mxu0 %v3994
    %4346 = vmatpush.bf16.msra.mxu0 %v3986
    %4347 = vmatpush.bf16.msra.mxu0 %v3978
    %4348 = vmatmul.bf16.gmra.mxu0 %v2743
    %v4349 = vpop.f32.mrf.mxu0
    %v4350 = vadd.f32 %v4336, %v4349
    %v4351 = vpop.f32.mrf.mxu0
    %v4352 = vadd.f32 %v4338, %v4351
    %4353 = vdwg.mxu0
    %4354 = vmatpush.bf16.msra.mxu0 %v3843
    %4355 = vmatpush.bf16.msra.mxu0 %v3835
    %4356 = vmatpush.bf16.msra.mxu0 %v3827
    %4357 = vmatpush.bf16.msra.mxu0 %v3819
    %4358 = vmatpush.bf16.msra.mxu0 %v3811
    %4359 = vmatpush.bf16.msra.mxu0 %v3803
    %4360 = vmatpush.bf16.msra.mxu0 %v3795
    %4361 = vmatpush.bf16.msra.mxu0 %v3787
    %4362 = vmatmul.bf16.gmra.mxu0 %v2740
    %v4363 = vpop.f32.mrf.mxu0
    %v4364 = vadd.f32 %v3003, %v4363
    %v4365 = vpop.f32.mrf.mxu0
    %v4366 = vadd.f32 %v3003, %v4365
    %4367 = vdwg.mxu0
    %4368 = vmatpush.bf16.msra.mxu0 %v3907
    %4369 = vmatpush.bf16.msra.mxu0 %v3899
    %4370 = vmatpush.bf16.msra.mxu0 %v3891
    %4371 = vmatpush.bf16.msra.mxu0 %v3883
    %4372 = vmatpush.bf16.msra.mxu0 %v3875
    %4373 = vmatpush.bf16.msra.mxu0 %v3867
    %4374 = vmatpush.bf16.msra.mxu0 %v3859
    %4375 = vmatpush.bf16.msra.mxu0 %v3851
    %4376 = vmatmul.bf16.gmra.mxu0 %v2741
    %v4377 = vpop.f32.mrf.mxu0
    %v4378 = vadd.f32 %v4364, %v4377
    %v4379 = vpop.f32.mrf.mxu0
    %v4380 = vadd.f32 %v4366, %v4379
    %4381 = vdwg.mxu0
    %4382 = vmatpush.bf16.msra.mxu0 %v3971
    %4383 = vmatpush.bf16.msra.mxu0 %v3963
    %4384 = vmatpush.bf16.msra.mxu0 %v3955
    %4385 = vmatpush.bf16.msra.mxu0 %v3947
    %4386 = vmatpush.bf16.msra.mxu0 %v3939
    %4387 = vmatpush.bf16.msra.mxu0 %v3931
    %4388 = vmatpush.bf16.msra.mxu0 %v3923
    %4389 = vmatpush.bf16.msra.mxu0 %v3915
    %4390 = vmatmul.bf16.gmra.mxu0 %v2742
    %v4391 = vpop.f32.mrf.mxu0
    %v4392 = vadd.f32 %v4378, %v4391
    %v4393 = vpop.f32.mrf.mxu0
    %v4394 = vadd.f32 %v4380, %v4393
    %4395 = vdwg.mxu0
    %4396 = vmatpush.bf16.msra.mxu0 %v4035
    %4397 = vmatpush.bf16.msra.mxu0 %v4027
    %4398 = vmatpush.bf16.msra.mxu0 %v4019
    %4399 = vmatpush.bf16.msra.mxu0 %v4011
    %4400 = vmatpush.bf16.msra.mxu0 %v4003
    %4401 = vmatpush.bf16.msra.mxu0 %v3995
    %4402 = vmatpush.bf16.msra.mxu0 %v3987
    %4403 = vmatpush.bf16.msra.mxu0 %v3979
    %4404 = vmatmul.bf16.gmra.mxu0 %v2743
    %v4405 = vpop.f32.mrf.mxu0
    %v4406 = vadd.f32 %v4392, %v4405
    %v4407 = vpop.f32.mrf.mxu0
    %v4408 = vadd.f32 %v4394, %v4407
    %4409 = vdwg.mxu0
    %4410 = vmatpush.bf16.msra.mxu0 %v3844
    %4411 = vmatpush.bf16.msra.mxu0 %v3836
    %4412 = vmatpush.bf16.msra.mxu0 %v3828
    %4413 = vmatpush.bf16.msra.mxu0 %v3820
    %4414 = vmatpush.bf16.msra.mxu0 %v3812
    %4415 = vmatpush.bf16.msra.mxu0 %v3804
    %4416 = vmatpush.bf16.msra.mxu0 %v3796
    %4417 = vmatpush.bf16.msra.mxu0 %v3788
    %4418 = vmatmul.bf16.gmra.mxu0 %v2740
    %v4419 = vpop.f32.mrf.mxu0
    %v4420 = vadd.f32 %v3004, %v4419
    %v4421 = vpop.f32.mrf.mxu0
    %v4422 = vadd.f32 %v3004, %v4421
    %4423 = vdwg.mxu0
    %4424 = vmatpush.bf16.msra.mxu0 %v3908
    %4425 = vmatpush.bf16.msra.mxu0 %v3900
    %4426 = vmatpush.bf16.msra.mxu0 %v3892
    %4427 = vmatpush.bf16.msra.mxu0 %v3884
    %4428 = vmatpush.bf16.msra.mxu0 %v3876
    %4429 = vmatpush.bf16.msra.mxu0 %v3868
    %4430 = vmatpush.bf16.msra.mxu0 %v3860
    %4431 = vmatpush.bf16.msra.mxu0 %v3852
    %4432 = vmatmul.bf16.gmra.mxu0 %v2741
    %v4433 = vpop.f32.mrf.mxu0
    %v4434 = vadd.f32 %v4420, %v4433
    %v4435 = vpop.f32.mrf.mxu0
    %v4436 = vadd.f32 %v4422, %v4435
    %4437 = vdwg.mxu0
    %4438 = vmatpush.bf16.msra.mxu0 %v3972
    %4439 = vmatpush.bf16.msra.mxu0 %v3964
    %4440 = vmatpush.bf16.msra.mxu0 %v3956
    %4441 = vmatpush.bf16.msra.mxu0 %v3948
    %4442 = vmatpush.bf16.msra.mxu0 %v3940
    %4443 = vmatpush.bf16.msra.mxu0 %v3932
    %4444 = vmatpush.bf16.msra.mxu0 %v3924
    %4445 = vmatpush.bf16.msra.mxu0 %v3916
    %4446 = vmatmul.bf16.gmra.mxu0 %v2742
    %v4447 = vpop.f32.mrf.mxu0
    %v4448 = vadd.f32 %v4434, %v4447
    %v4449 = vpop.f32.mrf.mxu0
    %v4450 = vadd.f32 %v4436, %v4449
    %4451 = vdwg.mxu0
    %4452 = vmatpush.bf16.msra.mxu0 %v4036
    %4453 = vmatpush.bf16.msra.mxu0 %v4028
    %4454 = vmatpush.bf16.msra.mxu0 %v4020
    %4455 = vmatpush.bf16.msra.mxu0 %v4012
    %4456 = vmatpush.bf16.msra.mxu0 %v4004
    %4457 = vmatpush.bf16.msra.mxu0 %v3996
    %4458 = vmatpush.bf16.msra.mxu0 %v3988
    %4459 = vmatpush.bf16.msra.mxu0 %v3980
    %4460 = vmatmul.bf16.gmra.mxu0 %v2743
    %v4461 = vpop.f32.mrf.mxu0
    %v4462 = vadd.f32 %v4448, %v4461
    %v4463 = vpop.f32.mrf.mxu0
    %v4464 = vadd.f32 %v4450, %v4463
    %4465 = vdwg.mxu0
    %4466 = vmatpush.bf16.msra.mxu0 %v3845
    %4467 = vmatpush.bf16.msra.mxu0 %v3837
    %4468 = vmatpush.bf16.msra.mxu0 %v3829
    %4469 = vmatpush.bf16.msra.mxu0 %v3821
    %4470 = vmatpush.bf16.msra.mxu0 %v3813
    %4471 = vmatpush.bf16.msra.mxu0 %v3805
    %4472 = vmatpush.bf16.msra.mxu0 %v3797
    %4473 = vmatpush.bf16.msra.mxu0 %v3789
    %4474 = vmatmul.bf16.gmra.mxu0 %v2740
    %v4475 = vpop.f32.mrf.mxu0
    %v4476 = vadd.f32 %v3005, %v4475
    %v4477 = vpop.f32.mrf.mxu0
    %v4478 = vadd.f32 %v3005, %v4477
    %4479 = vdwg.mxu0
    %4480 = vmatpush.bf16.msra.mxu0 %v3909
    %4481 = vmatpush.bf16.msra.mxu0 %v3901
    %4482 = vmatpush.bf16.msra.mxu0 %v3893
    %4483 = vmatpush.bf16.msra.mxu0 %v3885
    %4484 = vmatpush.bf16.msra.mxu0 %v3877
    %4485 = vmatpush.bf16.msra.mxu0 %v3869
    %4486 = vmatpush.bf16.msra.mxu0 %v3861
    %4487 = vmatpush.bf16.msra.mxu0 %v3853
    %4488 = vmatmul.bf16.gmra.mxu0 %v2741
    %v4489 = vpop.f32.mrf.mxu0
    %v4490 = vadd.f32 %v4476, %v4489
    %v4491 = vpop.f32.mrf.mxu0
    %v4492 = vadd.f32 %v4478, %v4491
    %4493 = vdwg.mxu0
    %4494 = vmatpush.bf16.msra.mxu0 %v3973
    %4495 = vmatpush.bf16.msra.mxu0 %v3965
    %4496 = vmatpush.bf16.msra.mxu0 %v3957
    %4497 = vmatpush.bf16.msra.mxu0 %v3949
    %4498 = vmatpush.bf16.msra.mxu0 %v3941
    %4499 = vmatpush.bf16.msra.mxu0 %v3933
    %4500 = vmatpush.bf16.msra.mxu0 %v3925
    %4501 = vmatpush.bf16.msra.mxu0 %v3917
    %4502 = vmatmul.bf16.gmra.mxu0 %v2742
    %v4503 = vpop.f32.mrf.mxu0
    %v4504 = vadd.f32 %v4490, %v4503
    %v4505 = vpop.f32.mrf.mxu0
    %v4506 = vadd.f32 %v4492, %v4505
    %4507 = vdwg.mxu0
    %4508 = vmatpush.bf16.msra.mxu0 %v4037
    %4509 = vmatpush.bf16.msra.mxu0 %v4029
    %4510 = vmatpush.bf16.msra.mxu0 %v4021
    %4511 = vmatpush.bf16.msra.mxu0 %v4013
    %4512 = vmatpush.bf16.msra.mxu0 %v4005
    %4513 = vmatpush.bf16.msra.mxu0 %v3997
    %4514 = vmatpush.bf16.msra.mxu0 %v3989
    %4515 = vmatpush.bf16.msra.mxu0 %v3981
    %4516 = vmatmul.bf16.gmra.mxu0 %v2743
    %v4517 = vpop.f32.mrf.mxu0
    %v4518 = vadd.f32 %v4504, %v4517
    %v4519 = vpop.f32.mrf.mxu0
    %v4520 = vadd.f32 %v4506, %v4519
    %4521 = vdwg.mxu0
    %4522 = vmatpush.bf16.msra.mxu0 %v3846
    %4523 = vmatpush.bf16.msra.mxu0 %v3838
    %4524 = vmatpush.bf16.msra.mxu0 %v3830
    %4525 = vmatpush.bf16.msra.mxu0 %v3822
    %4526 = vmatpush.bf16.msra.mxu0 %v3814
    %4527 = vmatpush.bf16.msra.mxu0 %v3806
    %4528 = vmatpush.bf16.msra.mxu0 %v3798
    %4529 = vmatpush.bf16.msra.mxu0 %v3790
    %4530 = vmatmul.bf16.gmra.mxu0 %v2740
    %v4531 = vpop.f32.mrf.mxu0
    %v4532 = vadd.f32 %v3006, %v4531
    %v4533 = vpop.f32.mrf.mxu0
    %v4534 = vadd.f32 %v3006, %v4533
    %4535 = vdwg.mxu0
    %4536 = vmatpush.bf16.msra.mxu0 %v3910
    %4537 = vmatpush.bf16.msra.mxu0 %v3902
    %4538 = vmatpush.bf16.msra.mxu0 %v3894
    %4539 = vmatpush.bf16.msra.mxu0 %v3886
    %4540 = vmatpush.bf16.msra.mxu0 %v3878
    %4541 = vmatpush.bf16.msra.mxu0 %v3870
    %4542 = vmatpush.bf16.msra.mxu0 %v3862
    %4543 = vmatpush.bf16.msra.mxu0 %v3854
    %4544 = vmatmul.bf16.gmra.mxu0 %v2741
    %v4545 = vpop.f32.mrf.mxu0
    %v4546 = vadd.f32 %v4532, %v4545
    %v4547 = vpop.f32.mrf.mxu0
    %v4548 = vadd.f32 %v4534, %v4547
    %4549 = vdwg.mxu0
    %4550 = vmatpush.bf16.msra.mxu0 %v3974
    %4551 = vmatpush.bf16.msra.mxu0 %v3966
    %4552 = vmatpush.bf16.msra.mxu0 %v3958
    %4553 = vmatpush.bf16.msra.mxu0 %v3950
    %4554 = vmatpush.bf16.msra.mxu0 %v3942
    %4555 = vmatpush.bf16.msra.mxu0 %v3934
    %4556 = vmatpush.bf16.msra.mxu0 %v3926
    %4557 = vmatpush.bf16.msra.mxu0 %v3918
    %4558 = vmatmul.bf16.gmra.mxu0 %v2742
    %v4559 = vpop.f32.mrf.mxu0
    %v4560 = vadd.f32 %v4546, %v4559
    %v4561 = vpop.f32.mrf.mxu0
    %v4562 = vadd.f32 %v4548, %v4561
    %4563 = vdwg.mxu0
    %4564 = vmatpush.bf16.msra.mxu0 %v4038
    %4565 = vmatpush.bf16.msra.mxu0 %v4030
    %4566 = vmatpush.bf16.msra.mxu0 %v4022
    %4567 = vmatpush.bf16.msra.mxu0 %v4014
    %4568 = vmatpush.bf16.msra.mxu0 %v4006
    %4569 = vmatpush.bf16.msra.mxu0 %v3998
    %4570 = vmatpush.bf16.msra.mxu0 %v3990
    %4571 = vmatpush.bf16.msra.mxu0 %v3982
    %4572 = vmatmul.bf16.gmra.mxu0 %v2743
    %v4573 = vpop.f32.mrf.mxu0
    %v4574 = vadd.f32 %v4560, %v4573
    %v4575 = vpop.f32.mrf.mxu0
    %v4576 = vadd.f32 %v4562, %v4575
    %4577 = vdwg.mxu0
    %4578 = vmatpush.bf16.msra.mxu0 %v3847
    %4579 = vmatpush.bf16.msra.mxu0 %v3839
    %4580 = vmatpush.bf16.msra.mxu0 %v3831
    %4581 = vmatpush.bf16.msra.mxu0 %v3823
    %4582 = vmatpush.bf16.msra.mxu0 %v3815
    %4583 = vmatpush.bf16.msra.mxu0 %v3807
    %4584 = vmatpush.bf16.msra.mxu0 %v3799
    %4585 = vmatpush.bf16.msra.mxu0 %v3791
    %4586 = vmatmul.bf16.gmra.mxu0 %v2740
    %v4587 = vpop.f32.mrf.mxu0
    %v4588 = vadd.f32 %v3007, %v4587
    %v4589 = vpop.f32.mrf.mxu0
    %v4590 = vadd.f32 %v3007, %v4589
    %4591 = vdwg.mxu0
    %4592 = vmatpush.bf16.msra.mxu0 %v3911
    %4593 = vmatpush.bf16.msra.mxu0 %v3903
    %4594 = vmatpush.bf16.msra.mxu0 %v3895
    %4595 = vmatpush.bf16.msra.mxu0 %v3887
    %4596 = vmatpush.bf16.msra.mxu0 %v3879
    %4597 = vmatpush.bf16.msra.mxu0 %v3871
    %4598 = vmatpush.bf16.msra.mxu0 %v3863
    %4599 = vmatpush.bf16.msra.mxu0 %v3855
    %4600 = vmatmul.bf16.gmra.mxu0 %v2741
    %v4601 = vpop.f32.mrf.mxu0
    %v4602 = vadd.f32 %v4588, %v4601
    %v4603 = vpop.f32.mrf.mxu0
    %v4604 = vadd.f32 %v4590, %v4603
    %4605 = vdwg.mxu0
    %4606 = vmatpush.bf16.msra.mxu0 %v3975
    %4607 = vmatpush.bf16.msra.mxu0 %v3967
    %4608 = vmatpush.bf16.msra.mxu0 %v3959
    %4609 = vmatpush.bf16.msra.mxu0 %v3951
    %4610 = vmatpush.bf16.msra.mxu0 %v3943
    %4611 = vmatpush.bf16.msra.mxu0 %v3935
    %4612 = vmatpush.bf16.msra.mxu0 %v3927
    %4613 = vmatpush.bf16.msra.mxu0 %v3919
    %4614 = vmatmul.bf16.gmra.mxu0 %v2742
    %v4615 = vpop.f32.mrf.mxu0
    %v4616 = vadd.f32 %v4602, %v4615
    %v4617 = vpop.f32.mrf.mxu0
    %v4618 = vadd.f32 %v4604, %v4617
    %4619 = vdwg.mxu0
    %4620 = vmatpush.bf16.msra.mxu0 %v4039
    %4621 = vmatpush.bf16.msra.mxu0 %v4031
    %4622 = vmatpush.bf16.msra.mxu0 %v4023
    %4623 = vmatpush.bf16.msra.mxu0 %v4015
    %4624 = vmatpush.bf16.msra.mxu0 %v4007
    %4625 = vmatpush.bf16.msra.mxu0 %v3999
    %4626 = vmatpush.bf16.msra.mxu0 %v3991
    %4627 = vmatpush.bf16.msra.mxu0 %v3983
    %4628 = vmatmul.bf16.gmra.mxu0 %v2743
    %v4629 = vpop.f32.mrf.mxu0
    %v4630 = vadd.f32 %v4616, %v4629
    %v4631 = vpop.f32.mrf.mxu0
    %v4632 = vadd.f32 %v4618, %v4631
    %4633 = vdwg.mxu0
    %4634 = vmatpush.bf16.msra.mxu0 %v3848
    %4635 = vmatpush.bf16.msra.mxu0 %v3840
    %4636 = vmatpush.bf16.msra.mxu0 %v3832
    %4637 = vmatpush.bf16.msra.mxu0 %v3824
    %4638 = vmatpush.bf16.msra.mxu0 %v3816
    %4639 = vmatpush.bf16.msra.mxu0 %v3808
    %4640 = vmatpush.bf16.msra.mxu0 %v3800
    %4641 = vmatpush.bf16.msra.mxu0 %v3792
    %4642 = vmatmul.bf16.gmra.mxu0 %v2740
    %v4643 = vpop.f32.mrf.mxu0
    %v4644 = vadd.f32 %v3008, %v4643
    %v4645 = vpop.f32.mrf.mxu0
    %v4646 = vadd.f32 %v3008, %v4645
    %4647 = vdwg.mxu0
    %4648 = vmatpush.bf16.msra.mxu0 %v3912
    %4649 = vmatpush.bf16.msra.mxu0 %v3904
    %4650 = vmatpush.bf16.msra.mxu0 %v3896
    %4651 = vmatpush.bf16.msra.mxu0 %v3888
    %4652 = vmatpush.bf16.msra.mxu0 %v3880
    %4653 = vmatpush.bf16.msra.mxu0 %v3872
    %4654 = vmatpush.bf16.msra.mxu0 %v3864
    %4655 = vmatpush.bf16.msra.mxu0 %v3856
    %4656 = vmatmul.bf16.gmra.mxu0 %v2741
    %v4657 = vpop.f32.mrf.mxu0
    %v4658 = vadd.f32 %v4644, %v4657
    %v4659 = vpop.f32.mrf.mxu0
    %v4660 = vadd.f32 %v4646, %v4659
    %4661 = vdwg.mxu0
    %4662 = vmatpush.bf16.msra.mxu0 %v3976
    %4663 = vmatpush.bf16.msra.mxu0 %v3968
    %4664 = vmatpush.bf16.msra.mxu0 %v3960
    %4665 = vmatpush.bf16.msra.mxu0 %v3952
    %4666 = vmatpush.bf16.msra.mxu0 %v3944
    %4667 = vmatpush.bf16.msra.mxu0 %v3936
    %4668 = vmatpush.bf16.msra.mxu0 %v3928
    %4669 = vmatpush.bf16.msra.mxu0 %v3920
    %4670 = vmatmul.bf16.gmra.mxu0 %v2742
    %v4671 = vpop.f32.mrf.mxu0
    %v4672 = vadd.f32 %v4658, %v4671
    %v4673 = vpop.f32.mrf.mxu0
    %v4674 = vadd.f32 %v4660, %v4673
    %4675 = vdwg.mxu0
    %4676 = vmatpush.bf16.msra.mxu0 %v4040
    %4677 = vmatpush.bf16.msra.mxu0 %v4032
    %4678 = vmatpush.bf16.msra.mxu0 %v4024
    %4679 = vmatpush.bf16.msra.mxu0 %v4016
    %4680 = vmatpush.bf16.msra.mxu0 %v4008
    %4681 = vmatpush.bf16.msra.mxu0 %v4000
    %4682 = vmatpush.bf16.msra.mxu0 %v3992
    %4683 = vmatpush.bf16.msra.mxu0 %v3984
    %4684 = vmatmul.bf16.gmra.mxu0 %v2743
    %v4685 = vpop.f32.mrf.mxu0
    %v4686 = vadd.f32 %v4672, %v4685
    %v4687 = vpop.f32.mrf.mxu0
    %v4688 = vadd.f32 %v4674, %v4687
    %4689 = vdwg.mxu0
    %4690 = vmatpush.bf16.msra.mxu0 %v3849
    %4691 = vmatpush.bf16.msra.mxu0 %v3841
    %4692 = vmatpush.bf16.msra.mxu0 %v3833
    %4693 = vmatpush.bf16.msra.mxu0 %v3825
    %4694 = vmatpush.bf16.msra.mxu0 %v3817
    %4695 = vmatpush.bf16.msra.mxu0 %v3809
    %4696 = vmatpush.bf16.msra.mxu0 %v3801
    %4697 = vmatpush.bf16.msra.mxu0 %v3793
    %4698 = vmatmul.bf16.gmra.mxu0 %v2740
    %v4699 = vpop.f32.mrf.mxu0
    %v4700 = vadd.f32 %v3009, %v4699
    %v4701 = vpop.f32.mrf.mxu0
    %v4702 = vadd.f32 %v3009, %v4701
    %4703 = vdwg.mxu0
    %4704 = vmatpush.bf16.msra.mxu0 %v3913
    %4705 = vmatpush.bf16.msra.mxu0 %v3905
    %4706 = vmatpush.bf16.msra.mxu0 %v3897
    %4707 = vmatpush.bf16.msra.mxu0 %v3889
    %4708 = vmatpush.bf16.msra.mxu0 %v3881
    %4709 = vmatpush.bf16.msra.mxu0 %v3873
    %4710 = vmatpush.bf16.msra.mxu0 %v3865
    %4711 = vmatpush.bf16.msra.mxu0 %v3857
    %4712 = vmatmul.bf16.gmra.mxu0 %v2741
    %v4713 = vpop.f32.mrf.mxu0
    %v4714 = vadd.f32 %v4700, %v4713
    %v4715 = vpop.f32.mrf.mxu0
    %v4716 = vadd.f32 %v4702, %v4715
    %4717 = vdwg.mxu0
    %4718 = vmatpush.bf16.msra.mxu0 %v3977
    %4719 = vmatpush.bf16.msra.mxu0 %v3969
    %4720 = vmatpush.bf16.msra.mxu0 %v3961
    %4721 = vmatpush.bf16.msra.mxu0 %v3953
    %4722 = vmatpush.bf16.msra.mxu0 %v3945
    %4723 = vmatpush.bf16.msra.mxu0 %v3937
    %4724 = vmatpush.bf16.msra.mxu0 %v3929
    %4725 = vmatpush.bf16.msra.mxu0 %v3921
    %4726 = vmatmul.bf16.gmra.mxu0 %v2742
    %v4727 = vpop.f32.mrf.mxu0
    %v4728 = vadd.f32 %v4714, %v4727
    %v4729 = vpop.f32.mrf.mxu0
    %v4730 = vadd.f32 %v4716, %v4729
    %4731 = vdwg.mxu0
    %4732 = vmatpush.bf16.msra.mxu0 %v4041
    %4733 = vmatpush.bf16.msra.mxu0 %v4033
    %4734 = vmatpush.bf16.msra.mxu0 %v4025
    %4735 = vmatpush.bf16.msra.mxu0 %v4017
    %4736 = vmatpush.bf16.msra.mxu0 %v4009
    %4737 = vmatpush.bf16.msra.mxu0 %v4001
    %4738 = vmatpush.bf16.msra.mxu0 %v3993
    %4739 = vmatpush.bf16.msra.mxu0 %v3985
    %4740 = vmatmul.bf16.gmra.mxu0 %v2743
    %v4741 = vpop.f32.mrf.mxu0
    %v4742 = vadd.f32 %v4728, %v4741
    %v4743 = vpop.f32.mrf.mxu0
    %v4744 = vadd.f32 %v4730, %v4743
    %4745 = vdwg.mxu0
    %v4746 = vmul.f32 %v4350, %v4350
    %v4747 = vmul.f32 %v4406, %v4406
    %v4748 = vmul.f32 %v4462, %v4462
    %v4749 = vmul.f32 %v4518, %v4518
    %v4750 = vmul.f32 %v4574, %v4574
    %v4751 = vmul.f32 %v4630, %v4630
    %v4752 = vmul.f32 %v4686, %v4686
    %v4753 = vmul.f32 %v4742, %v4742
    %v4754 = vmul.f32 %v4352, %v4352
    %v4755 = vmul.f32 %v4408, %v4408
    %v4756 = vmul.f32 %v4464, %v4464
    %v4757 = vmul.f32 %v4520, %v4520
    %v4758 = vmul.f32 %v4576, %v4576
    %v4759 = vmul.f32 %v4632, %v4632
    %v4760 = vmul.f32 %v4688, %v4688
    %v4761 = vmul.f32 %v4744, %v4744
    %v4762 = vmul.f32 %v4350, %v4746
    %v4763 = vmul.f32 %v4406, %v4747
    %v4764 = vmul.f32 %v4462, %v4748
    %v4765 = vmul.f32 %v4518, %v4749
    %v4766 = vmul.f32 %v4574, %v4750
    %v4767 = vmul.f32 %v4630, %v4751
    %v4768 = vmul.f32 %v4686, %v4752
    %v4769 = vmul.f32 %v4742, %v4753
    %v4770 = vmul.f32 %v4352, %v4754
    %v4771 = vmul.f32 %v4408, %v4755
    %v4772 = vmul.f32 %v4464, %v4756
    %v4773 = vmul.f32 %v4520, %v4757
    %v4774 = vmul.f32 %v4576, %v4758
    %v4775 = vmul.f32 %v4632, %v4759
    %v4776 = vmul.f32 %v4688, %v4760
    %v4777 = vmul.f32 %v4744, %v4761
    %v4778 = vmul.f32 %v4762, 0.044715
    %v4779 = vmul.f32 %v4763, 0.044715
    %v4780 = vmul.f32 %v4764, 0.044715
    %v4781 = vmul.f32 %v4765, 0.044715
    %v4782 = vmul.f32 %v4766, 0.044715
    %v4783 = vmul.f32 %v4767, 0.044715
    %v4784 = vmul.f32 %v4768, 0.044715
    %v4785 = vmul.f32 %v4769, 0.044715
    %v4786 = vmul.f32 %v4770, 0.044715
    %v4787 = vmul.f32 %v4771, 0.044715
    %v4788 = vmul.f32 %v4772, 0.044715
    %v4789 = vmul.f32 %v4773, 0.044715
    %v4790 = vmul.f32 %v4774, 0.044715
    %v4791 = vmul.f32 %v4775, 0.044715
    %v4792 = vmul.f32 %v4776, 0.044715
    %v4793 = vmul.f32 %v4777, 0.044715
    %v4794 = vadd.f32 %v4350, %v4778
    %v4795 = vadd.f32 %v4406, %v4779
    %v4796 = vadd.f32 %v4462, %v4780
    %v4797 = vadd.f32 %v4518, %v4781
    %v4798 = vadd.f32 %v4574, %v4782
    %v4799 = vadd.f32 %v4630, %v4783
    %v4800 = vadd.f32 %v4686, %v4784
    %v4801 = vadd.f32 %v4742, %v4785
    %v4802 = vadd.f32 %v4352, %v4786
    %v4803 = vadd.f32 %v4408, %v4787
    %v4804 = vadd.f32 %v4464, %v4788
    %v4805 = vadd.f32 %v4520, %v4789
    %v4806 = vadd.f32 %v4576, %v4790
    %v4807 = vadd.f32 %v4632, %v4791
    %v4808 = vadd.f32 %v4688, %v4792
    %v4809 = vadd.f32 %v4744, %v4793
    %v4810 = vmul.f32 %v4794, 0.7978846
    %v4811 = vmul.f32 %v4795, 0.7978846
    %v4812 = vmul.f32 %v4796, 0.7978846
    %v4813 = vmul.f32 %v4797, 0.7978846
    %v4814 = vmul.f32 %v4798, 0.7978846
    %v4815 = vmul.f32 %v4799, 0.7978846
    %v4816 = vmul.f32 %v4800, 0.7978846
    %v4817 = vmul.f32 %v4801, 0.7978846
    %v4818 = vmul.f32 %v4802, 0.7978846
    %v4819 = vmul.f32 %v4803, 0.7978846
    %v4820 = vmul.f32 %v4804, 0.7978846
    %v4821 = vmul.f32 %v4805, 0.7978846
    %v4822 = vmul.f32 %v4806, 0.7978846
    %v4823 = vmul.f32 %v4807, 0.7978846
    %v4824 = vmul.f32 %v4808, 0.7978846
    %v4825 = vmul.f32 %v4809, 0.7978846
    %v4826 = vtanh.pop %v4810
    %v4827 = vtanh.pop %v4811
    %v4828 = vtanh.pop %v4812
    %v4829 = vtanh.pop %v4813
    %v4830 = vtanh.pop %v4814
    %v4831 = vtanh.pop %v4815
    %v4832 = vtanh.pop %v4816
    %v4833 = vtanh.pop %v4817
    %v4834 = vtanh.pop %v4818
    %v4835 = vtanh.pop %v4819
    %v4836 = vtanh.pop %v4820
    %v4837 = vtanh.pop %v4821
    %v4838 = vtanh.pop %v4822
    %v4839 = vtanh.pop %v4823
    %v4840 = vtanh.pop %v4824
    %v4841 = vtanh.pop %v4825
    %v4842 = vadd.f32 %v4826, 1.0
    %v4843 = vadd.f32 %v4827, 1.0
    %v4844 = vadd.f32 %v4828, 1.0
    %v4845 = vadd.f32 %v4829, 1.0
    %v4846 = vadd.f32 %v4830, 1.0
    %v4847 = vadd.f32 %v4831, 1.0
    %v4848 = vadd.f32 %v4832, 1.0
    %v4849 = vadd.f32 %v4833, 1.0
    %v4850 = vadd.f32 %v4834, 1.0
    %v4851 = vadd.f32 %v4835, 1.0
    %v4852 = vadd.f32 %v4836, 1.0
    %v4853 = vadd.f32 %v4837, 1.0
    %v4854 = vadd.f32 %v4838, 1.0
    %v4855 = vadd.f32 %v4839, 1.0
    %v4856 = vadd.f32 %v4840, 1.0
    %v4857 = vadd.f32 %v4841, 1.0
    %v4858 = vmul.f32 %v4842, 0.5
    %v4859 = vmul.f32 %v4843, 0.5
    %v4860 = vmul.f32 %v4844, 0.5
    %v4861 = vmul.f32 %v4845, 0.5
    %v4862 = vmul.f32 %v4846, 0.5
    %v4863 = vmul.f32 %v4847, 0.5
    %v4864 = vmul.f32 %v4848, 0.5
    %v4865 = vmul.f32 %v4849, 0.5
    %v4866 = vmul.f32 %v4850, 0.5
    %v4867 = vmul.f32 %v4851, 0.5
    %v4868 = vmul.f32 %v4852, 0.5
    %v4869 = vmul.f32 %v4853, 0.5
    %v4870 = vmul.f32 %v4854, 0.5
    %v4871 = vmul.f32 %v4855, 0.5
    %v4872 = vmul.f32 %v4856, 0.5
    %v4873 = vmul.f32 %v4857, 0.5
    %v4874 = vmul.f32 %v4350, %v4858
    %v4875 = vmul.f32 %v4406, %v4859
    %v4876 = vmul.f32 %v4462, %v4860
    %v4877 = vmul.f32 %v4518, %v4861
    %v4878 = vmul.f32 %v4574, %v4862
    %v4879 = vmul.f32 %v4630, %v4863
    %v4880 = vmul.f32 %v4686, %v4864
    %v4881 = vmul.f32 %v4742, %v4865
    %v4882 = vmul.f32 %v4352, %v4866
    %v4883 = vmul.f32 %v4408, %v4867
    %v4884 = vmul.f32 %v4464, %v4868
    %v4885 = vmul.f32 %v4520, %v4869
    %v4886 = vmul.f32 %v4576, %v4870
    %v4887 = vmul.f32 %v4632, %v4871
    %v4888 = vmul.f32 %v4688, %v4872
    %v4889 = vmul.f32 %v4744, %v4873
    %v4890 = vpack.c.bf16 %v4882, %v4874
    %v4891 = vpack.c.bf16 %v4883, %v4875
    %v4892 = vpack.c.bf16 %v4884, %v4876
    %v4893 = vpack.c.bf16 %v4885, %v4877
    %v4894 = vpack.c.bf16 %v4886, %v4878
    %v4895 = vpack.c.bf16 %v4887, %v4879
    %v4896 = vpack.c.bf16 %v4888, %v4880
    %v4897 = vpack.c.bf16 %v4889, %v4881
    %v4898 = vld [vmem:[%s7] sm:$0xf]
    %v4899 = vld [vmem:[%s7 + $0x4] sm:$0xf]
    %v4900 = vld [vmem:[%s7 + $0x8] sm:$0xf]
    %v4901 = vld [vmem:[%s7 + $0xc] sm:$0xf]
    %v4902 = vld [vmem:[%s7 + $0x10] sm:$0xf]
    %v4903 = vld [vmem:[%s7 + $0x14] sm:$0xf]
    %v4904 = vld [vmem:[%s7 + $0x18] sm:$0xf]
    %v4905 = vld [vmem:[%s7 + $0x1c] sm:$0xf]
    %v4906 = vld [vmem:[%s7 + $0x20] sm:$0xf]
    %v4907 = vld [vmem:[%s7 + $0x24] sm:$0xf]
    %v4908 = vld [vmem:[%s7 + $0x28] sm:$0xf]
    %v4909 = vld [vmem:[%s7 + $0x2c] sm:$0xf]
    %v4910 = vld [vmem:[%s7 + $0x30] sm:$0xf]
    %v4911 = vld [vmem:[%s7 + $0x34] sm:$0xf]
    %v4912 = vld [vmem:[%s7 + $0x38] sm:$0xf]
    %v4913 = vld [vmem:[%s7 + $0x3c] sm:$0xf]
    %v4914 = vld [vmem:[%s7 + $0x40] sm:$0xf]
    %v4915 = vld [vmem:[%s7 + $0x44] sm:$0xf]
    %v4916 = vld [vmem:[%s7 + $0x48] sm:$0xf]
    %v4917 = vld [vmem:[%s7 + $0x4c] sm:$0xf]
    %v4918 = vld [vmem:[%s7 + $0x50] sm:$0xf]
    %v4919 = vld [vmem:[%s7 + $0x54] sm:$0xf]
    %v4920 = vld [vmem:[%s7 + $0x58] sm:$0xf]
    %v4921 = vld [vmem:[%s7 + $0x5c] sm:$0xf]
    %v4922 = vld [vmem:[%s7 + $0x60] sm:$0xf]
    %v4923 = vld [vmem:[%s7 + $0x64] sm:$0xf]
    %v4924 = vld [vmem:[%s7 + $0x68] sm:$0xf]
    %v4925 = vld [vmem:[%s7 + $0x6c] sm:$0xf]
    %v4926 = vld [vmem:[%s7 + $0x70] sm:$0xf]
    %v4927 = vld [vmem:[%s7 + $0x74] sm:$0xf]
    %v4928 = vld [vmem:[%s7 + $0x78] sm:$0xf]
    %v4929 = vld [vmem:[%s7 + $0x7c] sm:$0xf]
    %v4930 = vld [vmem:[%s7 + $0x80] sm:$0xf]
    %v4931 = vld [vmem:[%s7 + $0x84] sm:$0xf]
    %v4932 = vld [vmem:[%s7 + $0x88] sm:$0xf]
    %v4933 = vld [vmem:[%s7 + $0x8c] sm:$0xf]
    %v4934 = vld [vmem:[%s7 + $0x90] sm:$0xf]
    %v4935 = vld [vmem:[%s7 + $0x94] sm:$0xf]
    %v4936 = vld [vmem:[%s7 + $0x98] sm:$0xf]
    %v4937 = vld [vmem:[%s7 + $0x9c] sm:$0xf]
    %v4938 = vld [vmem:[%s7 + $0xa0] sm:$0xf]
    %v4939 = vld [vmem:[%s7 + $0xa4] sm:$0xf]
    %v4940 = vld [vmem:[%s7 + $0xa8] sm:$0xf]
    %v4941 = vld [vmem:[%s7 + $0xac] sm:$0xf]
    %v4942 = vld [vmem:[%s7 + $0xb0] sm:$0xf]
    %v4943 = vld [vmem:[%s7 + $0xb4] sm:$0xf]
    %v4944 = vld [vmem:[%s7 + $0xb8] sm:$0xf]
    %v4945 = vld [vmem:[%s7 + $0xbc] sm:$0xf]
    %v4946 = vld [vmem:[%s7 + $0xc0] sm:$0xf]
    %v4947 = vld [vmem:[%s7 + $0xc4] sm:$0xf]
    %v4948 = vld [vmem:[%s7 + $0xc8] sm:$0xf]
    %v4949 = vld [vmem:[%s7 + $0xcc] sm:$0xf]
    %v4950 = vld [vmem:[%s7 + $0xd0] sm:$0xf]
    %v4951 = vld [vmem:[%s7 + $0xd4] sm:$0xf]
    %v4952 = vld [vmem:[%s7 + $0xd8] sm:$0xf]
    %v4953 = vld [vmem:[%s7 + $0xdc] sm:$0xf]
    %v4954 = vld [vmem:[%s7 + $0xe0] sm:$0xf]
    %v4955 = vld [vmem:[%s7 + $0xe4] sm:$0xf]
    %v4956 = vld [vmem:[%s7 + $0xe8] sm:$0xf]
    %v4957 = vld [vmem:[%s7 + $0xec] sm:$0xf]
    %v4958 = vld [vmem:[%s7 + $0xf0] sm:$0xf]
    %v4959 = vld [vmem:[%s7 + $0xf4] sm:$0xf]
    %v4960 = vld [vmem:[%s7 + $0xf8] sm:$0xf]
    %v4961 = vld [vmem:[%s7 + $0xfc] sm:$0xf]
    %v4962 = vld [vmem:[%s7 + $0x100] sm:$0xf]
    %v4963 = vld [vmem:[%s7 + $0x104] sm:$0xf]
    %v4964 = vld [vmem:[%s7 + $0x108] sm:$0xf]
    %v4965 = vld [vmem:[%s7 + $0x10c] sm:$0xf]
    %v4966 = vld [vmem:[%s7 + $0x110] sm:$0xf]
    %v4967 = vld [vmem:[%s7 + $0x114] sm:$0xf]
    %v4968 = vld [vmem:[%s7 + $0x118] sm:$0xf]
    %v4969 = vld [vmem:[%s7 + $0x11c] sm:$0xf]
    %v4970 = vld [vmem:[%s7 + $0x120] sm:$0xf]
    %v4971 = vld [vmem:[%s7 + $0x124] sm:$0xf]
    %v4972 = vld [vmem:[%s7 + $0x128] sm:$0xf]
    %v4973 = vld [vmem:[%s7 + $0x12c] sm:$0xf]
    %v4974 = vld [vmem:[%s7 + $0x130] sm:$0xf]
    %v4975 = vld [vmem:[%s7 + $0x134] sm:$0xf]
    %v4976 = vld [vmem:[%s7 + $0x138] sm:$0xf]
    %v4977 = vld [vmem:[%s7 + $0x13c] sm:$0xf]
    %v4978 = vld [vmem:[%s7 + $0x140] sm:$0xf]
    %v4979 = vld [vmem:[%s7 + $0x144] sm:$0xf]
    %v4980 = vld [vmem:[%s7 + $0x148] sm:$0xf]
    %v4981 = vld [vmem:[%s7 + $0x14c] sm:$0xf]
    %v4982 = vld [vmem:[%s7 + $0x150] sm:$0xf]
    %v4983 = vld [vmem:[%s7 + $0x154] sm:$0xf]
    %v4984 = vld [vmem:[%s7 + $0x158] sm:$0xf]
    %v4985 = vld [vmem:[%s7 + $0x15c] sm:$0xf]
    %v4986 = vld [vmem:[%s7 + $0x160] sm:$0xf]
    %v4987 = vld [vmem:[%s7 + $0x164] sm:$0xf]
    %v4988 = vld [vmem:[%s7 + $0x168] sm:$0xf]
    %v4989 = vld [vmem:[%s7 + $0x16c] sm:$0xf]
    %v4990 = vld [vmem:[%s7 + $0x170] sm:$0xf]
    %v4991 = vld [vmem:[%s7 + $0x174] sm:$0xf]
    %v4992 = vld [vmem:[%s7 + $0x178] sm:$0xf]
    %v4993 = vld [vmem:[%s7 + $0x17c] sm:$0xf]
    %v4994 = vld [vmem:[%s7 + $0x180] sm:$0xf]
    %v4995 = vld [vmem:[%s7 + $0x184] sm:$0xf]
    %v4996 = vld [vmem:[%s7 + $0x188] sm:$0xf]
    %v4997 = vld [vmem:[%s7 + $0x18c] sm:$0xf]
    %v4998 = vld [vmem:[%s7 + $0x190] sm:$0xf]
    %v4999 = vld [vmem:[%s7 + $0x194] sm:$0xf]
    %v5000 = vld [vmem:[%s7 + $0x198] sm:$0xf]
    %v5001 = vld [vmem:[%s7 + $0x19c] sm:$0xf]
    %v5002 = vld [vmem:[%s7 + $0x1a0] sm:$0xf]
    %v5003 = vld [vmem:[%s7 + $0x1a4] sm:$0xf]
    %v5004 = vld [vmem:[%s7 + $0x1a8] sm:$0xf]
    %v5005 = vld [vmem:[%s7 + $0x1ac] sm:$0xf]
    %v5006 = vld [vmem:[%s7 + $0x1b0] sm:$0xf]
    %v5007 = vld [vmem:[%s7 + $0x1b4] sm:$0xf]
    %v5008 = vld [vmem:[%s7 + $0x1b8] sm:$0xf]
    %v5009 = vld [vmem:[%s7 + $0x1bc] sm:$0xf]
    %v5010 = vld [vmem:[%s7 + $0x1c0] sm:$0xf]
    %v5011 = vld [vmem:[%s7 + $0x1c4] sm:$0xf]
    %v5012 = vld [vmem:[%s7 + $0x1c8] sm:$0xf]
    %v5013 = vld [vmem:[%s7 + $0x1cc] sm:$0xf]
    %v5014 = vld [vmem:[%s7 + $0x1d0] sm:$0xf]
    %v5015 = vld [vmem:[%s7 + $0x1d4] sm:$0xf]
    %v5016 = vld [vmem:[%s7 + $0x1d8] sm:$0xf]
    %v5017 = vld [vmem:[%s7 + $0x1dc] sm:$0xf]
    %v5018 = vld [vmem:[%s7 + $0x1e0] sm:$0xf]
    %v5019 = vld [vmem:[%s7 + $0x1e4] sm:$0xf]
    %v5020 = vld [vmem:[%s7 + $0x1e8] sm:$0xf]
    %v5021 = vld [vmem:[%s7 + $0x1ec] sm:$0xf]
    %v5022 = vld [vmem:[%s7 + $0x1f0] sm:$0xf]
    %v5023 = vld [vmem:[%s7 + $0x1f4] sm:$0xf]
    %v5024 = vld [vmem:[%s7 + $0x1f8] sm:$0xf]
    %v5025 = vld [vmem:[%s7 + $0x1fc] sm:$0xf]
    %v5026 = vld [vmem:[%s8] sm:$0x1]
    %v5028 = vperm.slane %v5026, 0
    %v5158 = vunpack.c.l.b16 %v4898
    %v5159 = vunpack.c.l.b16 %v4899
    %v5160 = vunpack.c.l.b16 %v4900
    %v5161 = vunpack.c.l.b16 %v4901
    %v5162 = vunpack.c.l.b16 %v4902
    %v5163 = vunpack.c.l.b16 %v4903
    %v5164 = vunpack.c.l.b16 %v4904
    %v5165 = vunpack.c.l.b16 %v4905
    %v5166 = vunpack.c.l.b16 %v4906
    %v5167 = vunpack.c.l.b16 %v4907
    %v5168 = vunpack.c.l.b16 %v4908
    %v5169 = vunpack.c.l.b16 %v4909
    %v5170 = vunpack.c.l.b16 %v4910
    %v5171 = vunpack.c.l.b16 %v4911
    %v5172 = vunpack.c.l.b16 %v4912
    %v5173 = vunpack.c.l.b16 %v4913
    %v5174 = vunpack.c.l.b16 %v4914
    %v5175 = vunpack.c.l.b16 %v4915
    %v5176 = vunpack.c.l.b16 %v4916
    %v5177 = vunpack.c.l.b16 %v4917
    %v5178 = vunpack.c.l.b16 %v4918
    %v5179 = vunpack.c.l.b16 %v4919
    %v5180 = vunpack.c.l.b16 %v4920
    %v5181 = vunpack.c.l.b16 %v4921
    %v5182 = vunpack.c.l.b16 %v4922
    %v5183 = vunpack.c.l.b16 %v4923
    %v5184 = vunpack.c.l.b16 %v4924
    %v5185 = vunpack.c.l.b16 %v4925
    %v5186 = vunpack.c.l.b16 %v4926
    %v5187 = vunpack.c.l.b16 %v4927
    %v5188 = vunpack.c.l.b16 %v4928
    %v5189 = vunpack.c.l.b16 %v4929
    %v5190 = vunpack.c.l.b16 %v4930
    %v5191 = vunpack.c.l.b16 %v4931
    %v5192 = vunpack.c.l.b16 %v4932
    %v5193 = vunpack.c.l.b16 %v4933
    %v5194 = vunpack.c.l.b16 %v4934
    %v5195 = vunpack.c.l.b16 %v4935
    %v5196 = vunpack.c.l.b16 %v4936
    %v5197 = vunpack.c.l.b16 %v4937
    %v5198 = vunpack.c.l.b16 %v4938
    %v5199 = vunpack.c.l.b16 %v4939
    %v5200 = vunpack.c.l.b16 %v4940
    %v5201 = vunpack.c.l.b16 %v4941
    %v5202 = vunpack.c.l.b16 %v4942
    %v5203 = vunpack.c.l.b16 %v4943
    %v5204 = vunpack.c.l.b16 %v4944
    %v5205 = vunpack.c.l.b16 %v4945
    %v5206 = vunpack.c.l.b16 %v4946
    %v5207 = vunpack.c.l.b16 %v4947
    %v5208 = vunpack.c.l.b16 %v4948
    %v5209 = vunpack.c.l.b16 %v4949
    %v5210 = vunpack.c.l.b16 %v4950
    %v5211 = vunpack.c.l.b16 %v4951
    %v5212 = vunpack.c.l.b16 %v4952
    %v5213 = vunpack.c.l.b16 %v4953
    %v5214 = vunpack.c.l.b16 %v4954
    %v5215 = vunpack.c.l.b16 %v4955
    %v5216 = vunpack.c.l.b16 %v4956
    %v5217 = vunpack.c.l.b16 %v4957
    %v5218 = vunpack.c.l.b16 %v4958
    %v5219 = vunpack.c.l.b16 %v4959
    %v5220 = vunpack.c.l.b16 %v4960
    %v5221 = vunpack.c.l.b16 %v4961
    %v5222 = vunpack.c.l.b16 %v4962
    %v5223 = vunpack.c.l.b16 %v4963
    %v5224 = vunpack.c.l.b16 %v4964
    %v5225 = vunpack.c.l.b16 %v4965
    %v5226 = vunpack.c.l.b16 %v4966
    %v5227 = vunpack.c.l.b16 %v4967
    %v5228 = vunpack.c.l.b16 %v4968
    %v5229 = vunpack.c.l.b16 %v4969
    %v5230 = vunpack.c.l.b16 %v4970
    %v5231 = vunpack.c.l.b16 %v4971
    %v5232 = vunpack.c.l.b16 %v4972
    %v5233 = vunpack.c.l.b16 %v4973
    %v5234 = vunpack.c.l.b16 %v4974
    %v5235 = vunpack.c.l.b16 %v4975
    %v5236 = vunpack.c.l.b16 %v4976
    %v5237 = vunpack.c.l.b16 %v4977
    %v5238 = vunpack.c.l.b16 %v4978
    %v5239 = vunpack.c.l.b16 %v4979
    %v5240 = vunpack.c.l.b16 %v4980
    %v5241 = vunpack.c.l.b16 %v4981
    %v5242 = vunpack.c.l.b16 %v4982
    %v5243 = vunpack.c.l.b16 %v4983
    %v5244 = vunpack.c.l.b16 %v4984
    %v5245 = vunpack.c.l.b16 %v4985
    %v5246 = vunpack.c.l.b16 %v4986
    %v5247 = vunpack.c.l.b16 %v4987
    %v5248 = vunpack.c.l.b16 %v4988
    %v5249 = vunpack.c.l.b16 %v4989
    %v5250 = vunpack.c.l.b16 %v4990
    %v5251 = vunpack.c.l.b16 %v4991
    %v5252 = vunpack.c.l.b16 %v4992
    %v5253 = vunpack.c.l.b16 %v4993
    %v5254 = vunpack.c.l.b16 %v4994
    %v5255 = vunpack.c.l.b16 %v4995
    %v5256 = vunpack.c.l.b16 %v4996
    %v5257 = vunpack.c.l.b16 %v4997
    %v5258 = vunpack.c.l.b16 %v4998
    %v5259 = vunpack.c.l.b16 %v4999
    %v5260 = vunpack.c.l.b16 %v5000
    %v5261 = vunpack.c.l.b16 %v5001
    %v5262 = vunpack.c.l.b16 %v5002
    %v5263 = vunpack.c.l.b16 %v5003
    %v5264 = vunpack.c.l.b16 %v5004
    %v5265 = vunpack.c.l.b16 %v5005
    %v5266 = vunpack.c.l.b16 %v5006
    %v5267 = vunpack.c.l.b16 %v5007
    %v5268 = vunpack.c.l.b16 %v5008
    %v5269 = vunpack.c.l.b16 %v5009
    %v5270 = vunpack.c.l.b16 %v5010
    %v5271 = vunpack.c.l.b16 %v5011
    %v5272 = vunpack.c.l.b16 %v5012
    %v5273 = vunpack.c.l.b16 %v5013
    %v5274 = vunpack.c.l.b16 %v5014
    %v5275 = vunpack.c.l.b16 %v5015
    %v5276 = vunpack.c.l.b16 %v5016
    %v5277 = vunpack.c.l.b16 %v5017
    %v5278 = vunpack.c.l.b16 %v5018
    %v5279 = vunpack.c.l.b16 %v5019
    %v5280 = vunpack.c.l.b16 %v5020
    %v5281 = vunpack.c.l.b16 %v5021
    %v5282 = vunpack.c.l.b16 %v5022
    %v5283 = vunpack.c.l.b16 %v5023
    %v5284 = vunpack.c.l.b16 %v5024
    %v5285 = vunpack.c.l.b16 %v5025
    %v5286 = vpack.c.b16 %v5159, %v5158
    %v5287 = vpack.c.b16 %v5161, %v5160
    %v5288 = vpack.c.b16 %v5163, %v5162
    %v5289 = vpack.c.b16 %v5165, %v5164
    %v5290 = vpack.c.b16 %v5167, %v5166
    %v5291 = vpack.c.b16 %v5169, %v5168
    %v5292 = vpack.c.b16 %v5171, %v5170
    %v5293 = vpack.c.b16 %v5173, %v5172
    %v5294 = vpack.c.b16 %v5175, %v5174
    %v5295 = vpack.c.b16 %v5177, %v5176
    %v5296 = vpack.c.b16 %v5179, %v5178
    %v5297 = vpack.c.b16 %v5181, %v5180
    %v5298 = vpack.c.b16 %v5183, %v5182
    %v5299 = vpack.c.b16 %v5185, %v5184
    %v5300 = vpack.c.b16 %v5187, %v5186
    %v5301 = vpack.c.b16 %v5189, %v5188
    %v5302 = vpack.c.b16 %v5191, %v5190
    %v5303 = vpack.c.b16 %v5193, %v5192
    %v5304 = vpack.c.b16 %v5195, %v5194
    %v5305 = vpack.c.b16 %v5197, %v5196
    %v5306 = vpack.c.b16 %v5199, %v5198
    %v5307 = vpack.c.b16 %v5201, %v5200
    %v5308 = vpack.c.b16 %v5203, %v5202
    %v5309 = vpack.c.b16 %v5205, %v5204
    %v5310 = vpack.c.b16 %v5207, %v5206
    %v5311 = vpack.c.b16 %v5209, %v5208
    %v5312 = vpack.c.b16 %v5211, %v5210
    %v5313 = vpack.c.b16 %v5213, %v5212
    %v5314 = vpack.c.b16 %v5215, %v5214
    %v5315 = vpack.c.b16 %v5217, %v5216
    %v5316 = vpack.c.b16 %v5219, %v5218
    %v5317 = vpack.c.b16 %v5221, %v5220
    %v5318 = vpack.c.b16 %v5223, %v5222
    %v5319 = vpack.c.b16 %v5225, %v5224
    %v5320 = vpack.c.b16 %v5227, %v5226
    %v5321 = vpack.c.b16 %v5229, %v5228
    %v5322 = vpack.c.b16 %v5231, %v5230
    %v5323 = vpack.c.b16 %v5233, %v5232
    %v5324 = vpack.c.b16 %v5235, %v5234
    %v5325 = vpack.c.b16 %v5237, %v5236
    %v5326 = vpack.c.b16 %v5239, %v5238
    %v5327 = vpack.c.b16 %v5241, %v5240
    %v5328 = vpack.c.b16 %v5243, %v5242
    %v5329 = vpack.c.b16 %v5245, %v5244
    %v5330 = vpack.c.b16 %v5247, %v5246
    %v5331 = vpack.c.b16 %v5249, %v5248
    %v5332 = vpack.c.b16 %v5251, %v5250
    %v5333 = vpack.c.b16 %v5253, %v5252
    %v5334 = vpack.c.b16 %v5255, %v5254
    %v5335 = vpack.c.b16 %v5257, %v5256
    %v5336 = vpack.c.b16 %v5259, %v5258
    %v5337 = vpack.c.b16 %v5261, %v5260
    %v5338 = vpack.c.b16 %v5263, %v5262
    %v5339 = vpack.c.b16 %v5265, %v5264
    %v5340 = vpack.c.b16 %v5267, %v5266
    %v5341 = vpack.c.b16 %v5269, %v5268
    %v5342 = vpack.c.b16 %v5271, %v5270
    %v5343 = vpack.c.b16 %v5273, %v5272
    %v5344 = vpack.c.b16 %v5275, %v5274
    %v5345 = vpack.c.b16 %v5277, %v5276
    %v5346 = vpack.c.b16 %v5279, %v5278
    %v5347 = vpack.c.b16 %v5281, %v5280
    %v5348 = vpack.c.b16 %v5283, %v5282
    %v5349 = vpack.c.b16 %v5285, %v5284
    %5414 = vmatpush.bf16.msra.mxu0 %v5293
    %5415 = vmatpush.bf16.msra.mxu0 %v5292
    %5416 = vmatpush.bf16.msra.mxu0 %v5291
    %5417 = vmatpush.bf16.msra.mxu0 %v5290
    %5418 = vmatpush.bf16.msra.mxu0 %v5289
    %5419 = vmatpush.bf16.msra.mxu0 %v5288
    %5420 = vmatpush.bf16.msra.mxu0 %v5287
    %5421 = vmatpush.bf16.msra.mxu0 %v5286
    %5422 = vmatmul.bf16.gmra.mxu0 %v4890
    %v5423 = vpop.f32.mrf.mxu0
    %v5424 = vadd.f32 %v5028, %v5423
    %v5425 = vpop.f32.mrf.mxu0
    %v5426 = vadd.f32 %v5028, %v5425
    %5427 = vdwg.mxu0
    %5428 = vmatpush.bf16.msra.mxu0 %v5301
    %5429 = vmatpush.bf16.msra.mxu0 %v5300
    %5430 = vmatpush.bf16.msra.mxu0 %v5299
    %5431 = vmatpush.bf16.msra.mxu0 %v5298
    %5432 = vmatpush.bf16.msra.mxu0 %v5297
    %5433 = vmatpush.bf16.msra.mxu0 %v5296
    %5434 = vmatpush.bf16.msra.mxu0 %v5295
    %5435 = vmatpush.bf16.msra.mxu0 %v5294
    %5436 = vmatmul.bf16.gmra.mxu0 %v4891
    %v5437 = vpop.f32.mrf.mxu0
    %v5438 = vadd.f32 %v5424, %v5437
    %v5439 = vpop.f32.mrf.mxu0
    %v5440 = vadd.f32 %v5426, %v5439
    %5441 = vdwg.mxu0
    %5442 = vmatpush.bf16.msra.mxu0 %v5309
    %5443 = vmatpush.bf16.msra.mxu0 %v5308
    %5444 = vmatpush.bf16.msra.mxu0 %v5307
    %5445 = vmatpush.bf16.msra.mxu0 %v5306
    %5446 = vmatpush.bf16.msra.mxu0 %v5305
    %5447 = vmatpush.bf16.msra.mxu0 %v5304
    %5448 = vmatpush.bf16.msra.mxu0 %v5303
    %5449 = vmatpush.bf16.msra.mxu0 %v5302
    %5450 = vmatmul.bf16.gmra.mxu0 %v4892
    %v5451 = vpop.f32.mrf.mxu0
    %v5452 = vadd.f32 %v5438, %v5451
    %v5453 = vpop.f32.mrf.mxu0
    %v5454 = vadd.f32 %v5440, %v5453
    %5455 = vdwg.mxu0
    %5456 = vmatpush.bf16.msra.mxu0 %v5317
    %5457 = vmatpush.bf16.msra.mxu0 %v5316
    %5458 = vmatpush.bf16.msra.mxu0 %v5315
    %5459 = vmatpush.bf16.msra.mxu0 %v5314
    %5460 = vmatpush.bf16.msra.mxu0 %v5313
    %5461 = vmatpush.bf16.msra.mxu0 %v5312
    %5462 = vmatpush.bf16.msra.mxu0 %v5311
    %5463 = vmatpush.bf16.msra.mxu0 %v5310
    %5464 = vmatmul.bf16.gmra.mxu0 %v4893
    %v5465 = vpop.f32.mrf.mxu0
    %v5466 = vadd.f32 %v5452, %v5465
    %v5467 = vpop.f32.mrf.mxu0
    %v5468 = vadd.f32 %v5454, %v5467
    %5469 = vdwg.mxu0
    %5470 = vmatpush.bf16.msra.mxu0 %v5325
    %5471 = vmatpush.bf16.msra.mxu0 %v5324
    %5472 = vmatpush.bf16.msra.mxu0 %v5323
    %5473 = vmatpush.bf16.msra.mxu0 %v5322
    %5474 = vmatpush.bf16.msra.mxu0 %v5321
    %5475 = vmatpush.bf16.msra.mxu0 %v5320
    %5476 = vmatpush.bf16.msra.mxu0 %v5319
    %5477 = vmatpush.bf16.msra.mxu0 %v5318
    %5478 = vmatmul.bf16.gmra.mxu0 %v4894
    %v5479 = vpop.f32.mrf.mxu0
    %v5480 = vadd.f32 %v5466, %v5479
    %v5481 = vpop.f32.mrf.mxu0
    %v5482 = vadd.f32 %v5468, %v5481
    %5483 = vdwg.mxu0
    %5484 = vmatpush.bf16.msra.mxu0 %v5333
    %5485 = vmatpush.bf16.msra.mxu0 %v5332
    %5486 = vmatpush.bf16.msra.mxu0 %v5331
    %5487 = vmatpush.bf16.msra.mxu0 %v5330
    %5488 = vmatpush.bf16.msra.mxu0 %v5329
    %5489 = vmatpush.bf16.msra.mxu0 %v5328
    %5490 = vmatpush.bf16.msra.mxu0 %v5327
    %5491 = vmatpush.bf16.msra.mxu0 %v5326
    %5492 = vmatmul.bf16.gmra.mxu0 %v4895
    %v5493 = vpop.f32.mrf.mxu0
    %v5494 = vadd.f32 %v5480, %v5493
    %v5495 = vpop.f32.mrf.mxu0
    %v5496 = vadd.f32 %v5482, %v5495
    %5497 = vdwg.mxu0
    %5498 = vmatpush.bf16.msra.mxu0 %v5341
    %5499 = vmatpush.bf16.msra.mxu0 %v5340
    %5500 = vmatpush.bf16.msra.mxu0 %v5339
    %5501 = vmatpush.bf16.msra.mxu0 %v5338
    %5502 = vmatpush.bf16.msra.mxu0 %v5337
    %5503 = vmatpush.bf16.msra.mxu0 %v5336
    %5504 = vmatpush.bf16.msra.mxu0 %v5335
    %5505 = vmatpush.bf16.msra.mxu0 %v5334
    %5506 = vmatmul.bf16.gmra.mxu0 %v4896
    %v5507 = vpop.f32.mrf.mxu0
    %v5508 = vadd.f32 %v5494, %v5507
    %v5509 = vpop.f32.mrf.mxu0
    %v5510 = vadd.f32 %v5496, %v5509
    %5511 = vdwg.mxu0
    %5512 = vmatpush.bf16.msra.mxu0 %v5349
    %5513 = vmatpush.bf16.msra.mxu0 %v5348
    %5514 = vmatpush.bf16.msra.mxu0 %v5347
    %5515 = vmatpush.bf16.msra.mxu0 %v5346
    %5516 = vmatpush.bf16.msra.mxu0 %v5345
    %5517 = vmatpush.bf16.msra.mxu0 %v5344
    %5518 = vmatpush.bf16.msra.mxu0 %v5343
    %5519 = vmatpush.bf16.msra.mxu0 %v5342
    %5520 = vmatmul.bf16.gmra.mxu0 %v4897
    %v5521 = vpop.f32.mrf.mxu0
    %v5522 = vadd.f32 %v5508, %v5521
    %v5523 = vpop.f32.mrf.mxu0
    %v5524 = vadd.f32 %v5510, %v5523
    %5525 = vdwg.mxu0
    %vm5526 = vcmask 195584
    %5527 = vst.msk [vmem:[%s9] sm:$0xff] %vm5526, %v5522
    %5528 = vst.msk [vmem:[%s9 + $0x8] sm:$0xff] %vm5526, %v5524
    // Predicated region
    $region46: #{grid_model_forward.1} parent=1 // pred_check
      _
    $region47: #{grid_model_forward.1} parent=1 // pred_check_branch
      %5530 = sbr.rel (0) target = $region49
    $region48: #{grid_model_forward.1} parent=1 // pred_region
      _
    $region49: #{grid_model_forward.1} parent=1 // pred_fallthru
      _
    // Predicated region
    $region50: #{grid_model_forward.1} parent=1 // pred_check
      _
    $region51: #{grid_model_forward.1} parent=1 // pred_check_branch
      %5532 = sbr.rel (0) target = $region53
    $region52: #{grid_model_forward.1} parent=1 // pred_region
      _
    $region53: #{grid_model_forward.1} parent=1 // pred_fallthru
      _
    %5533 = vsyncpa [#allocation3], 1
    %5534 = vsyncpa [#allocation5], 1

</llo_original>
